<compile_context>
chip_gen: v7x
topology: tpu7x:2x2x1
jax: 0.10.0
libtpu: 0.0.40
codegen_flags: <defaults>
</compile_context>

<pallas_src>
import functools

import jax
import jax.numpy as jnp
from jax.experimental import pallas as pl
from jax.experimental.pallas import tpu as pltpu


def _basic_block_kernel(x_ref, w1_ref, s1_ref, b1_ref, w2_ref, s2_ref, b2_ref,
                        out_ref, xpad_ref, *, TILE_H, H, W, Cin, Cmid, Cout):
    """Fused conv1+bn1+relu -> conv2+bn2 -> +identity -> relu for one row strip.

    Grid step (n, i) produces output rows [i*TILE_H, (i+1)*TILE_H) of sample n.

    x_ref    : (1, H, W, Cin)        whole sample (re-fetched only when n changes)
    w1_ref   : (9*Cin, Cmid)         conv1 weights as an im2col slab (HWIO flat)
    s1_ref   : (1, Cmid)             folded BN1 scale  gamma / sqrt(var + eps)
    b1_ref   : (1, Cmid)             folded BN1 bias   beta - mean * scale
    w2_ref   : (9*Cmid, Cout)        conv2 weights as an im2col slab
    s2_ref   : (1, Cout)             folded BN2 scale
    b2_ref   : (1, Cout)             folded BN2 bias
    out_ref  : (1, TILE_H, W, Cout)  output row strip
    xpad_ref : (H+4, W+4, Cin)       VMEM scratch: sample with a 2-pixel zero
                                     halo, filled once per sample; also serves
                                     as the source of the identity residual.
    """
    T = TILE_H
    i = pl.program_id(1)

    # Build the zero-padded copy of this sample once (first strip of sample n).
    @pl.when(i == 0)
    def _():
        xpad_ref[...] = jnp.zeros((H + 4, W + 4, Cin), x_ref.dtype)
        xpad_ref[2:H + 2, 2:W + 2, :] = x_ref[0]

    # Input rows needed for this strip: global rows [i*T - 2, i*T + T + 2),
    # i.e. padded rows [i*T, i*T + T + 4).
    row0 = pl.multiple_of(i * T, T)
    xs = xpad_ref[pl.ds(row0, T + 4), :, :]                   # (T+4, W+4, Cin)

    # ---- conv1 + bn1 + relu: one im2col matmul (deep K = 9*Cin) ------------
    # Intermediate grid: rows [i*T - 1, i*T + T + 1), cols [-1, W + 1)
    # (a one-row/col halo so conv2 can be computed without re-reading x).
    p1 = jnp.concatenate(
        [xs[dy:dy + T + 2, dx:dx + W + 2, :]
         for dy in range(3) for dx in range(3)], axis=-1)     # (T+2, W+2, 9*Cin)
    m1 = (T + 2) * (W + 2)
    acc1 = jnp.dot(p1.reshape(m1, 9 * Cin), w1_ref[...],
                   preferred_element_type=jnp.float32)        # (m1, Cmid)
    mid = jnp.maximum(acc1 * s1_ref[0, :] + b1_ref[0, :], 0.0)
    mid = mid.reshape(T + 2, W + 2, Cmid)

    # conv2 zero-pads the *intermediate*: positions outside the valid HxW image
    # must be exactly 0 (not relu(bn1(conv1(zero-padded x)))), so mask them.
    r_idx = jax.lax.broadcasted_iota(jnp.int32, (T + 2, W + 2, Cmid), 0)
    c_idx = jax.lax.broadcasted_iota(jnp.int32, (T + 2, W + 2, Cmid), 1)
    g_row = row0 - 1 + r_idx
    g_col = c_idx - 1
    valid = (g_row >= 0) & (g_row < H) & (g_col >= 0) & (g_col < W)
    mid = jnp.where(valid, mid, 0.0)

    # ---- conv2 + bn2 + residual + relu -------------------------------------
    p2 = jnp.concatenate(
        [mid[dy:dy + T, dx:dx + W, :]
         for dy in range(3) for dx in range(3)], axis=-1)     # (T, W, 9*Cmid)
    m2 = T * W
    acc2 = jnp.dot(p2.reshape(m2, 9 * Cmid), w2_ref[...],
                   preferred_element_type=jnp.float32)        # (m2, Cout)
    out = acc2 * s2_ref[0, :] + b2_ref[0, :]

    # Identity residual (stride=1, downsample=None): rows [i*T, i*T+T) of x,
    # taken from the already-resident padded copy (no second HBM read of x).
    res = xs[2:T + 2, 2:W + 2, :].astype(jnp.float32).reshape(m2, Cin)
    out = jnp.maximum(out + res, 0.0)

    out_ref[...] = out.reshape(1, T, W, Cout).astype(out_ref.dtype)


def _pick_tile_h(H, target=8):
    """Largest divisor of H that is <= target (row-strip height)."""
    t = min(H, target)
    while H % t:
        t -= 1
    return t


def basic_block_nhwc(x, params, tile_h=None):
    """Fused BasicBlock forward: NHWC in / NHWC out, one pallas_call."""
    N, H, W, Cin = x.shape
    w1 = params["w1"]          # (3, 3, Cin, Cmid)   HWIO
    w2 = params["w2"]          # (3, 3, Cmid, Cout)  HWIO
    Cmid = w1.shape[-1]
    Cout = w2.shape[-1]
    assert w1.shape == (3, 3, Cin, Cmid) and w2.shape == (3, 3, Cmid, Cout)
    # TODO(synk): stride > 1 and the `downsample` branch are not implemented
    # (module defaults -- stride=1, downsample=None -- require Cin == Cout).
    assert Cin == Cout, "identity residual requires inplanes == planes"

    if tile_h is None:
        tile_h = _pick_tile_h(H)
    assert H % tile_h == 0

    # Pre-reshape weights to lane-dense 2D im2col slabs; fold BN params to f32.
    w1_2d = w1.reshape(9 * Cin, Cmid).astype(jnp.float32)
    w2_2d = w2.reshape(9 * Cmid, Cout).astype(jnp.float32)
    s1 = params["scale1"].reshape(1, Cmid).astype(jnp.float32)
    b1 = params["bias1"].reshape(1, Cmid).astype(jnp.float32)
    s2 = params["scale2"].reshape(1, Cout).astype(jnp.float32)
    b2 = params["bias2"].reshape(1, Cout).astype(jnp.float32)

    kernel = functools.partial(
        _basic_block_kernel, TILE_H=tile_h, H=H, W=W,
        Cin=Cin, Cmid=Cmid, Cout=Cout)

    # TODO(synk): for large images / channel counts, size tile_h against the
    # per-generation VMEM budget (v7x: 64 MiB) and set vmem_limit_bytes in
    # CompilerParams; bf16 activations/weights with f32 accumulation are a
    # further 2x HBM/VMEM saving on all generations.
    return pl.pallas_call(
        kernel,
        out_shape=jax.ShapeDtypeStruct((N, H, W, Cout), x.dtype),
        grid=(N, H // tile_h),
        in_specs=[
            pl.BlockSpec((1, H, W, Cin), lambda n, i: (n, 0, 0, 0)),
            pl.BlockSpec((9 * Cin, Cmid), lambda n, i: (0, 0)),
            pl.BlockSpec((1, Cmid), lambda n, i: (0, 0)),
            pl.BlockSpec((1, Cmid), lambda n, i: (0, 0)),
            pl.BlockSpec((9 * Cmid, Cout), lambda n, i: (0, 0)),
            pl.BlockSpec((1, Cout), lambda n, i: (0, 0)),
            pl.BlockSpec((1, Cout), lambda n, i: (0, 0)),
        ],
        out_specs=pl.BlockSpec((1, tile_h, W, Cout), lambda n, i: (n, i, 0, 0)),
        scratch_shapes=[pltpu.VMEM((H + 4, W + 4, Cin), x.dtype)],
        compiler_params=pltpu.CompilerParams(
            # The strip axis carries the per-sample scratch fill (pl.when(i==0))
            # so it must be "arbitrary"; the batch axis shards across megacore.
            dimension_semantics=("parallel", "arbitrary")),
    )(x, w1_2d, s1, b1, w2_2d, s2, b2)


def basic_block_nchw(x_nchw, params, tile_h=None):
    """PyTorch-layout adapter (NCHW in / NCHW out).

    NOTE: each transpose is a full HBM relayout; in a real network keep
    activations NHWC end-to-end and call basic_block_nhwc directly.
    """
    x = jnp.transpose(x_nchw, (0, 2, 3, 1))       # NCHW -> NHWC
    out = basic_block_nhwc(x, params, tile_h=tile_h)
    return jnp.transpose(out, (0, 3, 1, 2))       # NHWC -> NCHW


def fold_bn(gamma, beta, running_mean, running_var, eps=1e-5):
    scale = gamma / jnp.sqrt(running_var + eps)
    bias = beta - running_mean * scale
    return scale, bias


def reference_forward(x_nchw, w1_oihw, w2_oihw, bn1, bn2, eps=1e-5):
    """Pure-JAX reference mirroring the PyTorch module (eval-mode BN)."""
    def conv(x, w):
        return jax.lax.conv_general_dilated(
            x, w, window_strides=(1, 1), padding=((1, 1), (1, 1)),
            dimension_numbers=("NCHW", "OIHW", "NCHW"))

    def bn(x, p):
        g, b, m, v = p
        return ((x - m[None, :, None, None]) /
                jnp.sqrt(v[None, :, None, None] + eps)
                ) * g[None, :, None, None] + b[None, :, None, None]

    out = jax.nn.relu(bn(conv(x_nchw, w1_oihw), bn1))
    out = bn(conv(out, w2_oihw), bn2)
    return jax.nn.relu(out + x_nchw)


if __name__ == "__main__":
    # Small shapes: batch=2, inplanes=planes=4, spatial=16x16, stride=1.
    N, C, H, W = 2, 4, 16, 16
    inplanes = planes = C

    key = jax.random.PRNGKey(0)
    k = jax.random.split(key, 11)

    x = jax.random.normal(k[0], (N, C, H, W), jnp.float32)

    # Conv weights in PyTorch OIHW layout, then transposed to HWIO for the kernel.
    w1_oihw = 0.1 * jax.random.normal(k[1], (planes, inplanes, 3, 3), jnp.float32)
    w2_oihw = 0.1 * jax.random.normal(k[2], (planes, planes, 3, 3), jnp.float32)

    # Deterministic BatchNorm parameters (gamma, beta, running_mean, running_var).
    bn1 = (1.0 + 0.1 * jax.random.normal(k[3], (planes,), jnp.float32),
           0.1 * jax.random.normal(k[4], (planes,), jnp.float32),
           0.1 * jax.random.normal(k[5], (planes,), jnp.float32),
           1.0 + 0.1 * jax.random.uniform(k[6], (planes,), jnp.float32))
    bn2 = (1.0 + 0.1 * jax.random.normal(k[7], (planes,), jnp.float32),
           0.1 * jax.random.normal(k[8], (planes,), jnp.float32),
           0.1 * jax.random.normal(k[9], (planes,), jnp.float32),
           1.0 + 0.1 * jax.random.uniform(k[10], (planes,), jnp.float32))

    scale1, bias1 = fold_bn(*bn1)
    scale2, bias2 = fold_bn(*bn2)

    params = {
        "w1": jnp.transpose(w1_oihw, (2, 3, 1, 0)),  # OIHW -> HWIO
        "w2": jnp.transpose(w2_oihw, (2, 3, 1, 0)),
        "scale1": scale1, "bias1": bias1,
        "scale2": scale2, "bias2": bias2,
    }

    out = jax.block_until_ready(basic_block_nchw(x, params))

    ref = jax.block_until_ready(reference_forward(x, w1_oihw, w2_oihw, bn1, bn2))
    assert out.shape == (N, C, H, W)
    assert jnp.allclose(out, ref, atol=1e-4, rtol=1e-4), "mismatch vs reference"

    print("KERNEL_OK")
</pallas_src>

<mosaic_0001>
module attributes {stable_mosaic.version = 11 : i64} {
  func.func @_basic_block_kernel(%arg0: i32, %arg1: i32, %arg2: memref<1x16x16x4xf32, #tpu.memory_space<vmem>>, %arg3: memref<36x4xf32, #tpu.memory_space<vmem>>, %arg4: memref<1x4xf32, #tpu.memory_space<vmem>>, %arg5: memref<1x4xf32, #tpu.memory_space<vmem>>, %arg6: memref<36x4xf32, #tpu.memory_space<vmem>>, %arg7: memref<1x4xf32, #tpu.memory_space<vmem>>, %arg8: memref<1x4xf32, #tpu.memory_space<vmem>>, %arg9: memref<1x8x16x4xf32, #tpu.memory_space<vmem>>, %arg10: memref<20x20x4xf32, #tpu.memory_space<vmem>>) attributes {dimension_semantics = [#tpu.dimension_semantics<parallel>, #tpu.dimension_semantics<arbitrary>], iteration_bounds = array<i64: 2, 2>, scalar_prefetch = 0 : i64, scratch_operands = 1 : i64, tpu.core_type = #tpu.core_type<tc>, window_params = [{transform_indices = @transform_0, window_bounds = array<i64: 1, 16, 16, 4>}, {pipeline_mode = #tpu.pipeline_mode<synchronous>, transform_indices = @transform_1, window_bounds = array<i64: 36, 4>}, {pipeline_mode = #tpu.pipeline_mode<synchronous>, transform_indices = @transform_2, window_bounds = array<i64: 1, 4>}, {pipeline_mode = #tpu.pipeline_mode<synchronous>, transform_indices = @transform_3, window_bounds = array<i64: 1, 4>}, {pipeline_mode = #tpu.pipeline_mode<synchronous>, transform_indices = @transform_4, window_bounds = array<i64: 36, 4>}, {pipeline_mode = #tpu.pipeline_mode<synchronous>, transform_indices = @transform_5, window_bounds = array<i64: 1, 4>}, {pipeline_mode = #tpu.pipeline_mode<synchronous>, transform_indices = @transform_6, window_bounds = array<i64: 1, 4>}, {transform_indices = @transform_7, window_bounds = array<i64: 1, 8, 16, 4>}]} {
    %c0_i32 = arith.constant 0 : i32
    %0 = arith.cmpi eq, %arg1, %c0_i32 : i32
    %1 = arith.extui %0 : i1 to i32
    %c0_i32_0 = arith.constant 0 : i32
    %2 = arith.cmpi ne, %1, %c0_i32_0 : i32
    scf.if %2 {
      %cst_26 = arith.constant 0.000000e+00 : f32
      %83 = vector.broadcast %cst_26 : f32 to vector<20x20x4xf32>
      %c0_27 = arith.constant 0 : index
      %c0_28 = arith.constant 0 : index
      %c0_29 = arith.constant 0 : index
      %84 = vector.load %arg10[%c0_27, %c0_28, %c0_29] : memref<20x20x4xf32, #tpu.memory_space<vmem>>, vector<20x20x4xf32>
      tpu.vector_store %arg10[%c0_27, %c0_28, %c0_29], %83 {strides = array<i32>} : memref<20x20x4xf32, #tpu.memory_space<vmem>>, vector<20x20x4xf32>,
      %c0_30 = arith.constant 0 : index
      %c0_31 = arith.constant 0 : index
      %c0_32 = arith.constant 0 : index
      %c0_33 = arith.constant 0 : index
      %85 = vector.load %arg2[%c0_30, %c0_31, %c0_32, %c0_33] : memref<1x16x16x4xf32, #tpu.memory_space<vmem>>, vector<1x16x16x4xf32>
      %86 = vector.shape_cast %85 : vector<1x16x16x4xf32> to vector<16x16x4xf32>
      %c2 = arith.constant 2 : index
      %c2_34 = arith.constant 2 : index
      %c0_35 = arith.constant 0 : index
      %87 = vector.load %arg10[%c2, %c2_34, %c0_35] : memref<20x20x4xf32, #tpu.memory_space<vmem>>, vector<16x16x4xf32>
      tpu.vector_store %arg10[%c2, %c2_34, %c0_35], %86 {strides = array<i32>} : memref<20x20x4xf32, #tpu.memory_space<vmem>>, vector<16x16x4xf32>,
    } else {
    }
    %c8_i32 = arith.constant 8 : i32
    %3 = arith.muli %arg1, %c8_i32 : i32
    %4 = tpu.assume_multiple %3, 8 : i32
    %5 = arith.index_cast %4 : i32 to index
    %c0 = arith.constant 0 : index
    %c0_1 = arith.constant 0 : index
    %6 = vector.load %arg10[%5, %c0, %c0_1] : memref<20x20x4xf32, #tpu.memory_space<vmem>>, vector<12x20x4xf32>
    %7 = vector.extract_strided_slice %6 {offsets = [0, 0, 0], sizes = [10, 18, 4], strides = [1, 1, 1]} : vector<12x20x4xf32> to vector<10x18x4xf32>
    %8 = vector.extract_strided_slice %6 {offsets = [0, 1, 0], sizes = [10, 18, 4], strides = [1, 1, 1]} : vector<12x20x4xf32> to vector<10x18x4xf32>
    %9 = vector.extract_strided_slice %6 {offsets = [0, 2, 0], sizes = [10, 18, 4], strides = [1, 1, 1]} : vector<12x20x4xf32> to vector<10x18x4xf32>
    %10 = vector.extract_strided_slice %6 {offsets = [1, 0, 0], sizes = [10, 18, 4], strides = [1, 1, 1]} : vector<12x20x4xf32> to vector<10x18x4xf32>
    %11 = vector.extract_strided_slice %6 {offsets = [1, 1, 0], sizes = [10, 18, 4], strides = [1, 1, 1]} : vector<12x20x4xf32> to vector<10x18x4xf32>
    %12 = vector.extract_strided_slice %6 {offsets = [1, 2, 0], sizes = [10, 18, 4], strides = [1, 1, 1]} : vector<12x20x4xf32> to vector<10x18x4xf32>
    %13 = vector.extract_strided_slice %6 {offsets = [2, 0, 0], sizes = [10, 18, 4], strides = [1, 1, 1]} : vector<12x20x4xf32> to vector<10x18x4xf32>
    %14 = vector.extract_strided_slice %6 {offsets = [2, 1, 0], sizes = [10, 18, 4], strides = [1, 1, 1]} : vector<12x20x4xf32> to vector<10x18x4xf32>
    %15 = vector.extract_strided_slice %6 {offsets = [2, 2, 0], sizes = [10, 18, 4], strides = [1, 1, 1]} : vector<12x20x4xf32> to vector<10x18x4xf32>
    %16 = tpu.concatenate %7, %8, %9, %10, %11, %12, %13, %14, %15 in 2 : vector<10x18x4xf32>, vector<10x18x4xf32>, vector<10x18x4xf32>, vector<10x18x4xf32>, vector<10x18x4xf32>, vector<10x18x4xf32>, vector<10x18x4xf32>, vector<10x18x4xf32>, vector<10x18x4xf32> -> vector<10x18x36xf32>
    %17 = vector.shape_cast %16 : vector<10x18x36xf32> to vector<180x36xf32>
    %c0_2 = arith.constant 0 : index
    %c0_3 = arith.constant 0 : index
    %18 = vector.load %arg3[%c0_2, %c0_3] : memref<36x4xf32, #tpu.memory_space<vmem>>, vector<36x4xf32>
    %cst = arith.constant dense<0.000000e+00> : vector<180x4xf32>
    %19 = tpu.matmul %17, %18, %cst {dimension_numbers = #tpu.dot_dimension_numbers<[1], [0], [0], [1], [0, 0, 1, 1], [], []>} : vector<180x36xf32>, vector<36x4xf32>, vector<180x4xf32> -> vector<180x4xf32>
    %c0_4 = arith.constant 0 : index
    %c0_5 = arith.constant 0 : index
    %20 = vector.load %arg4[%c0_4, %c0_5] : memref<1x4xf32, #tpu.memory_space<vmem>>, vector<1x4xf32>
    %21 = vector.shape_cast %20 : vector<1x4xf32> to vector<4xf32>
    %22 = vector.shape_cast %21 : vector<4xf32> to vector<1x4xf32>
    %23 = vector.broadcast %22 : vector<1x4xf32> to vector<180x4xf32>
    %24 = arith.mulf %19, %23 : vector<180x4xf32>
    %c0_6 = arith.constant 0 : index
    %c0_7 = arith.constant 0 : index
    %25 = vector.load %arg5[%c0_6, %c0_7] : memref<1x4xf32, #tpu.memory_space<vmem>>, vector<1x4xf32>
    %26 = vector.shape_cast %25 : vector<1x4xf32> to vector<4xf32>
    %27 = vector.shape_cast %26 : vector<4xf32> to vector<1x4xf32>
    %28 = vector.broadcast %27 : vector<1x4xf32> to vector<180x4xf32>
    %29 = arith.addf %24, %28 : vector<180x4xf32>
    %cst_8 = arith.constant 0.000000e+00 : f32
    %30 = vector.broadcast %cst_8 : f32 to vector<180x4xf32>
    %31 = arith.maximumf %29, %30 : vector<180x4xf32>
    %32 = vector.shape_cast %31 : vector<180x4xf32> to vector<10x18x4xf32>
    %33 = tpu.iota {dimensions = array<i32: 0>} : vector<10x18x4xi32>
    %34 = tpu.iota {dimensions = array<i32: 1>} : vector<10x18x4xi32>
    %c1_i32 = arith.constant 1 : i32
    %35 = arith.subi %4, %c1_i32 : i32
    %36 = vector.broadcast %35 : i32 to vector<10x18x4xi32>
    %37 = arith.addi %36, %33 : vector<10x18x4xi32>
    %c1_i32_9 = arith.constant 1 : i32
    %38 = vector.broadcast %c1_i32_9 : i32 to vector<10x18x4xi32>
    %39 = arith.subi %34, %38 : vector<10x18x4xi32>
    %c0_i32_10 = arith.constant 0 : i32
    %40 = vector.broadcast %c0_i32_10 : i32 to vector<10x18x4xi32>
    %41 = arith.cmpi sge, %37, %40 : vector<10x18x4xi32>
    %c16_i32 = arith.constant 16 : i32
    %42 = vector.broadcast %c16_i32 : i32 to vector<10x18x4xi32>
    %43 = arith.cmpi slt, %37, %42 : vector<10x18x4xi32>
    %44 = arith.andi %41, %43 : vector<10x18x4xi1>
    %c0_i32_11 = arith.constant 0 : i32
    %45 = vector.broadcast %c0_i32_11 : i32 to vector<10x18x4xi32>
    %46 = arith.cmpi sge, %39, %45 : vector<10x18x4xi32>
    %47 = arith.andi %44, %46 : vector<10x18x4xi1>
    %c16_i32_12 = arith.constant 16 : i32
    %48 = vector.broadcast %c16_i32_12 : i32 to vector<10x18x4xi32>
    %49 = arith.cmpi slt, %39, %48 : vector<10x18x4xi32>
    %50 = arith.andi %47, %49 : vector<10x18x4xi1>
    %cst_13 = arith.constant 0.000000e+00 : f32
    %51 = vector.broadcast %cst_13 : f32 to vector<10x18x4xf32>
    %52 = arith.select %50, %32, %51 : vector<10x18x4xi1>, vector<10x18x4xf32>
    %53 = vector.extract_strided_slice %52 {offsets = [0, 0, 0], sizes = [8, 16, 4], strides = [1, 1, 1]} : vector<10x18x4xf32> to vector<8x16x4xf32>
    %54 = vector.extract_strided_slice %52 {offsets = [0, 1, 0], sizes = [8, 16, 4], strides = [1, 1, 1]} : vector<10x18x4xf32> to vector<8x16x4xf32>
    %55 = vector.extract_strided_slice %52 {offsets = [0, 2, 0], sizes = [8, 16, 4], strides = [1, 1, 1]} : vector<10x18x4xf32> to vector<8x16x4xf32>
    %56 = vector.extract_strided_slice %52 {offsets = [1, 0, 0], sizes = [8, 16, 4], strides = [1, 1, 1]} : vector<10x18x4xf32> to vector<8x16x4xf32>
    %57 = vector.extract_strided_slice %52 {offsets = [1, 1, 0], sizes = [8, 16, 4], strides = [1, 1, 1]} : vector<10x18x4xf32> to vector<8x16x4xf32>
    %58 = vector.extract_strided_slice %52 {offsets = [1, 2, 0], sizes = [8, 16, 4], strides = [1, 1, 1]} : vector<10x18x4xf32> to vector<8x16x4xf32>
    %59 = vector.extract_strided_slice %52 {offsets = [2, 0, 0], sizes = [8, 16, 4], strides = [1, 1, 1]} : vector<10x18x4xf32> to vector<8x16x4xf32>
    %60 = vector.extract_strided_slice %52 {offsets = [2, 1, 0], sizes = [8, 16, 4], strides = [1, 1, 1]} : vector<10x18x4xf32> to vector<8x16x4xf32>
    %61 = vector.extract_strided_slice %52 {offsets = [2, 2, 0], sizes = [8, 16, 4], strides = [1, 1, 1]} : vector<10x18x4xf32> to vector<8x16x4xf32>
    %62 = tpu.concatenate %53, %54, %55, %56, %57, %58, %59, %60, %61 in 2 : vector<8x16x4xf32>, vector<8x16x4xf32>, vector<8x16x4xf32>, vector<8x16x4xf32>, vector<8x16x4xf32>, vector<8x16x4xf32>, vector<8x16x4xf32>, vector<8x16x4xf32>, vector<8x16x4xf32> -> vector<8x16x36xf32>
    %63 = vector.shape_cast %62 : vector<8x16x36xf32> to vector<128x36xf32>
    %c0_14 = arith.constant 0 : index
    %c0_15 = arith.constant 0 : index
    %64 = vector.load %arg6[%c0_14, %c0_15] : memref<36x4xf32, #tpu.memory_space<vmem>>, vector<36x4xf32>
    %cst_16 = arith.constant dense<0.000000e+00> : vector<128x4xf32>
    %65 = tpu.matmul %63, %64, %cst_16 {dimension_numbers = #tpu.dot_dimension_numbers<[1], [0], [0], [1], [0, 0, 1, 1], [], []>} : vector<128x36xf32>, vector<36x4xf32>, vector<128x4xf32> -> vector<128x4xf32>
    %c0_17 = arith.constant 0 : index
    %c0_18 = arith.constant 0 : index
    %66 = vector.load %arg7[%c0_17, %c0_18] : memref<1x4xf32, #tpu.memory_space<vmem>>, vector<1x4xf32>
    %67 = vector.shape_cast %66 : vector<1x4xf32> to vector<4xf32>
    %68 = vector.shape_cast %67 : vector<4xf32> to vector<1x4xf32>
    %69 = vector.broadcast %68 : vector<1x4xf32> to vector<128x4xf32>
    %70 = arith.mulf %65, %69 : vector<128x4xf32>
    %c0_19 = arith.constant 0 : index
    %c0_20 = arith.constant 0 : index
    %71 = vector.load %arg8[%c0_19, %c0_20] : memref<1x4xf32, #tpu.memory_space<vmem>>, vector<1x4xf32>
    %72 = vector.shape_cast %71 : vector<1x4xf32> to vector<4xf32>
    %73 = vector.shape_cast %72 : vector<4xf32> to vector<1x4xf32>
    %74 = vector.broadcast %73 : vector<1x4xf32> to vector<128x4xf32>
    %75 = arith.addf %70, %74 : vector<128x4xf32>
    %76 = vector.extract_strided_slice %6 {offsets = [2, 2, 0], sizes = [8, 16, 4], strides = [1, 1, 1]} : vector<12x20x4xf32> to vector<8x16x4xf32>
    %77 = vector.shape_cast %76 : vector<8x16x4xf32> to vector<128x4xf32>
    %78 = arith.addf %75, %77 : vector<128x4xf32>
    %cst_21 = arith.constant 0.000000e+00 : f32
    %79 = vector.broadcast %cst_21 : f32 to vector<128x4xf32>
    %80 = arith.maximumf %78, %79 : vector<128x4xf32>
    %81 = vector.shape_cast %80 : vector<128x4xf32> to vector<1x8x16x4xf32>
    %c0_22 = arith.constant 0 : index
    %c0_23 = arith.constant 0 : index
    %c0_24 = arith.constant 0 : index
    %c0_25 = arith.constant 0 : index
    %82 = vector.load %arg9[%c0_22, %c0_23, %c0_24, %c0_25] : memref<1x8x16x4xf32, #tpu.memory_space<vmem>>, vector<1x8x16x4xf32>
    tpu.vector_store %arg9[%c0_22, %c0_23, %c0_24, %c0_25], %81 {strides = array<i32>} : memref<1x8x16x4xf32, #tpu.memory_space<vmem>>, vector<1x8x16x4xf32>,
    return
  }
  func.func @transform_0(%arg0: i32, %arg1: i32) -> (i32, i32, i32, i32) {
    %c0_i32 = arith.constant 0 : i32
    %c0_i32_0 = arith.constant 0 : i32
    %c0_i32_1 = arith.constant 0 : i32
    %c0_i32_2 = arith.constant 0 : i32
    return %arg0, %c0_i32, %c0_i32_0, %c0_i32_1 : i32, i32, i32, i32
  }
  func.func @transform_1(%arg0: i32, %arg1: i32) -> (i32, i32) {
    %c0_i32 = arith.constant 0 : i32
    %c0_i32_0 = arith.constant 0 : i32
    %c0_i32_1 = arith.constant 0 : i32
    return %c0_i32, %c0_i32_0 : i32, i32
  }
  func.func @transform_2(%arg0: i32, %arg1: i32) -> (i32, i32) {
    %c0_i32 = arith.constant 0 : i32
    %c0_i32_0 = arith.constant 0 : i32
    %c0_i32_1 = arith.constant 0 : i32
    return %c0_i32, %c0_i32_0 : i32, i32
  }
  func.func @transform_3(%arg0: i32, %arg1: i32) -> (i32, i32) {
    %c0_i32 = arith.constant 0 : i32
    %c0_i32_0 = arith.constant 0 : i32
    %c0_i32_1 = arith.constant 0 : i32
    return %c0_i32, %c0_i32_0 : i32, i32
  }
  func.func @transform_4(%arg0: i32, %arg1: i32) -> (i32, i32) {
    %c0_i32 = arith.constant 0 : i32
    %c0_i32_0 = arith.constant 0 : i32
    %c0_i32_1 = arith.constant 0 : i32
    return %c0_i32, %c0_i32_0 : i32, i32
  }
  func.func @transform_5(%arg0: i32, %arg1: i32) -> (i32, i32) {
    %c0_i32 = arith.constant 0 : i32
    %c0_i32_0 = arith.constant 0 : i32
    %c0_i32_1 = arith.constant 0 : i32
    return %c0_i32, %c0_i32_0 : i32, i32
  }
  func.func @transform_6(%arg0: i32, %arg1: i32) -> (i32, i32) {
    %c0_i32 = arith.constant 0 : i32
    %c0_i32_0 = arith.constant 0 : i32
    %c0_i32_1 = arith.constant 0 : i32
    return %c0_i32, %c0_i32_0 : i32, i32
  }
  func.func @transform_7(%arg0: i32, %arg1: i32) -> (i32, i32, i32, i32) {
    %c0_i32 = arith.constant 0 : i32
    %c0_i32_0 = arith.constant 0 : i32
    %c0_i32_1 = arith.constant 0 : i32
    return %arg0, %arg1, %c0_i32, %c0_i32_0 : i32, i32, i32, i32
  }
}

</mosaic_0001>

<llo_original>
// kernel: tpu_custom_call.1
$region0: #{tpu_custom_call.1}
  #allocation0 [shape = 'u32[]', space=smem, size = 0x4, offset = 0x4, fixed_abs, tag = 'smem constant byte address 0x4 - core index']
  #allocation1 [shape = 'u32[144,128]{1,0:T(1,128)}', space=vmem, size = 0x12000, scoped, tag = 'internal scratch']
  #allocation2 [shape = 'f32[20,20,4]{2,1,0:T(8,128)}', space=vmem, size = 0x3c000, scoped, tag = 'scratch operand']
  %s0 = inlined_call_operand.vmem [shape: f32[2,16,16,4], index: 0, kind: input, shape index: {}]
  %s1 = inlined_call_operand.vmem [shape: f32[36,4], index: 1, kind: input, shape index: {}]
  %s2 = inlined_call_operand.vmem [shape: f32[1,4], index: 2, kind: input, shape index: {}]
  %s3 = inlined_call_operand.vmem [shape: f32[1,4], index: 3, kind: input, shape index: {}]
  %s4 = inlined_call_operand.vmem [shape: f32[36,4], index: 4, kind: input, shape index: {}]
  %s5 = inlined_call_operand.vmem [shape: f32[1,4], index: 5, kind: input, shape index: {}]
  %s6 = inlined_call_operand.vmem [shape: f32[1,4], index: 6, kind: input, shape index: {}]
  %s7 = inlined_call_operand.vmem [shape: f32[2,16,16,4], index: 7, kind: output, shape index: {}]
  %s8 = sld [smem:[#allocation0]]
  $region65: #{tpu_custom_call.1} parent=0
    _
  %s10 = ssub.s32 1, %s8
  %s11 = scalar_select 0, %s10, %s8
  loop: start=0, step=1, limit=6
  $region2: #{tpu_custom_call.1} parent=0 // loop_pre_header
    _
  $region3: #{tpu_custom_call.1} parent=0 // loop_header
    %s13 = sphi 0, %s17
    %p14 = scmp.ge.s32.totalorder %s13, 6
    %s20 = sphi 0, %s32
    %s21 = sphi 0, %s28
    %s22 = sphi 0, %s20
    %s23 = sphi 0, %s21
    %s24 = sphi 0, %s22
    %s25 = sphi 0, %s23
    %s35 = sphi 0, %s37
    %s38 = sphi 0, %s35
    %s39 = sphi 0, %s38
    %s55 = sphi 0, %s39
    %s59 = sphi 0, %s59
    %s61 = sphi 0, %s59
    %s62 = sphi 0, %s61
    %s76 = sphi 0, %s62
    %s80 = sphi 0, %s80
    %s82 = sphi 0, %s80
    %s83 = sphi 0, %s82
    %s97 = sphi 0, %s83
    %s101 = sphi 0, %s101
    %s103 = sphi 0, %s101
    %s104 = sphi 0, %s103
    %s118 = sphi 0, %s104
    %s122 = sphi 0, %s122
    %s124 = sphi 0, %s122
    %s125 = sphi 0, %s124
    %s139 = sphi 0, %s125
    %s143 = sphi 0, %s143
    %s145 = sphi 0, %s143
    %s146 = sphi 0, %s145
    %s160 = sphi 0, %s146
    %s164 = sphi 0, %s164
    %s166 = sphi 0, %s164
    %s167 = sphi 0, %s166
    %s181 = sphi 0, %s167
    %s189 = sphi 0, %s191
    %s192 = sphi 0, %s189
    %s193 = sphi 0, %s192
    %s209 = sphi 0, %s193
  $region4: #{tpu_custom_call.1} parent=0 // loop_header_branch
    %16 = sbr.rel (%p14) target = $region8
  $region5: #{tpu_custom_call.1} parent=0 // loop_body
    %s18 = ssub.s32 %s13, 1
    %s19 = ssub.s32 %s13, 2
    %s26 = sadd.s32 1, %s21
    %p27 = scmp.ge.s32.totalorder %s26, 2
    %s28 = scalar_select %p27, 0, %s26
    %s29 = sadd.s32 1, %s20
    %s30 = scalar_select %p27, %s29, %s20
    %p31 = scmp.ge.s32.totalorder %s30, 2
    %s32 = scalar_select %p31, 0, %s30
    %s33 = ssub.s32 %s20, %s32
    %p34 = scmp.eq.s32.totalorder %s33, 0
    %s36 = sadd.s32 %s35, 1
    %s37 = scalar_select %p34, %s35, %s36
    %p40 = pneg %p34
    %p41 = scmp.eq.s32.totalorder %s13, 3
    %p42 = por %p40, %p41
    %p43 = scmp.ne.s32.totalorder %s35, %s38
    %p44 = scmp.eq.s32.totalorder %s13, 0
    %p45 = por %p43, %p44
    %p46 = scmp.ne.s32.totalorder %s35, %s38
    %p47 = scmp.eq.s32.totalorder %s18, 3
    %p48 = por %p46, %p47
    %p49 = scmp.ne.s32.totalorder %s38, %s39
    %p50 = scmp.eq.s32.totalorder %s18, 0
    %p51 = por %p49, %p50
    %p52 = scmp.ne.s32.totalorder %s38, %s39
    %p53 = scmp.eq.s32.totalorder %s19, 3
    %p54 = por %p52, %p53
    %p56 = scmp.ne.s32.totalorder %s39, %s55
    %p57 = scmp.eq.s32.totalorder %s19, 0
    %p58 = por %p56, %p57
    %s60 = sadd.s32 %s59, 1
    %p63 = scmp.eq.s32.totalorder %s13, 3
    %p64 = scmp.ne.s32.totalorder %s59, %s61
    %p65 = scmp.eq.s32.totalorder %s13, 0
    %p66 = por %p64, %p65
    %p67 = scmp.ne.s32.totalorder %s59, %s61
    %p68 = scmp.eq.s32.totalorder %s18, 3
    %p69 = por %p67, %p68
    %p70 = scmp.ne.s32.totalorder %s61, %s62
    %p71 = scmp.eq.s32.totalorder %s18, 0
    %p72 = por %p70, %p71
    %p73 = scmp.ne.s32.totalorder %s61, %s62
    %p74 = scmp.eq.s32.totalorder %s19, 3
    %p75 = por %p73, %p74
    %p77 = scmp.ne.s32.totalorder %s62, %s76
    %p78 = scmp.eq.s32.totalorder %s19, 0
    %p79 = por %p77, %p78
    %s81 = sadd.s32 %s80, 1
    %p84 = scmp.eq.s32.totalorder %s13, 3
    %p85 = scmp.ne.s32.totalorder %s80, %s82
    %p86 = scmp.eq.s32.totalorder %s13, 0
    %p87 = por %p85, %p86
    %p88 = scmp.ne.s32.totalorder %s80, %s82
    %p89 = scmp.eq.s32.totalorder %s18, 3
    %p90 = por %p88, %p89
    %p91 = scmp.ne.s32.totalorder %s82, %s83
    %p92 = scmp.eq.s32.totalorder %s18, 0
    %p93 = por %p91, %p92
    %p94 = scmp.ne.s32.totalorder %s82, %s83
    %p95 = scmp.eq.s32.totalorder %s19, 3
    %p96 = por %p94, %p95
    %p98 = scmp.ne.s32.totalorder %s83, %s97
    %p99 = scmp.eq.s32.totalorder %s19, 0
    %p100 = por %p98, %p99
    %s102 = sadd.s32 %s101, 1
    %p105 = scmp.eq.s32.totalorder %s13, 3
    %p106 = scmp.ne.s32.totalorder %s101, %s103
    %p107 = scmp.eq.s32.totalorder %s13, 0
    %p108 = por %p106, %p107
    %p109 = scmp.ne.s32.totalorder %s101, %s103
    %p110 = scmp.eq.s32.totalorder %s18, 3
    %p111 = por %p109, %p110
    %p112 = scmp.ne.s32.totalorder %s103, %s104
    %p113 = scmp.eq.s32.totalorder %s18, 0
    %p114 = por %p112, %p113
    %p115 = scmp.ne.s32.totalorder %s103, %s104
    %p116 = scmp.eq.s32.totalorder %s19, 3
    %p117 = por %p115, %p116
    %p119 = scmp.ne.s32.totalorder %s104, %s118
    %p120 = scmp.eq.s32.totalorder %s19, 0
    %p121 = por %p119, %p120
    %s123 = sadd.s32 %s122, 1
    %p126 = scmp.eq.s32.totalorder %s13, 3
    %p127 = scmp.ne.s32.totalorder %s122, %s124
    %p128 = scmp.eq.s32.totalorder %s13, 0
    %p129 = por %p127, %p128
    %p130 = scmp.ne.s32.totalorder %s122, %s124
    %p131 = scmp.eq.s32.totalorder %s18, 3
    %p132 = por %p130, %p131
    %p133 = scmp.ne.s32.totalorder %s124, %s125
    %p134 = scmp.eq.s32.totalorder %s18, 0
    %p135 = por %p133, %p134
    %p136 = scmp.ne.s32.totalorder %s124, %s125
    %p137 = scmp.eq.s32.totalorder %s19, 3
    %p138 = por %p136, %p137
    %p140 = scmp.ne.s32.totalorder %s125, %s139
    %p141 = scmp.eq.s32.totalorder %s19, 0
    %p142 = por %p140, %p141
    %s144 = sadd.s32 %s143, 1
    %p147 = scmp.eq.s32.totalorder %s13, 3
    %p148 = scmp.ne.s32.totalorder %s143, %s145
    %p149 = scmp.eq.s32.totalorder %s13, 0
    %p150 = por %p148, %p149
    %p151 = scmp.ne.s32.totalorder %s143, %s145
    %p152 = scmp.eq.s32.totalorder %s18, 3
    %p153 = por %p151, %p152
    %p154 = scmp.ne.s32.totalorder %s145, %s146
    %p155 = scmp.eq.s32.totalorder %s18, 0
    %p156 = por %p154, %p155
    %p157 = scmp.ne.s32.totalorder %s145, %s146
    %p158 = scmp.eq.s32.totalorder %s19, 3
    %p159 = por %p157, %p158
    %p161 = scmp.ne.s32.totalorder %s146, %s160
    %p162 = scmp.eq.s32.totalorder %s19, 0
    %p163 = por %p161, %p162
    %s165 = sadd.s32 %s164, 1
    %p168 = scmp.eq.s32.totalorder %s13, 3
    %p169 = scmp.ne.s32.totalorder %s164, %s166
    %p170 = scmp.eq.s32.totalorder %s13, 0
    %p171 = por %p169, %p170
    %p172 = scmp.ne.s32.totalorder %s164, %s166
    %p173 = scmp.eq.s32.totalorder %s18, 3
    %p174 = por %p172, %p173
    %p175 = scmp.ne.s32.totalorder %s166, %s167
    %p176 = scmp.eq.s32.totalorder %s18, 0
    %p177 = por %p175, %p176
    %p178 = scmp.ne.s32.totalorder %s166, %s167
    %p179 = scmp.eq.s32.totalorder %s19, 3
    %p180 = por %p178, %p179
    %p182 = scmp.ne.s32.totalorder %s167, %s181
    %p183 = scmp.eq.s32.totalorder %s19, 0
    %p184 = por %p182, %p183
    %s185 = ssub.s32 %s20, %s32
    %s186 = ssub.s32 %s21, %s28
    %s187 = sor.u32 %s185, %s186
    %p188 = scmp.eq.s32.totalorder %s187, 0
    %s190 = sadd.s32 %s189, 1
    %s191 = scalar_select %p188, %s189, %s190
    %p194 = pneg %p188
    %p195 = scmp.eq.s32.totalorder %s13, 3
    %p196 = por %p194, %p195
    %p197 = scmp.ne.s32.totalorder %s189, %s192
    %p198 = scmp.eq.s32.totalorder %s13, 0
    %p199 = por %p197, %p198
    %p200 = scmp.ne.s32.totalorder %s189, %s192
    %p201 = scmp.eq.s32.totalorder %s18, 3
    %p202 = por %p200, %p201
    %p203 = scmp.ne.s32.totalorder %s192, %s193
    %p204 = scmp.eq.s32.totalorder %s18, 0
    %p205 = por %p203, %p204
    %p206 = scmp.ne.s32.totalorder %s192, %s193
    %p207 = scmp.eq.s32.totalorder %s19, 3
    %p208 = por %p206, %p207
    %p210 = scmp.ne.s32.totalorder %s193, %s209
    %p211 = scmp.eq.s32.totalorder %s19, 0
    %p212 = por %p210, %p211
    %p213 = scmp.le.s32.totalorder 1, %s13
    %p214 = scmp.lt.s32.totalorder %s13, 5
    %p215 = pnand %p213, %p214
    %p216 = pneg %p215
    // Predicated region
    $region9: #{tpu_custom_call.1} parent=5 // pred_check
      _
    $region10: #{tpu_custom_call.1} parent=5 // pred_check_branch
      %218 = sbr.rel (%p215) target = $region12
    $region11: #{tpu_custom_call.1} parent=5 // pred_region
      %s219 = ssub.s32 %s13, 1
      // Predicated region
      $region13: #{tpu_custom_call.1} parent=11 // pred_check
        %p220 = pneg %p72
      $region14: #{tpu_custom_call.1} parent=11 // pred_check_branch
        %222 = sbr.rel (%p220) target = $region16
      $region15: #{tpu_custom_call.1} parent=11 // pred_region
        _
      $region16: #{tpu_custom_call.1} parent=11 // pred_fallthru
        _
      // Predicated region
      $region17: #{tpu_custom_call.1} parent=11 // pred_check
        %p223 = pneg %p93
      $region18: #{tpu_custom_call.1} parent=11 // pred_check_branch
        %225 = sbr.rel (%p223) target = $region20
      $region19: #{tpu_custom_call.1} parent=11 // pred_region
        _
      $region20: #{tpu_custom_call.1} parent=11 // pred_fallthru
        _
      // Predicated region
      $region21: #{tpu_custom_call.1} parent=11 // pred_check
        %p226 = pneg %p114
      $region22: #{tpu_custom_call.1} parent=11 // pred_check_branch
        %228 = sbr.rel (%p226) target = $region24
      $region23: #{tpu_custom_call.1} parent=11 // pred_region
        _
      $region24: #{tpu_custom_call.1} parent=11 // pred_fallthru
        _
      // Predicated region
      $region25: #{tpu_custom_call.1} parent=11 // pred_check
        %p229 = pneg %p135
      $region26: #{tpu_custom_call.1} parent=11 // pred_check_branch
        %231 = sbr.rel (%p229) target = $region28
      $region27: #{tpu_custom_call.1} parent=11 // pred_region
        _
      $region28: #{tpu_custom_call.1} parent=11 // pred_fallthru
        _
      // Predicated region
      $region29: #{tpu_custom_call.1} parent=11 // pred_check
        %p232 = pneg %p156
      $region30: #{tpu_custom_call.1} parent=11 // pred_check_branch
        %234 = sbr.rel (%p232) target = $region32
      $region31: #{tpu_custom_call.1} parent=11 // pred_region
        _
      $region32: #{tpu_custom_call.1} parent=11 // pred_fallthru
        _
      // Predicated region
      $region33: #{tpu_custom_call.1} parent=11 // pred_check
        %p235 = pneg %p177
      $region34: #{tpu_custom_call.1} parent=11 // pred_check_branch
        %237 = sbr.rel (%p235) target = $region36
      $region35: #{tpu_custom_call.1} parent=11 // pred_region
        _
      $region36: #{tpu_custom_call.1} parent=11 // pred_fallthru
        _
    $region12: #{tpu_custom_call.1} parent=5 // pred_fallthru
      _
    %p238 = scmp.lt.s32.totalorder %s13, 4
    // Predicated region
    $region37: #{tpu_custom_call.1} parent=5 // pred_check
      %p239 = pneg %p238
    $region38: #{tpu_custom_call.1} parent=5 // pred_check_branch
      %241 = sbr.rel (%p239) target = $region40
    $region39: #{tpu_custom_call.1} parent=5 // pred_region
      // Predicated region
      $region41: #{tpu_custom_call.1} parent=39 // pred_check
        %p242 = pneg %p45
      $region42: #{tpu_custom_call.1} parent=39 // pred_check_branch
        %244 = sbr.rel (%p242) target = $region44
      $region43: #{tpu_custom_call.1} parent=39 // pred_region
        %p245 = scmp.lt.s32.totalorder %s20, 1
        %s246 = scalar_select %p245, %s20, 1
        %s247 = smul.addr %s246, 32
        %s248 = smul.addr %s247, 8
        %s249 = scalar_lea.vmem %s0, %s248
      $region44: #{tpu_custom_call.1} parent=39 // pred_fallthru
        _
    $region40: #{tpu_custom_call.1} parent=5 // pred_fallthru
      _
    %p250 = scmp.le.s32.totalorder 1, %s13
    %p251 = scmp.lt.s32.totalorder %s13, 5
    %p252 = pnand %p250, %p251
    %p253 = pneg %p252
    // Predicated region
    $region45: #{tpu_custom_call.1} parent=5 // pred_check
      _
    $region46: #{tpu_custom_call.1} parent=5 // pred_check_branch
      %255 = sbr.rel (%p252) target = $region48
    $region47: #{tpu_custom_call.1} parent=5 // pred_region
      %s256 = ssub.s32 %s13, 1
      %p257 = scmp.lt.s32.totalorder %s22, 1
      %s258 = scalar_select %p257, %s22, 1
      %s259 = smul.addr %s258, 32
      %s260 = smul.addr %s259, 8
      %s261 = scalar_lea.vmem %s0, %s260
      %p262 = pneg %p51
      %p263 = pneg %p48
      %p264 = pneg %p72
      %p265 = pneg %p69
      %p266 = pneg %p93
      %p267 = pneg %p90
      %p268 = pneg %p114
      %p269 = pneg %p111
      %p270 = pneg %p135
      %p271 = pneg %p132
      %p272 = pneg %p156
      %p273 = pneg %p153
      %p274 = pneg %p177
      %p275 = pneg %p174
      %p276 = pneg %p205
      %p277 = pneg %p202
      %s278 = smul.u32 8, %s23
      %p279 = scmp.lt.s32.totalorder %s22, 1
      %s280 = scalar_select %p279, %s22, 1
      %p281 = scmp.lt.s32.totalorder %s278, 15
      %s282 = scalar_select %p281, %s278, 15
      %s283 = smul.addr %s282, 2
      %s284 = smul.addr %s280, 32
      %s285 = sadd.s32 %s283, %s284
      %s286 = smul.addr %s285, 8
      %s287 = scalar_lea.vmem %s7, %s286
      %p288 = scmp.lt.s32.totalorder %s22, 1
      %s289 = scalar_select %p288, %s22, 1
      %s290 = smul.addr %s289, 32
      %s291 = smul.addr %s290, 8
      %s292 = scalar_lea.vmem %s0, %s291
      %s293 = smul.u32 8, %s23
      %p294 = scmp.lt.s32.totalorder %s22, 1
      %s295 = scalar_select %p294, %s22, 1
      %p296 = scmp.lt.s32.totalorder %s293, 15
      %s297 = scalar_select %p296, %s293, 15
      %s298 = smul.addr %s297, 2
      %s299 = smul.addr %s295, 32
      %s300 = sadd.s32 %s298, %s299
      %s301 = smul.addr %s300, 8
      %s302 = scalar_lea.vmem %s7, %s301
      %s303 = smul.u32 8, %s23
      %p304 = scmp.eq.s32.totalorder %s23, 0
      // Predicated region
      $region49: #{tpu_custom_call.1} parent=47 // pred_check
        %p305 = pneg %p304
      $region50: #{tpu_custom_call.1} parent=47 // pred_check_branch
        %307 = sbr.rel (%p305) target = $region52
      $region51: #{tpu_custom_call.1} parent=47 // pred_region
        %vm308 = vcmask 31744
        %309 = vst.msk [vmem:[#allocation2] sm:$0xff] %vm308, 0.0
        %310 = vst.msk [vmem:[#allocation2 + $0x8] sm:$0xff] %vm308, 0.0
        %vm311 = vcmask 27648
        %312 = vst.msk [vmem:[#allocation2 + $0x10] sm:$0xf] %vm311, 0.0
        %313 = vst.msk [vmem:[#allocation2 + $0x18] sm:$0xff] %vm308, 0.0
        %314 = vst.msk [vmem:[#allocation2 + $0x20] sm:$0xff] %vm308, 0.0
        %315 = vst.msk [vmem:[#allocation2 + $0x28] sm:$0xf] %vm311, 0.0
        %316 = vst.msk [vmem:[#allocation2 + $0x30] sm:$0xff] %vm308, 0.0
        %317 = vst.msk [vmem:[#allocation2 + $0x38] sm:$0xff] %vm308, 0.0
        %318 = vst.msk [vmem:[#allocation2 + $0x40] sm:$0xf] %vm311, 0.0
        %319 = vst.msk [vmem:[#allocation2 + $0x48] sm:$0xff] %vm308, 0.0
        %320 = vst.msk [vmem:[#allocation2 + $0x50] sm:$0xff] %vm308, 0.0
        %321 = vst.msk [vmem:[#allocation2 + $0x58] sm:$0xf] %vm311, 0.0
        %322 = vst.msk [vmem:[#allocation2 + $0x60] sm:$0xff] %vm308, 0.0
        %323 = vst.msk [vmem:[#allocation2 + $0x68] sm:$0xff] %vm308, 0.0
        %324 = vst.msk [vmem:[#allocation2 + $0x70] sm:$0xf] %vm311, 0.0
        %325 = vst.msk [vmem:[#allocation2 + $0x78] sm:$0xff] %vm308, 0.0
        %326 = vst.msk [vmem:[#allocation2 + $0x80] sm:$0xff] %vm308, 0.0
        %327 = vst.msk [vmem:[#allocation2 + $0x88] sm:$0xf] %vm311, 0.0
        %328 = vst.msk [vmem:[#allocation2 + $0x90] sm:$0xff] %vm308, 0.0
        %329 = vst.msk [vmem:[#allocation2 + $0x98] sm:$0xff] %vm308, 0.0
        %330 = vst.msk [vmem:[#allocation2 + $0xa0] sm:$0xf] %vm311, 0.0
        %331 = vst.msk [vmem:[#allocation2 + $0xa8] sm:$0xff] %vm308, 0.0
        %332 = vst.msk [vmem:[#allocation2 + $0xb0] sm:$0xff] %vm308, 0.0
        %333 = vst.msk [vmem:[#allocation2 + $0xb8] sm:$0xf] %vm311, 0.0
        %334 = vst.msk [vmem:[#allocation2 + $0xc0] sm:$0xff] %vm308, 0.0
        %335 = vst.msk [vmem:[#allocation2 + $0xc8] sm:$0xff] %vm308, 0.0
        %336 = vst.msk [vmem:[#allocation2 + $0xd0] sm:$0xf] %vm311, 0.0
        %337 = vst.msk [vmem:[#allocation2 + $0xd8] sm:$0xff] %vm308, 0.0
        %338 = vst.msk [vmem:[#allocation2 + $0xe0] sm:$0xff] %vm308, 0.0
        %339 = vst.msk [vmem:[#allocation2 + $0xe8] sm:$0xf] %vm311, 0.0
        %340 = vst.msk [vmem:[#allocation2 + $0xf0] sm:$0xff] %vm308, 0.0
        %341 = vst.msk [vmem:[#allocation2 + $0xf8] sm:$0xff] %vm308, 0.0
        %342 = vst.msk [vmem:[#allocation2 + $0x100] sm:$0xf] %vm311, 0.0
        %343 = vst.msk [vmem:[#allocation2 + $0x108] sm:$0xff] %vm308, 0.0
        %344 = vst.msk [vmem:[#allocation2 + $0x110] sm:$0xff] %vm308, 0.0
        %345 = vst.msk [vmem:[#allocation2 + $0x118] sm:$0xf] %vm311, 0.0
        %346 = vst.msk [vmem:[#allocation2 + $0x120] sm:$0xff] %vm308, 0.0
        %347 = vst.msk [vmem:[#allocation2 + $0x128] sm:$0xff] %vm308, 0.0
        %348 = vst.msk [vmem:[#allocation2 + $0x130] sm:$0xf] %vm311, 0.0
        %349 = vst.msk [vmem:[#allocation2 + $0x138] sm:$0xff] %vm308, 0.0
        %350 = vst.msk [vmem:[#allocation2 + $0x140] sm:$0xff] %vm308, 0.0
        %351 = vst.msk [vmem:[#allocation2 + $0x148] sm:$0xf] %vm311, 0.0
        %352 = vst.msk [vmem:[#allocation2 + $0x150] sm:$0xff] %vm308, 0.0
        %353 = vst.msk [vmem:[#allocation2 + $0x158] sm:$0xff] %vm308, 0.0
        %354 = vst.msk [vmem:[#allocation2 + $0x160] sm:$0xf] %vm311, 0.0
        %355 = vst.msk [vmem:[#allocation2 + $0x168] sm:$0xff] %vm308, 0.0
        %356 = vst.msk [vmem:[#allocation2 + $0x170] sm:$0xff] %vm308, 0.0
        %357 = vst.msk [vmem:[#allocation2 + $0x178] sm:$0xf] %vm311, 0.0
        %358 = vst.msk [vmem:[#allocation2 + $0x180] sm:$0xff] %vm308, 0.0
        %359 = vst.msk [vmem:[#allocation2 + $0x188] sm:$0xff] %vm308, 0.0
        %360 = vst.msk [vmem:[#allocation2 + $0x190] sm:$0xf] %vm311, 0.0
        %361 = vst.msk [vmem:[#allocation2 + $0x198] sm:$0xff] %vm308, 0.0
        %362 = vst.msk [vmem:[#allocation2 + $0x1a0] sm:$0xff] %vm308, 0.0
        %363 = vst.msk [vmem:[#allocation2 + $0x1a8] sm:$0xf] %vm311, 0.0
        %364 = vst.msk [vmem:[#allocation2 + $0x1b0] sm:$0xff] %vm308, 0.0
        %365 = vst.msk [vmem:[#allocation2 + $0x1b8] sm:$0xff] %vm308, 0.0
        %366 = vst.msk [vmem:[#allocation2 + $0x1c0] sm:$0xf] %vm311, 0.0
        %367 = vst.msk [vmem:[#allocation2 + $0x1c8] sm:$0xff] %vm308, 0.0
        %368 = vst.msk [vmem:[#allocation2 + $0x1d0] sm:$0xff] %vm308, 0.0
        %369 = vst.msk [vmem:[#allocation2 + $0x1d8] sm:$0xf] %vm311, 0.0
        %v370 = vld [vmem:[%s292] sm:$0xff]
        %v371 = vld [vmem:[%s292 + $0x8] sm:$0xff]
        %v372 = vld [vmem:[%s292 + $0x10] sm:$0xff]
        %v373 = vld [vmem:[%s292 + $0x18] sm:$0xff]
        %v374 = vld [vmem:[%s292 + $0x20] sm:$0xff]
        %v375 = vld [vmem:[%s292 + $0x28] sm:$0xff]
        %v376 = vld [vmem:[%s292 + $0x30] sm:$0xff]
        %v377 = vld [vmem:[%s292 + $0x38] sm:$0xff]
        %v378 = vld [vmem:[%s292 + $0x40] sm:$0xff]
        %v379 = vld [vmem:[%s292 + $0x48] sm:$0xff]
        %v380 = vld [vmem:[%s292 + $0x50] sm:$0xff]
        %v381 = vld [vmem:[%s292 + $0x58] sm:$0xff]
        %v382 = vld [vmem:[%s292 + $0x60] sm:$0xff]
        %v383 = vld [vmem:[%s292 + $0x68] sm:$0xff]
        %v384 = vld [vmem:[%s292 + $0x70] sm:$0xff]
        %v385 = vld [vmem:[%s292 + $0x78] sm:$0xff]
        %v386 = vld [vmem:[%s292 + $0x80] sm:$0xff]
        %v387 = vld [vmem:[%s292 + $0x88] sm:$0xff]
        %v388 = vld [vmem:[%s292 + $0x90] sm:$0xff]
        %v389 = vld [vmem:[%s292 + $0x98] sm:$0xff]
        %v390 = vld [vmem:[%s292 + $0xa0] sm:$0xff]
        %v391 = vld [vmem:[%s292 + $0xa8] sm:$0xff]
        %v392 = vld [vmem:[%s292 + $0xb0] sm:$0xff]
        %v393 = vld [vmem:[%s292 + $0xb8] sm:$0xff]
        %v394 = vld [vmem:[%s292 + $0xc0] sm:$0xff]
        %v395 = vld [vmem:[%s292 + $0xc8] sm:$0xff]
        %v396 = vld [vmem:[%s292 + $0xd0] sm:$0xff]
        %v397 = vld [vmem:[%s292 + $0xd8] sm:$0xff]
        %v398 = vld [vmem:[%s292 + $0xe0] sm:$0xff]
        %v399 = vld [vmem:[%s292 + $0xe8] sm:$0xff]
        %v400 = vld [vmem:[%s292 + $0xf0] sm:$0xff]
        %v401 = vld [vmem:[%s292 + $0xf8] sm:$0xff]
        %s402 = scalar_lea.vmem [#allocation2], 48
        %403 = vst.msk [vmem:[%s402 + $0x2] sm:$0xff] %vm308, %v370
        %404 = vst.msk [vmem:[%s402 + $0xa] sm:$0xff] %vm308, %v371
        %405 = vst.msk [vmem:[%s402 + $0x1a] sm:$0xff] %vm308, %v372
        %406 = vst.msk [vmem:[%s402 + $0x22] sm:$0xff] %vm308, %v373
        %407 = vst.msk [vmem:[%s402 + $0x32] sm:$0xff] %vm308, %v374
        %408 = vst.msk [vmem:[%s402 + $0x3a] sm:$0xff] %vm308, %v375
        %409 = vst.msk [vmem:[%s402 + $0x4a] sm:$0xff] %vm308, %v376
        %410 = vst.msk [vmem:[%s402 + $0x52] sm:$0xff] %vm308, %v377
        %411 = vst.msk [vmem:[%s402 + $0x62] sm:$0xff] %vm308, %v378
        %412 = vst.msk [vmem:[%s402 + $0x6a] sm:$0xff] %vm308, %v379
        %413 = vst.msk [vmem:[%s402 + $0x7a] sm:$0xff] %vm308, %v380
        %414 = vst.msk [vmem:[%s402 + $0x82] sm:$0xff] %vm308, %v381
        %415 = vst.msk [vmem:[%s402 + $0x92] sm:$0xff] %vm308, %v382
        %416 = vst.msk [vmem:[%s402 + $0x9a] sm:$0xff] %vm308, %v383
        %417 = vst.msk [vmem:[%s402 + $0xaa] sm:$0xff] %vm308, %v384
        %418 = vst.msk [vmem:[%s402 + $0xb2] sm:$0xff] %vm308, %v385
        %419 = vst.msk [vmem:[%s402 + $0xc2] sm:$0xff] %vm308, %v386
        %420 = vst.msk [vmem:[%s402 + $0xca] sm:$0xff] %vm308, %v387
        %421 = vst.msk [vmem:[%s402 + $0xda] sm:$0xff] %vm308, %v388
        %422 = vst.msk [vmem:[%s402 + $0xe2] sm:$0xff] %vm308, %v389
        %423 = vst.msk [vmem:[%s402 + $0xf2] sm:$0xff] %vm308, %v390
        %424 = vst.msk [vmem:[%s402 + $0xfa] sm:$0xff] %vm308, %v391
        %425 = vst.msk [vmem:[%s402 + $0x10a] sm:$0xff] %vm308, %v392
        %426 = vst.msk [vmem:[%s402 + $0x112] sm:$0xff] %vm308, %v393
        %427 = vst.msk [vmem:[%s402 + $0x122] sm:$0xff] %vm308, %v394
        %428 = vst.msk [vmem:[%s402 + $0x12a] sm:$0xff] %vm308, %v395
        %429 = vst.msk [vmem:[%s402 + $0x13a] sm:$0xff] %vm308, %v396
        %430 = vst.msk [vmem:[%s402 + $0x142] sm:$0xff] %vm308, %v397
        %431 = vst.msk [vmem:[%s402 + $0x152] sm:$0xff] %vm308, %v398
        %432 = vst.msk [vmem:[%s402 + $0x15a] sm:$0xff] %vm308, %v399
        %433 = vst.msk [vmem:[%s402 + $0x16a] sm:$0xff] %vm308, %v400
        %434 = vst.msk [vmem:[%s402 + $0x172] sm:$0xff] %vm308, %v401
      $region52: #{tpu_custom_call.1} parent=47 // pred_fallthru
        _
      %s435 = smul.u32 %s23, 8
      %s436 = smul.u32 %s435, 24
      %s437 = scalar_lea.vmem [#allocation2], %s436
      %v438 = vld [vmem:[%s437] sm:$0xff]
      %v439 = vld [vmem:[%s437 + $0x8] sm:$0xff]
      %v440 = vld [vmem:[%s437 + $0x10] sm:$0xf]
      %v441 = vld [vmem:[%s437 + $0x18] sm:$0xff]
      %v442 = vld [vmem:[%s437 + $0x20] sm:$0xff]
      %v443 = vld [vmem:[%s437 + $0x28] sm:$0xf]
      %v444 = vld [vmem:[%s437 + $0x30] sm:$0xff]
      %v445 = vld [vmem:[%s437 + $0x38] sm:$0xff]
      %v446 = vld [vmem:[%s437 + $0x40] sm:$0xf]
      %v447 = vld [vmem:[%s437 + $0x48] sm:$0xff]
      %v448 = vld [vmem:[%s437 + $0x50] sm:$0xff]
      %v449 = vld [vmem:[%s437 + $0x58] sm:$0xf]
      %v450 = vld [vmem:[%s437 + $0x60] sm:$0xff]
      %v451 = vld [vmem:[%s437 + $0x68] sm:$0xff]
      %v452 = vld [vmem:[%s437 + $0x70] sm:$0xf]
      %v453 = vld [vmem:[%s437 + $0x78] sm:$0xff]
      %v454 = vld [vmem:[%s437 + $0x80] sm:$0xff]
      %v455 = vld [vmem:[%s437 + $0x88] sm:$0xf]
      %v456 = vld [vmem:[%s437 + $0x90] sm:$0xff]
      %v457 = vld [vmem:[%s437 + $0x98] sm:$0xff]
      %v458 = vld [vmem:[%s437 + $0xa0] sm:$0xf]
      %v459 = vld [vmem:[%s437 + $0xa8] sm:$0xff]
      %v460 = vld [vmem:[%s437 + $0xb0] sm:$0xff]
      %v461 = vld [vmem:[%s437 + $0xb8] sm:$0xf]
      %v462 = vld [vmem:[%s437 + $0xc0] sm:$0xff]
      %v463 = vld [vmem:[%s437 + $0xc8] sm:$0xff]
      %v464 = vld [vmem:[%s437 + $0xd0] sm:$0xf]
      %v465 = vld [vmem:[%s437 + $0xd8] sm:$0xff]
      %v466 = vld [vmem:[%s437 + $0xe0] sm:$0xff]
      %v467 = vld [vmem:[%s437 + $0xe8] sm:$0xf]
      %v468 = vld [vmem:[%s437 + $0xf0] sm:$0xff]
      %v469 = vld [vmem:[%s437 + $0xf8] sm:$0xff]
      %v470 = vld [vmem:[%s437 + $0x100] sm:$0xf]
      %v471 = vld [vmem:[%s437 + $0x108] sm:$0xff]
      %v472 = vld [vmem:[%s437 + $0x110] sm:$0xff]
      %v473 = vld [vmem:[%s437 + $0x118] sm:$0xf]
      %vm504 = vcmask 1046528
      %v505 = vrot.slane %v438, 1
      %v506 = vrot.slane %v439, 1
      %v507 = vsel %vm504, %v505, %v506
      %v508 = vrot.slane %v440, 1
      %v509 = vsel %vm504, %v506, %v508
      %v510 = vrot.slane %v441, 1
      %v511 = vrot.slane %v442, 1
      %v512 = vsel %vm504, %v510, %v511
      %v513 = vrot.slane %v443, 1
      %v514 = vsel %vm504, %v511, %v513
      %v515 = vrot.slane %v444, 1
      %v516 = vrot.slane %v445, 1
      %v517 = vsel %vm504, %v515, %v516
      %v518 = vrot.slane %v446, 1
      %v519 = vsel %vm504, %v516, %v518
      %v520 = vrot.slane %v447, 1
      %v521 = vrot.slane %v448, 1
      %v522 = vsel %vm504, %v520, %v521
      %v523 = vrot.slane %v449, 1
      %v524 = vsel %vm504, %v521, %v523
      %v525 = vrot.slane %v450, 1
      %v526 = vrot.slane %v451, 1
      %v527 = vsel %vm504, %v525, %v526
      %v528 = vrot.slane %v452, 1
      %v529 = vsel %vm504, %v526, %v528
      %v530 = vrot.slane %v453, 1
      %v531 = vrot.slane %v454, 1
      %v532 = vsel %vm504, %v530, %v531
      %v533 = vrot.slane %v455, 1
      %v534 = vsel %vm504, %v531, %v533
      %v535 = vrot.slane %v456, 1
      %v536 = vrot.slane %v457, 1
      %v537 = vsel %vm504, %v535, %v536
      %v538 = vrot.slane %v458, 1
      %v539 = vsel %vm504, %v536, %v538
      %v540 = vrot.slane %v459, 1
      %v541 = vrot.slane %v460, 1
      %v542 = vsel %vm504, %v540, %v541
      %v543 = vrot.slane %v461, 1
      %v544 = vsel %vm504, %v541, %v543
      %v545 = vrot.slane %v462, 1
      %v546 = vrot.slane %v463, 1
      %v547 = vsel %vm504, %v545, %v546
      %v548 = vrot.slane %v464, 1
      %v549 = vsel %vm504, %v546, %v548
      %v550 = vrot.slane %v465, 1
      %v551 = vrot.slane %v466, 1
      %v552 = vsel %vm504, %v550, %v551
      %v553 = vrot.slane %v467, 1
      %v554 = vsel %vm504, %v551, %v553
      %555 = vrot.lane.b32.xlu0 %v507, 4
      %v556 = vpop.permute.xlu0 %555
      %557 = vrot.lane.b32.xlu0 %v509, 4
      %v558 = vpop.permute.xlu0 %557
      %559 = vrot.lane.b32.xlu0 %v508, 4
      %v560 = vpop.permute.xlu0 %559
      %561 = vrot.lane.b32.xlu0 %v512, 4
      %v562 = vpop.permute.xlu0 %561
      %563 = vrot.lane.b32.xlu0 %v514, 4
      %v564 = vpop.permute.xlu0 %563
      %565 = vrot.lane.b32.xlu0 %v513, 4
      %v566 = vpop.permute.xlu0 %565
      %567 = vrot.lane.b32.xlu0 %v517, 4
      %v568 = vpop.permute.xlu0 %567
      %569 = vrot.lane.b32.xlu0 %v519, 4
      %v570 = vpop.permute.xlu0 %569
      %571 = vrot.lane.b32.xlu0 %v518, 4
      %v572 = vpop.permute.xlu0 %571
      %573 = vrot.lane.b32.xlu0 %v522, 4
      %v574 = vpop.permute.xlu0 %573
      %575 = vrot.lane.b32.xlu0 %v524, 4
      %v576 = vpop.permute.xlu0 %575
      %577 = vrot.lane.b32.xlu0 %v523, 4
      %v578 = vpop.permute.xlu0 %577
      %579 = vrot.lane.b32.xlu0 %v527, 4
      %v580 = vpop.permute.xlu0 %579
      %581 = vrot.lane.b32.xlu0 %v529, 4
      %v582 = vpop.permute.xlu0 %581
      %583 = vrot.lane.b32.xlu0 %v528, 4
      %v584 = vpop.permute.xlu0 %583
      %585 = vrot.lane.b32.xlu0 %v532, 4
      %v586 = vpop.permute.xlu0 %585
      %587 = vrot.lane.b32.xlu0 %v534, 4
      %v588 = vpop.permute.xlu0 %587
      %589 = vrot.lane.b32.xlu0 %v533, 4
      %v590 = vpop.permute.xlu0 %589
      %591 = vrot.lane.b32.xlu0 %v537, 4
      %v592 = vpop.permute.xlu0 %591
      %593 = vrot.lane.b32.xlu0 %v539, 4
      %v594 = vpop.permute.xlu0 %593
      %595 = vrot.lane.b32.xlu0 %v538, 4
      %v596 = vpop.permute.xlu0 %595
      %597 = vrot.lane.b32.xlu0 %v542, 4
      %v598 = vpop.permute.xlu0 %597
      %599 = vrot.lane.b32.xlu0 %v544, 4
      %v600 = vpop.permute.xlu0 %599
      %601 = vrot.lane.b32.xlu0 %v543, 4
      %v602 = vpop.permute.xlu0 %601
      %603 = vrot.lane.b32.xlu0 %v547, 4
      %v604 = vpop.permute.xlu0 %603
      %605 = vrot.lane.b32.xlu0 %v549, 4
      %v606 = vpop.permute.xlu0 %605
      %607 = vrot.lane.b32.xlu0 %v548, 4
      %v608 = vpop.permute.xlu0 %607
      %609 = vrot.lane.b32.xlu0 %v552, 4
      %v610 = vpop.permute.xlu0 %609
      %611 = vrot.lane.b32.xlu0 %v554, 4
      %v612 = vpop.permute.xlu0 %611
      %613 = vrot.lane.b32.xlu0 %v553, 4
      %v614 = vpop.permute.xlu0 %613
      %vm645 = vcmask 1045504
      %v646 = vrot.slane %v438, 2
      %v647 = vrot.slane %v439, 2
      %v648 = vsel %vm645, %v646, %v647
      %v649 = vrot.slane %v440, 2
      %v650 = vsel %vm645, %v647, %v649
      %v651 = vrot.slane %v441, 2
      %v652 = vrot.slane %v442, 2
      %v653 = vsel %vm645, %v651, %v652
      %v654 = vrot.slane %v443, 2
      %v655 = vsel %vm645, %v652, %v654
      %v656 = vrot.slane %v444, 2
      %v657 = vrot.slane %v445, 2
      %v658 = vsel %vm645, %v656, %v657
      %v659 = vrot.slane %v446, 2
      %v660 = vsel %vm645, %v657, %v659
      %v661 = vrot.slane %v447, 2
      %v662 = vrot.slane %v448, 2
      %v663 = vsel %vm645, %v661, %v662
      %v664 = vrot.slane %v449, 2
      %v665 = vsel %vm645, %v662, %v664
      %v666 = vrot.slane %v450, 2
      %v667 = vrot.slane %v451, 2
      %v668 = vsel %vm645, %v666, %v667
      %v669 = vrot.slane %v452, 2
      %v670 = vsel %vm645, %v667, %v669
      %v671 = vrot.slane %v453, 2
      %v672 = vrot.slane %v454, 2
      %v673 = vsel %vm645, %v671, %v672
      %v674 = vrot.slane %v455, 2
      %v675 = vsel %vm645, %v672, %v674
      %v676 = vrot.slane %v456, 2
      %v677 = vrot.slane %v457, 2
      %v678 = vsel %vm645, %v676, %v677
      %v679 = vrot.slane %v458, 2
      %v680 = vsel %vm645, %v677, %v679
      %v681 = vrot.slane %v459, 2
      %v682 = vrot.slane %v460, 2
      %v683 = vsel %vm645, %v681, %v682
      %v684 = vrot.slane %v461, 2
      %v685 = vsel %vm645, %v682, %v684
      %v686 = vrot.slane %v462, 2
      %v687 = vrot.slane %v463, 2
      %v688 = vsel %vm645, %v686, %v687
      %v689 = vrot.slane %v464, 2
      %v690 = vsel %vm645, %v687, %v689
      %v691 = vrot.slane %v465, 2
      %v692 = vrot.slane %v466, 2
      %v693 = vsel %vm645, %v691, %v692
      %v694 = vrot.slane %v467, 2
      %v695 = vsel %vm645, %v692, %v694
      %696 = vrot.lane.b32.xlu0 %v648, 8
      %v697 = vpop.permute.xlu0 %696
      %698 = vrot.lane.b32.xlu0 %v650, 8
      %v699 = vpop.permute.xlu0 %698
      %700 = vrot.lane.b32.xlu0 %v649, 8
      %v701 = vpop.permute.xlu0 %700
      %702 = vrot.lane.b32.xlu0 %v653, 8
      %v703 = vpop.permute.xlu0 %702
      %704 = vrot.lane.b32.xlu0 %v655, 8
      %v705 = vpop.permute.xlu0 %704
      %706 = vrot.lane.b32.xlu0 %v654, 8
      %v707 = vpop.permute.xlu0 %706
      %708 = vrot.lane.b32.xlu0 %v658, 8
      %v709 = vpop.permute.xlu0 %708
      %710 = vrot.lane.b32.xlu0 %v660, 8
      %v711 = vpop.permute.xlu0 %710
      %712 = vrot.lane.b32.xlu0 %v659, 8
      %v713 = vpop.permute.xlu0 %712
      %714 = vrot.lane.b32.xlu0 %v663, 8
      %v715 = vpop.permute.xlu0 %714
      %716 = vrot.lane.b32.xlu0 %v665, 8
      %v717 = vpop.permute.xlu0 %716
      %718 = vrot.lane.b32.xlu0 %v664, 8
      %v719 = vpop.permute.xlu0 %718
      %720 = vrot.lane.b32.xlu0 %v668, 8
      %v721 = vpop.permute.xlu0 %720
      %722 = vrot.lane.b32.xlu0 %v670, 8
      %v723 = vpop.permute.xlu0 %722
      %724 = vrot.lane.b32.xlu0 %v669, 8
      %v725 = vpop.permute.xlu0 %724
      %726 = vrot.lane.b32.xlu0 %v673, 8
      %v727 = vpop.permute.xlu0 %726
      %728 = vrot.lane.b32.xlu0 %v675, 8
      %v729 = vpop.permute.xlu0 %728
      %730 = vrot.lane.b32.xlu0 %v674, 8
      %v731 = vpop.permute.xlu0 %730
      %732 = vrot.lane.b32.xlu0 %v678, 8
      %v733 = vpop.permute.xlu0 %732
      %734 = vrot.lane.b32.xlu0 %v680, 8
      %v735 = vpop.permute.xlu0 %734
      %736 = vrot.lane.b32.xlu0 %v679, 8
      %v737 = vpop.permute.xlu0 %736
      %738 = vrot.lane.b32.xlu0 %v683, 8
      %v739 = vpop.permute.xlu0 %738
      %740 = vrot.lane.b32.xlu0 %v685, 8
      %v741 = vpop.permute.xlu0 %740
      %742 = vrot.lane.b32.xlu0 %v684, 8
      %v743 = vpop.permute.xlu0 %742
      %744 = vrot.lane.b32.xlu0 %v688, 8
      %v745 = vpop.permute.xlu0 %744
      %746 = vrot.lane.b32.xlu0 %v690, 8
      %v747 = vpop.permute.xlu0 %746
      %748 = vrot.lane.b32.xlu0 %v689, 8
      %v749 = vpop.permute.xlu0 %748
      %750 = vrot.lane.b32.xlu0 %v693, 8
      %v751 = vpop.permute.xlu0 %750
      %752 = vrot.lane.b32.xlu0 %v695, 8
      %v753 = vpop.permute.xlu0 %752
      %754 = vrot.lane.b32.xlu0 %v694, 8
      %v755 = vpop.permute.xlu0 %754
      %789 = vrot.lane.b32.xlu0 %v441, 12
      %v790 = vpop.permute.xlu0 %789
      %791 = vrot.lane.b32.xlu0 %v442, 12
      %v792 = vpop.permute.xlu0 %791
      %793 = vrot.lane.b32.xlu0 %v443, 12
      %v794 = vpop.permute.xlu0 %793
      %795 = vrot.lane.b32.xlu0 %v444, 12
      %v796 = vpop.permute.xlu0 %795
      %797 = vrot.lane.b32.xlu0 %v445, 12
      %v798 = vpop.permute.xlu0 %797
      %799 = vrot.lane.b32.xlu0 %v446, 12
      %v800 = vpop.permute.xlu0 %799
      %801 = vrot.lane.b32.xlu0 %v447, 12
      %v802 = vpop.permute.xlu0 %801
      %803 = vrot.lane.b32.xlu0 %v448, 12
      %v804 = vpop.permute.xlu0 %803
      %805 = vrot.lane.b32.xlu0 %v449, 12
      %v806 = vpop.permute.xlu0 %805
      %807 = vrot.lane.b32.xlu0 %v450, 12
      %v808 = vpop.permute.xlu0 %807
      %809 = vrot.lane.b32.xlu0 %v451, 12
      %v810 = vpop.permute.xlu0 %809
      %811 = vrot.lane.b32.xlu0 %v452, 12
      %v812 = vpop.permute.xlu0 %811
      %813 = vrot.lane.b32.xlu0 %v453, 12
      %v814 = vpop.permute.xlu0 %813
      %815 = vrot.lane.b32.xlu0 %v454, 12
      %v816 = vpop.permute.xlu0 %815
      %817 = vrot.lane.b32.xlu0 %v455, 12
      %v818 = vpop.permute.xlu0 %817
      %819 = vrot.lane.b32.xlu0 %v456, 12
      %v820 = vpop.permute.xlu0 %819
      %821 = vrot.lane.b32.xlu0 %v457, 12
      %v822 = vpop.permute.xlu0 %821
      %823 = vrot.lane.b32.xlu0 %v458, 12
      %v824 = vpop.permute.xlu0 %823
      %825 = vrot.lane.b32.xlu0 %v459, 12
      %v826 = vpop.permute.xlu0 %825
      %827 = vrot.lane.b32.xlu0 %v460, 12
      %v828 = vpop.permute.xlu0 %827
      %829 = vrot.lane.b32.xlu0 %v461, 12
      %v830 = vpop.permute.xlu0 %829
      %831 = vrot.lane.b32.xlu0 %v462, 12
      %v832 = vpop.permute.xlu0 %831
      %833 = vrot.lane.b32.xlu0 %v463, 12
      %v834 = vpop.permute.xlu0 %833
      %835 = vrot.lane.b32.xlu0 %v464, 12
      %v836 = vpop.permute.xlu0 %835
      %837 = vrot.lane.b32.xlu0 %v465, 12
      %v838 = vpop.permute.xlu0 %837
      %839 = vrot.lane.b32.xlu0 %v466, 12
      %v840 = vpop.permute.xlu0 %839
      %841 = vrot.lane.b32.xlu0 %v467, 12
      %v842 = vpop.permute.xlu0 %841
      %843 = vrot.lane.b32.xlu0 %v468, 12
      %v844 = vpop.permute.xlu0 %843
      %845 = vrot.lane.b32.xlu0 %v469, 12
      %v846 = vpop.permute.xlu0 %845
      %847 = vrot.lane.b32.xlu0 %v470, 12
      %v848 = vpop.permute.xlu0 %847
      %v879 = vrot.slane %v468, 1
      %v880 = vrot.slane %v469, 1
      %v881 = vsel %vm504, %v879, %v880
      %v882 = vrot.slane %v470, 1
      %v883 = vsel %vm504, %v880, %v882
      %884 = vrot.lane.b32.xlu0 %v512, 16
      %v885 = vpop.permute.xlu0 %884
      %886 = vrot.lane.b32.xlu0 %v514, 16
      %v887 = vpop.permute.xlu0 %886
      %888 = vrot.lane.b32.xlu0 %v513, 16
      %v889 = vpop.permute.xlu0 %888
      %890 = vrot.lane.b32.xlu0 %v517, 16
      %v891 = vpop.permute.xlu0 %890
      %892 = vrot.lane.b32.xlu0 %v519, 16
      %v893 = vpop.permute.xlu0 %892
      %894 = vrot.lane.b32.xlu0 %v518, 16
      %v895 = vpop.permute.xlu0 %894
      %896 = vrot.lane.b32.xlu0 %v522, 16
      %v897 = vpop.permute.xlu0 %896
      %898 = vrot.lane.b32.xlu0 %v524, 16
      %v899 = vpop.permute.xlu0 %898
      %900 = vrot.lane.b32.xlu0 %v523, 16
      %v901 = vpop.permute.xlu0 %900
      %902 = vrot.lane.b32.xlu0 %v527, 16
      %v903 = vpop.permute.xlu0 %902
      %904 = vrot.lane.b32.xlu0 %v529, 16
      %v905 = vpop.permute.xlu0 %904
      %906 = vrot.lane.b32.xlu0 %v528, 16
      %v907 = vpop.permute.xlu0 %906
      %908 = vrot.lane.b32.xlu0 %v532, 16
      %v909 = vpop.permute.xlu0 %908
      %910 = vrot.lane.b32.xlu0 %v534, 16
      %v911 = vpop.permute.xlu0 %910
      %912 = vrot.lane.b32.xlu0 %v533, 16
      %v913 = vpop.permute.xlu0 %912
      %914 = vrot.lane.b32.xlu0 %v537, 16
      %v915 = vpop.permute.xlu0 %914
      %916 = vrot.lane.b32.xlu0 %v539, 16
      %v917 = vpop.permute.xlu0 %916
      %918 = vrot.lane.b32.xlu0 %v538, 16
      %v919 = vpop.permute.xlu0 %918
      %920 = vrot.lane.b32.xlu0 %v542, 16
      %v921 = vpop.permute.xlu0 %920
      %922 = vrot.lane.b32.xlu0 %v544, 16
      %v923 = vpop.permute.xlu0 %922
      %924 = vrot.lane.b32.xlu0 %v543, 16
      %v925 = vpop.permute.xlu0 %924
      %926 = vrot.lane.b32.xlu0 %v547, 16
      %v927 = vpop.permute.xlu0 %926
      %928 = vrot.lane.b32.xlu0 %v549, 16
      %v929 = vpop.permute.xlu0 %928
      %930 = vrot.lane.b32.xlu0 %v548, 16
      %v931 = vpop.permute.xlu0 %930
      %932 = vrot.lane.b32.xlu0 %v552, 16
      %v933 = vpop.permute.xlu0 %932
      %934 = vrot.lane.b32.xlu0 %v554, 16
      %v935 = vpop.permute.xlu0 %934
      %936 = vrot.lane.b32.xlu0 %v553, 16
      %v937 = vpop.permute.xlu0 %936
      %938 = vrot.lane.b32.xlu0 %v881, 16
      %v939 = vpop.permute.xlu0 %938
      %940 = vrot.lane.b32.xlu0 %v883, 16
      %v941 = vpop.permute.xlu0 %940
      %942 = vrot.lane.b32.xlu0 %v882, 16
      %v943 = vpop.permute.xlu0 %942
      %v974 = vrot.slane %v468, 2
      %v975 = vrot.slane %v469, 2
      %v976 = vsel %vm645, %v974, %v975
      %v977 = vrot.slane %v470, 2
      %v978 = vsel %vm645, %v975, %v977
      %979 = vrot.lane.b32.xlu0 %v653, 20
      %v980 = vpop.permute.xlu0 %979
      %981 = vrot.lane.b32.xlu0 %v655, 20
      %v982 = vpop.permute.xlu0 %981
      %983 = vrot.lane.b32.xlu0 %v654, 20
      %v984 = vpop.permute.xlu0 %983
      %985 = vrot.lane.b32.xlu0 %v658, 20
      %v986 = vpop.permute.xlu0 %985
      %987 = vrot.lane.b32.xlu0 %v660, 20
      %v988 = vpop.permute.xlu0 %987
      %989 = vrot.lane.b32.xlu0 %v659, 20
      %v990 = vpop.permute.xlu0 %989
      %991 = vrot.lane.b32.xlu0 %v663, 20
      %v992 = vpop.permute.xlu0 %991
      %993 = vrot.lane.b32.xlu0 %v665, 20
      %v994 = vpop.permute.xlu0 %993
      %995 = vrot.lane.b32.xlu0 %v664, 20
      %v996 = vpop.permute.xlu0 %995
      %997 = vrot.lane.b32.xlu0 %v668, 20
      %v998 = vpop.permute.xlu0 %997
      %999 = vrot.lane.b32.xlu0 %v670, 20
      %v1000 = vpop.permute.xlu0 %999
      %1001 = vrot.lane.b32.xlu0 %v669, 20
      %v1002 = vpop.permute.xlu0 %1001
      %1003 = vrot.lane.b32.xlu0 %v673, 20
      %v1004 = vpop.permute.xlu0 %1003
      %1005 = vrot.lane.b32.xlu0 %v675, 20
      %v1006 = vpop.permute.xlu0 %1005
      %1007 = vrot.lane.b32.xlu0 %v674, 20
      %v1008 = vpop.permute.xlu0 %1007
      %1009 = vrot.lane.b32.xlu0 %v678, 20
      %v1010 = vpop.permute.xlu0 %1009
      %1011 = vrot.lane.b32.xlu0 %v680, 20
      %v1012 = vpop.permute.xlu0 %1011
      %1013 = vrot.lane.b32.xlu0 %v679, 20
      %v1014 = vpop.permute.xlu0 %1013
      %1015 = vrot.lane.b32.xlu0 %v683, 20
      %v1016 = vpop.permute.xlu0 %1015
      %1017 = vrot.lane.b32.xlu0 %v685, 20
      %v1018 = vpop.permute.xlu0 %1017
      %1019 = vrot.lane.b32.xlu0 %v684, 20
      %v1020 = vpop.permute.xlu0 %1019
      %1021 = vrot.lane.b32.xlu0 %v688, 20
      %v1022 = vpop.permute.xlu0 %1021
      %1023 = vrot.lane.b32.xlu0 %v690, 20
      %v1024 = vpop.permute.xlu0 %1023
      %1025 = vrot.lane.b32.xlu0 %v689, 20
      %v1026 = vpop.permute.xlu0 %1025
      %1027 = vrot.lane.b32.xlu0 %v693, 20
      %v1028 = vpop.permute.xlu0 %1027
      %1029 = vrot.lane.b32.xlu0 %v695, 20
      %v1030 = vpop.permute.xlu0 %1029
      %1031 = vrot.lane.b32.xlu0 %v694, 20
      %v1032 = vpop.permute.xlu0 %1031
      %1033 = vrot.lane.b32.xlu0 %v976, 20
      %v1034 = vpop.permute.xlu0 %1033
      %1035 = vrot.lane.b32.xlu0 %v978, 20
      %v1036 = vpop.permute.xlu0 %1035
      %1037 = vrot.lane.b32.xlu0 %v977, 20
      %v1038 = vpop.permute.xlu0 %1037
      %1072 = vrot.lane.b32.xlu0 %v444, 24
      %v1073 = vpop.permute.xlu0 %1072
      %1074 = vrot.lane.b32.xlu0 %v445, 24
      %v1075 = vpop.permute.xlu0 %1074
      %1076 = vrot.lane.b32.xlu0 %v446, 24
      %v1077 = vpop.permute.xlu0 %1076
      %1078 = vrot.lane.b32.xlu0 %v447, 24
      %v1079 = vpop.permute.xlu0 %1078
      %1080 = vrot.lane.b32.xlu0 %v448, 24
      %v1081 = vpop.permute.xlu0 %1080
      %1082 = vrot.lane.b32.xlu0 %v449, 24
      %v1083 = vpop.permute.xlu0 %1082
      %1084 = vrot.lane.b32.xlu0 %v450, 24
      %v1085 = vpop.permute.xlu0 %1084
      %1086 = vrot.lane.b32.xlu0 %v451, 24
      %v1087 = vpop.permute.xlu0 %1086
      %1088 = vrot.lane.b32.xlu0 %v452, 24
      %v1089 = vpop.permute.xlu0 %1088
      %1090 = vrot.lane.b32.xlu0 %v453, 24
      %v1091 = vpop.permute.xlu0 %1090
      %1092 = vrot.lane.b32.xlu0 %v454, 24
      %v1093 = vpop.permute.xlu0 %1092
      %1094 = vrot.lane.b32.xlu0 %v455, 24
      %v1095 = vpop.permute.xlu0 %1094
      %1096 = vrot.lane.b32.xlu0 %v456, 24
      %v1097 = vpop.permute.xlu0 %1096
      %1098 = vrot.lane.b32.xlu0 %v457, 24
      %v1099 = vpop.permute.xlu0 %1098
      %1100 = vrot.lane.b32.xlu0 %v458, 24
      %v1101 = vpop.permute.xlu0 %1100
      %1102 = vrot.lane.b32.xlu0 %v459, 24
      %v1103 = vpop.permute.xlu0 %1102
      %1104 = vrot.lane.b32.xlu0 %v460, 24
      %v1105 = vpop.permute.xlu0 %1104
      %1106 = vrot.lane.b32.xlu0 %v461, 24
      %v1107 = vpop.permute.xlu0 %1106
      %1108 = vrot.lane.b32.xlu0 %v462, 24
      %v1109 = vpop.permute.xlu0 %1108
      %1110 = vrot.lane.b32.xlu0 %v463, 24
      %v1111 = vpop.permute.xlu0 %1110
      %1112 = vrot.lane.b32.xlu0 %v464, 24
      %v1113 = vpop.permute.xlu0 %1112
      %1114 = vrot.lane.b32.xlu0 %v465, 24
      %v1115 = vpop.permute.xlu0 %1114
      %1116 = vrot.lane.b32.xlu0 %v466, 24
      %v1117 = vpop.permute.xlu0 %1116
      %1118 = vrot.lane.b32.xlu0 %v467, 24
      %v1119 = vpop.permute.xlu0 %1118
      %1120 = vrot.lane.b32.xlu0 %v468, 24
      %v1121 = vpop.permute.xlu0 %1120
      %1122 = vrot.lane.b32.xlu0 %v469, 24
      %v1123 = vpop.permute.xlu0 %1122
      %1124 = vrot.lane.b32.xlu0 %v470, 24
      %v1125 = vpop.permute.xlu0 %1124
      %1126 = vrot.lane.b32.xlu0 %v471, 24
      %v1127 = vpop.permute.xlu0 %1126
      %1128 = vrot.lane.b32.xlu0 %v472, 24
      %v1129 = vpop.permute.xlu0 %1128
      %1130 = vrot.lane.b32.xlu0 %v473, 24
      %v1131 = vpop.permute.xlu0 %1130
      %v1162 = vrot.slane %v471, 1
      %v1163 = vrot.slane %v472, 1
      %v1164 = vsel %vm504, %v1162, %v1163
      %v1165 = vrot.slane %v473, 1
      %v1166 = vsel %vm504, %v1163, %v1165
      %1167 = vrot.lane.b32.xlu0 %v517, 28
      %v1168 = vpop.permute.xlu0 %1167
      %1169 = vrot.lane.b32.xlu0 %v519, 28
      %v1170 = vpop.permute.xlu0 %1169
      %1171 = vrot.lane.b32.xlu0 %v518, 28
      %v1172 = vpop.permute.xlu0 %1171
      %1173 = vrot.lane.b32.xlu0 %v522, 28
      %v1174 = vpop.permute.xlu0 %1173
      %1175 = vrot.lane.b32.xlu0 %v524, 28
      %v1176 = vpop.permute.xlu0 %1175
      %1177 = vrot.lane.b32.xlu0 %v523, 28
      %v1178 = vpop.permute.xlu0 %1177
      %1179 = vrot.lane.b32.xlu0 %v527, 28
      %v1180 = vpop.permute.xlu0 %1179
      %1181 = vrot.lane.b32.xlu0 %v529, 28
      %v1182 = vpop.permute.xlu0 %1181
      %1183 = vrot.lane.b32.xlu0 %v528, 28
      %v1184 = vpop.permute.xlu0 %1183
      %1185 = vrot.lane.b32.xlu0 %v532, 28
      %v1186 = vpop.permute.xlu0 %1185
      %1187 = vrot.lane.b32.xlu0 %v534, 28
      %v1188 = vpop.permute.xlu0 %1187
      %1189 = vrot.lane.b32.xlu0 %v533, 28
      %v1190 = vpop.permute.xlu0 %1189
      %1191 = vrot.lane.b32.xlu0 %v537, 28
      %v1192 = vpop.permute.xlu0 %1191
      %1193 = vrot.lane.b32.xlu0 %v539, 28
      %v1194 = vpop.permute.xlu0 %1193
      %1195 = vrot.lane.b32.xlu0 %v538, 28
      %v1196 = vpop.permute.xlu0 %1195
      %1197 = vrot.lane.b32.xlu0 %v542, 28
      %v1198 = vpop.permute.xlu0 %1197
      %1199 = vrot.lane.b32.xlu0 %v544, 28
      %v1200 = vpop.permute.xlu0 %1199
      %1201 = vrot.lane.b32.xlu0 %v543, 28
      %v1202 = vpop.permute.xlu0 %1201
      %1203 = vrot.lane.b32.xlu0 %v547, 28
      %v1204 = vpop.permute.xlu0 %1203
      %1205 = vrot.lane.b32.xlu0 %v549, 28
      %v1206 = vpop.permute.xlu0 %1205
      %1207 = vrot.lane.b32.xlu0 %v548, 28
      %v1208 = vpop.permute.xlu0 %1207
      %1209 = vrot.lane.b32.xlu0 %v552, 28
      %v1210 = vpop.permute.xlu0 %1209
      %1211 = vrot.lane.b32.xlu0 %v554, 28
      %v1212 = vpop.permute.xlu0 %1211
      %1213 = vrot.lane.b32.xlu0 %v553, 28
      %v1214 = vpop.permute.xlu0 %1213
      %1215 = vrot.lane.b32.xlu0 %v881, 28
      %v1216 = vpop.permute.xlu0 %1215
      %1217 = vrot.lane.b32.xlu0 %v883, 28
      %v1218 = vpop.permute.xlu0 %1217
      %1219 = vrot.lane.b32.xlu0 %v882, 28
      %v1220 = vpop.permute.xlu0 %1219
      %1221 = vrot.lane.b32.xlu0 %v1164, 28
      %v1222 = vpop.permute.xlu0 %1221
      %1223 = vrot.lane.b32.xlu0 %v1166, 28
      %v1224 = vpop.permute.xlu0 %1223
      %1225 = vrot.lane.b32.xlu0 %v1165, 28
      %v1226 = vpop.permute.xlu0 %1225
      %v1257 = vrot.slane %v471, 2
      %v1258 = vrot.slane %v472, 2
      %v1259 = vsel %vm645, %v1257, %v1258
      %v1260 = vrot.slane %v473, 2
      %v1261 = vsel %vm645, %v1258, %v1260
      %1262 = vrot.lane.b32.xlu0 %v658, 32
      %v1263 = vpop.permute.xlu0 %1262
      %1264 = vrot.lane.b32.xlu0 %v660, 32
      %v1265 = vpop.permute.xlu0 %1264
      %1266 = vrot.lane.b32.xlu0 %v659, 32
      %v1267 = vpop.permute.xlu0 %1266
      %1268 = vrot.lane.b32.xlu0 %v663, 32
      %v1269 = vpop.permute.xlu0 %1268
      %1270 = vrot.lane.b32.xlu0 %v665, 32
      %v1271 = vpop.permute.xlu0 %1270
      %1272 = vrot.lane.b32.xlu0 %v664, 32
      %v1273 = vpop.permute.xlu0 %1272
      %1274 = vrot.lane.b32.xlu0 %v668, 32
      %v1275 = vpop.permute.xlu0 %1274
      %1276 = vrot.lane.b32.xlu0 %v670, 32
      %v1277 = vpop.permute.xlu0 %1276
      %1278 = vrot.lane.b32.xlu0 %v669, 32
      %v1279 = vpop.permute.xlu0 %1278
      %1280 = vrot.lane.b32.xlu0 %v673, 32
      %v1281 = vpop.permute.xlu0 %1280
      %1282 = vrot.lane.b32.xlu0 %v675, 32
      %v1283 = vpop.permute.xlu0 %1282
      %1284 = vrot.lane.b32.xlu0 %v674, 32
      %v1285 = vpop.permute.xlu0 %1284
      %1286 = vrot.lane.b32.xlu0 %v678, 32
      %v1287 = vpop.permute.xlu0 %1286
      %1288 = vrot.lane.b32.xlu0 %v680, 32
      %v1289 = vpop.permute.xlu0 %1288
      %1290 = vrot.lane.b32.xlu0 %v679, 32
      %v1291 = vpop.permute.xlu0 %1290
      %1292 = vrot.lane.b32.xlu0 %v683, 32
      %v1293 = vpop.permute.xlu0 %1292
      %1294 = vrot.lane.b32.xlu0 %v685, 32
      %v1295 = vpop.permute.xlu0 %1294
      %1296 = vrot.lane.b32.xlu0 %v684, 32
      %v1297 = vpop.permute.xlu0 %1296
      %1298 = vrot.lane.b32.xlu0 %v688, 32
      %v1299 = vpop.permute.xlu0 %1298
      %1300 = vrot.lane.b32.xlu0 %v690, 32
      %v1301 = vpop.permute.xlu0 %1300
      %1302 = vrot.lane.b32.xlu0 %v689, 32
      %v1303 = vpop.permute.xlu0 %1302
      %1304 = vrot.lane.b32.xlu0 %v693, 32
      %v1305 = vpop.permute.xlu0 %1304
      %1306 = vrot.lane.b32.xlu0 %v695, 32
      %v1307 = vpop.permute.xlu0 %1306
      %1308 = vrot.lane.b32.xlu0 %v694, 32
      %v1309 = vpop.permute.xlu0 %1308
      %1310 = vrot.lane.b32.xlu0 %v976, 32
      %v1311 = vpop.permute.xlu0 %1310
      %1312 = vrot.lane.b32.xlu0 %v978, 32
      %v1313 = vpop.permute.xlu0 %1312
      %1314 = vrot.lane.b32.xlu0 %v977, 32
      %v1315 = vpop.permute.xlu0 %1314
      %1316 = vrot.lane.b32.xlu0 %v1259, 32
      %v1317 = vpop.permute.xlu0 %1316
      %1318 = vrot.lane.b32.xlu0 %v1261, 32
      %v1319 = vpop.permute.xlu0 %1318
      %1320 = vrot.lane.b32.xlu0 %v1260, 32
      %v1321 = vpop.permute.xlu0 %1320
      %vm1352 = vcmask 31744
      %v1353 = vsel %vm1352, %v438, %v556
      %v1354 = vsel %vm1352, %v439, %v558
      %v1355 = vsel %vm1352, %v440, %v560
      %v1356 = vsel %vm1352, %v441, %v562
      %v1357 = vsel %vm1352, %v442, %v564
      %v1358 = vsel %vm1352, %v443, %v566
      %v1359 = vsel %vm1352, %v444, %v568
      %v1360 = vsel %vm1352, %v445, %v570
      %v1361 = vsel %vm1352, %v446, %v572
      %v1362 = vsel %vm1352, %v447, %v574
      %v1363 = vsel %vm1352, %v448, %v576
      %v1364 = vsel %vm1352, %v449, %v578
      %v1365 = vsel %vm1352, %v450, %v580
      %v1366 = vsel %vm1352, %v451, %v582
      %v1367 = vsel %vm1352, %v452, %v584
      %v1368 = vsel %vm1352, %v453, %v586
      %v1369 = vsel %vm1352, %v454, %v588
      %v1370 = vsel %vm1352, %v455, %v590
      %v1371 = vsel %vm1352, %v456, %v592
      %v1372 = vsel %vm1352, %v457, %v594
      %v1373 = vsel %vm1352, %v458, %v596
      %v1374 = vsel %vm1352, %v459, %v598
      %v1375 = vsel %vm1352, %v460, %v600
      %v1376 = vsel %vm1352, %v461, %v602
      %v1377 = vsel %vm1352, %v462, %v604
      %v1378 = vsel %vm1352, %v463, %v606
      %v1379 = vsel %vm1352, %v464, %v608
      %v1380 = vsel %vm1352, %v465, %v610
      %v1381 = vsel %vm1352, %v466, %v612
      %v1382 = vsel %vm1352, %v467, %v614
      %vm1383 = vcmask 64512
      %v1384 = vsel %vm1383, %v1353, %v697
      %v1385 = vsel %vm1383, %v1354, %v699
      %v1386 = vsel %vm1383, %v1355, %v701
      %v1387 = vsel %vm1383, %v1356, %v703
      %v1388 = vsel %vm1383, %v1357, %v705
      %v1389 = vsel %vm1383, %v1358, %v707
      %v1390 = vsel %vm1383, %v1359, %v709
      %v1391 = vsel %vm1383, %v1360, %v711
      %v1392 = vsel %vm1383, %v1361, %v713
      %v1393 = vsel %vm1383, %v1362, %v715
      %v1394 = vsel %vm1383, %v1363, %v717
      %v1395 = vsel %vm1383, %v1364, %v719
      %v1396 = vsel %vm1383, %v1365, %v721
      %v1397 = vsel %vm1383, %v1366, %v723
      %v1398 = vsel %vm1383, %v1367, %v725
      %v1399 = vsel %vm1383, %v1368, %v727
      %v1400 = vsel %vm1383, %v1369, %v729
      %v1401 = vsel %vm1383, %v1370, %v731
      %v1402 = vsel %vm1383, %v1371, %v733
      %v1403 = vsel %vm1383, %v1372, %v735
      %v1404 = vsel %vm1383, %v1373, %v737
      %v1405 = vsel %vm1383, %v1374, %v739
      %v1406 = vsel %vm1383, %v1375, %v741
      %v1407 = vsel %vm1383, %v1376, %v743
      %v1408 = vsel %vm1383, %v1377, %v745
      %v1409 = vsel %vm1383, %v1378, %v747
      %v1410 = vsel %vm1383, %v1379, %v749
      %v1411 = vsel %vm1383, %v1380, %v751
      %v1412 = vsel %vm1383, %v1381, %v753
      %v1413 = vsel %vm1383, %v1382, %v755
      %vm1414 = vcmask 97280
      %v1415 = vsel %vm1414, %v1384, %v790
      %v1416 = vsel %vm1414, %v1385, %v792
      %v1417 = vsel %vm1414, %v1386, %v794
      %v1418 = vsel %vm1414, %v1387, %v796
      %v1419 = vsel %vm1414, %v1388, %v798
      %v1420 = vsel %vm1414, %v1389, %v800
      %v1421 = vsel %vm1414, %v1390, %v802
      %v1422 = vsel %vm1414, %v1391, %v804
      %v1423 = vsel %vm1414, %v1392, %v806
      %v1424 = vsel %vm1414, %v1393, %v808
      %v1425 = vsel %vm1414, %v1394, %v810
      %v1426 = vsel %vm1414, %v1395, %v812
      %v1427 = vsel %vm1414, %v1396, %v814
      %v1428 = vsel %vm1414, %v1397, %v816
      %v1429 = vsel %vm1414, %v1398, %v818
      %v1430 = vsel %vm1414, %v1399, %v820
      %v1431 = vsel %vm1414, %v1400, %v822
      %v1432 = vsel %vm1414, %v1401, %v824
      %v1433 = vsel %vm1414, %v1402, %v826
      %v1434 = vsel %vm1414, %v1403, %v828
      %v1435 = vsel %vm1414, %v1404, %v830
      %v1436 = vsel %vm1414, %v1405, %v832
      %v1437 = vsel %vm1414, %v1406, %v834
      %v1438 = vsel %vm1414, %v1407, %v836
      %v1439 = vsel %vm1414, %v1408, %v838
      %v1440 = vsel %vm1414, %v1409, %v840
      %v1441 = vsel %vm1414, %v1410, %v842
      %v1442 = vsel %vm1414, %v1411, %v844
      %v1443 = vsel %vm1414, %v1412, %v846
      %v1444 = vsel %vm1414, %v1413, %v848
      %vm1445 = vcmask 130048
      %v1446 = vsel %vm1445, %v1415, %v885
      %v1447 = vsel %vm1445, %v1416, %v887
      %v1448 = vsel %vm1445, %v1417, %v889
      %v1449 = vsel %vm1445, %v1418, %v891
      %v1450 = vsel %vm1445, %v1419, %v893
      %v1451 = vsel %vm1445, %v1420, %v895
      %v1452 = vsel %vm1445, %v1421, %v897
      %v1453 = vsel %vm1445, %v1422, %v899
      %v1454 = vsel %vm1445, %v1423, %v901
      %v1455 = vsel %vm1445, %v1424, %v903
      %v1456 = vsel %vm1445, %v1425, %v905
      %v1457 = vsel %vm1445, %v1426, %v907
      %v1458 = vsel %vm1445, %v1427, %v909
      %v1459 = vsel %vm1445, %v1428, %v911
      %v1460 = vsel %vm1445, %v1429, %v913
      %v1461 = vsel %vm1445, %v1430, %v915
      %v1462 = vsel %vm1445, %v1431, %v917
      %v1463 = vsel %vm1445, %v1432, %v919
      %v1464 = vsel %vm1445, %v1433, %v921
      %v1465 = vsel %vm1445, %v1434, %v923
      %v1466 = vsel %vm1445, %v1435, %v925
      %v1467 = vsel %vm1445, %v1436, %v927
      %v1468 = vsel %vm1445, %v1437, %v929
      %v1469 = vsel %vm1445, %v1438, %v931
      %v1470 = vsel %vm1445, %v1439, %v933
      %v1471 = vsel %vm1445, %v1440, %v935
      %v1472 = vsel %vm1445, %v1441, %v937
      %v1473 = vsel %vm1445, %v1442, %v939
      %v1474 = vsel %vm1445, %v1443, %v941
      %v1475 = vsel %vm1445, %v1444, %v943
      %vm1476 = vcmask 162816
      %v1477 = vsel %vm1476, %v1446, %v980
      %v1478 = vsel %vm1476, %v1447, %v982
      %v1479 = vsel %vm1476, %v1448, %v984
      %v1480 = vsel %vm1476, %v1449, %v986
      %v1481 = vsel %vm1476, %v1450, %v988
      %v1482 = vsel %vm1476, %v1451, %v990
      %v1483 = vsel %vm1476, %v1452, %v992
      %v1484 = vsel %vm1476, %v1453, %v994
      %v1485 = vsel %vm1476, %v1454, %v996
      %v1486 = vsel %vm1476, %v1455, %v998
      %v1487 = vsel %vm1476, %v1456, %v1000
      %v1488 = vsel %vm1476, %v1457, %v1002
      %v1489 = vsel %vm1476, %v1458, %v1004
      %v1490 = vsel %vm1476, %v1459, %v1006
      %v1491 = vsel %vm1476, %v1460, %v1008
      %v1492 = vsel %vm1476, %v1461, %v1010
      %v1493 = vsel %vm1476, %v1462, %v1012
      %v1494 = vsel %vm1476, %v1463, %v1014
      %v1495 = vsel %vm1476, %v1464, %v1016
      %v1496 = vsel %vm1476, %v1465, %v1018
      %v1497 = vsel %vm1476, %v1466, %v1020
      %v1498 = vsel %vm1476, %v1467, %v1022
      %v1499 = vsel %vm1476, %v1468, %v1024
      %v1500 = vsel %vm1476, %v1469, %v1026
      %v1501 = vsel %vm1476, %v1470, %v1028
      %v1502 = vsel %vm1476, %v1471, %v1030
      %v1503 = vsel %vm1476, %v1472, %v1032
      %v1504 = vsel %vm1476, %v1473, %v1034
      %v1505 = vsel %vm1476, %v1474, %v1036
      %v1506 = vsel %vm1476, %v1475, %v1038
      %vm1507 = vcmask 195584
      %v1508 = vsel %vm1507, %v1477, %v1073
      %v1509 = vsel %vm1507, %v1478, %v1075
      %v1510 = vsel %vm1507, %v1479, %v1077
      %v1511 = vsel %vm1507, %v1480, %v1079
      %v1512 = vsel %vm1507, %v1481, %v1081
      %v1513 = vsel %vm1507, %v1482, %v1083
      %v1514 = vsel %vm1507, %v1483, %v1085
      %v1515 = vsel %vm1507, %v1484, %v1087
      %v1516 = vsel %vm1507, %v1485, %v1089
      %v1517 = vsel %vm1507, %v1486, %v1091
      %v1518 = vsel %vm1507, %v1487, %v1093
      %v1519 = vsel %vm1507, %v1488, %v1095
      %v1520 = vsel %vm1507, %v1489, %v1097
      %v1521 = vsel %vm1507, %v1490, %v1099
      %v1522 = vsel %vm1507, %v1491, %v1101
      %v1523 = vsel %vm1507, %v1492, %v1103
      %v1524 = vsel %vm1507, %v1493, %v1105
      %v1525 = vsel %vm1507, %v1494, %v1107
      %v1526 = vsel %vm1507, %v1495, %v1109
      %v1527 = vsel %vm1507, %v1496, %v1111
      %v1528 = vsel %vm1507, %v1497, %v1113
      %v1529 = vsel %vm1507, %v1498, %v1115
      %v1530 = vsel %vm1507, %v1499, %v1117
      %v1531 = vsel %vm1507, %v1500, %v1119
      %v1532 = vsel %vm1507, %v1501, %v1121
      %v1533 = vsel %vm1507, %v1502, %v1123
      %v1534 = vsel %vm1507, %v1503, %v1125
      %v1535 = vsel %vm1507, %v1504, %v1127
      %v1536 = vsel %vm1507, %v1505, %v1129
      %v1537 = vsel %vm1507, %v1506, %v1131
      %vm1538 = vcmask 228352
      %v1539 = vsel %vm1538, %v1508, %v1168
      %v1540 = vsel %vm1538, %v1509, %v1170
      %v1541 = vsel %vm1538, %v1510, %v1172
      %v1542 = vsel %vm1538, %v1511, %v1174
      %v1543 = vsel %vm1538, %v1512, %v1176
      %v1544 = vsel %vm1538, %v1513, %v1178
      %v1545 = vsel %vm1538, %v1514, %v1180
      %v1546 = vsel %vm1538, %v1515, %v1182
      %v1547 = vsel %vm1538, %v1516, %v1184
      %v1548 = vsel %vm1538, %v1517, %v1186
      %v1549 = vsel %vm1538, %v1518, %v1188
      %v1550 = vsel %vm1538, %v1519, %v1190
      %v1551 = vsel %vm1538, %v1520, %v1192
      %v1552 = vsel %vm1538, %v1521, %v1194
      %v1553 = vsel %vm1538, %v1522, %v1196
      %v1554 = vsel %vm1538, %v1523, %v1198
      %v1555 = vsel %vm1538, %v1524, %v1200
      %v1556 = vsel %vm1538, %v1525, %v1202
      %v1557 = vsel %vm1538, %v1526, %v1204
      %v1558 = vsel %vm1538, %v1527, %v1206
      %v1559 = vsel %vm1538, %v1528, %v1208
      %v1560 = vsel %vm1538, %v1529, %v1210
      %v1561 = vsel %vm1538, %v1530, %v1212
      %v1562 = vsel %vm1538, %v1531, %v1214
      %v1563 = vsel %vm1538, %v1532, %v1216
      %v1564 = vsel %vm1538, %v1533, %v1218
      %v1565 = vsel %vm1538, %v1534, %v1220
      %v1566 = vsel %vm1538, %v1535, %v1222
      %v1567 = vsel %vm1538, %v1536, %v1224
      %v1568 = vsel %vm1538, %v1537, %v1226
      %vm1569 = vcmask 261120
      %v1570 = vsel %vm1569, %v1539, %v1263
      %v1571 = vsel %vm1569, %v1540, %v1265
      %v1572 = vsel %vm1569, %v1541, %v1267
      %v1573 = vsel %vm1569, %v1542, %v1269
      %v1574 = vsel %vm1569, %v1543, %v1271
      %v1575 = vsel %vm1569, %v1544, %v1273
      %v1576 = vsel %vm1569, %v1545, %v1275
      %v1577 = vsel %vm1569, %v1546, %v1277
      %v1578 = vsel %vm1569, %v1547, %v1279
      %v1579 = vsel %vm1569, %v1548, %v1281
      %v1580 = vsel %vm1569, %v1549, %v1283
      %v1581 = vsel %vm1569, %v1550, %v1285
      %v1582 = vsel %vm1569, %v1551, %v1287
      %v1583 = vsel %vm1569, %v1552, %v1289
      %v1584 = vsel %vm1569, %v1553, %v1291
      %v1585 = vsel %vm1569, %v1554, %v1293
      %v1586 = vsel %vm1569, %v1555, %v1295
      %v1587 = vsel %vm1569, %v1556, %v1297
      %v1588 = vsel %vm1569, %v1557, %v1299
      %v1589 = vsel %vm1569, %v1558, %v1301
      %v1590 = vsel %vm1569, %v1559, %v1303
      %v1591 = vsel %vm1569, %v1560, %v1305
      %v1592 = vsel %vm1569, %v1561, %v1307
      %v1593 = vsel %vm1569, %v1562, %v1309
      %v1594 = vsel %vm1569, %v1563, %v1311
      %v1595 = vsel %vm1569, %v1564, %v1313
      %v1596 = vsel %vm1569, %v1565, %v1315
      %v1597 = vsel %vm1569, %v1566, %v1317
      %v1598 = vsel %vm1569, %v1567, %v1319
      %v1599 = vsel %vm1569, %v1568, %v1321
      %v1630 = vcombine.high %v1570, %v1570
      %v1632 = vunpack.c.l.s4 1983009808
      %v1633 = vunpack.c.0.s8 %v1632
      %v1634 = vlaneseq
      %v1635 = vshrl.u32 %v1634, 7
      %v1636 = vsub.s32 %v1633, %v1635
      %v1637 = vrot.slane %v1570, %v1636
      %v1639 = vunpack.c.l.s4 1983009808
      %v1640 = vunpack.c.0.s8 %v1639
      %v1641 = vlaneseq
      %v1642 = vshrl.u32 %v1641, 7
      %v1643 = vsub.s32 %v1640, %v1642
      %v1644 = vrot.slane %v1630, %v1643
      %v1645 = vcombine.high %v1637, %v1637
      %v1646 = vcombine.high %v1644, %v1644
      %v1647 = vcombine.high %v1571, %v1571
      %v1649 = vunpack.c.l.s4 1983009808
      %v1650 = vunpack.c.0.s8 %v1649
      %v1651 = vlaneseq
      %v1652 = vshrl.u32 %v1651, 7
      %v1653 = vsub.s32 %v1650, %v1652
      %v1654 = vrot.slane %v1571, %v1653
      %v1656 = vunpack.c.l.s4 1983009808
      %v1657 = vunpack.c.0.s8 %v1656
      %v1658 = vlaneseq
      %v1659 = vshrl.u32 %v1658, 7
      %v1660 = vsub.s32 %v1657, %v1659
      %v1661 = vrot.slane %v1647, %v1660
      %v1662 = vcombine.high %v1654, %v1654
      %v1663 = vcombine.high %v1661, %v1661
      %v1665 = vunpack.c.l.s4 1983009808
      %v1666 = vunpack.c.0.s8 %v1665
      %v1667 = vlaneseq
      %v1668 = vshrl.u32 %v1667, 7
      %v1669 = vsub.s32 %v1666, %v1668
      %v1670 = vrot.slane %v1572, %v1669
      %v1671 = vcombine.high %v1573, %v1573
      %v1673 = vunpack.c.l.s4 1983009808
      %v1674 = vunpack.c.0.s8 %v1673
      %v1675 = vlaneseq
      %v1676 = vshrl.u32 %v1675, 7
      %v1677 = vsub.s32 %v1674, %v1676
      %v1678 = vrot.slane %v1573, %v1677
      %v1680 = vunpack.c.l.s4 1983009808
      %v1681 = vunpack.c.0.s8 %v1680
      %v1682 = vlaneseq
      %v1683 = vshrl.u32 %v1682, 7
      %v1684 = vsub.s32 %v1681, %v1683
      %v1685 = vrot.slane %v1671, %v1684
      %v1686 = vcombine.high %v1678, %v1678
      %v1687 = vcombine.high %v1685, %v1685
      %v1688 = vcombine.high %v1574, %v1574
      %v1690 = vunpack.c.l.s4 1983009808
      %v1691 = vunpack.c.0.s8 %v1690
      %v1692 = vlaneseq
      %v1693 = vshrl.u32 %v1692, 7
      %v1694 = vsub.s32 %v1691, %v1693
      %v1695 = vrot.slane %v1574, %v1694
      %v1697 = vunpack.c.l.s4 1983009808
      %v1698 = vunpack.c.0.s8 %v1697
      %v1699 = vlaneseq
      %v1700 = vshrl.u32 %v1699, 7
      %v1701 = vsub.s32 %v1698, %v1700
      %v1702 = vrot.slane %v1688, %v1701
      %v1703 = vcombine.high %v1695, %v1695
      %v1704 = vcombine.high %v1702, %v1702
      %v1706 = vunpack.c.l.s4 1983009808
      %v1707 = vunpack.c.0.s8 %v1706
      %v1708 = vlaneseq
      %v1709 = vshrl.u32 %v1708, 7
      %v1710 = vsub.s32 %v1707, %v1709
      %v1711 = vrot.slane %v1575, %v1710
      %v1712 = vcombine.high %v1576, %v1576
      %v1714 = vunpack.c.l.s4 1983009808
      %v1715 = vunpack.c.0.s8 %v1714
      %v1716 = vlaneseq
      %v1717 = vshrl.u32 %v1716, 7
      %v1718 = vsub.s32 %v1715, %v1717
      %v1719 = vrot.slane %v1576, %v1718
      %v1721 = vunpack.c.l.s4 1983009808
      %v1722 = vunpack.c.0.s8 %v1721
      %v1723 = vlaneseq
      %v1724 = vshrl.u32 %v1723, 7
      %v1725 = vsub.s32 %v1722, %v1724
      %v1726 = vrot.slane %v1712, %v1725
      %v1727 = vcombine.high %v1719, %v1719
      %v1728 = vcombine.high %v1726, %v1726
      %v1729 = vcombine.high %v1577, %v1577
      %v1731 = vunpack.c.l.s4 1983009808
      %v1732 = vunpack.c.0.s8 %v1731
      %v1733 = vlaneseq
      %v1734 = vshrl.u32 %v1733, 7
      %v1735 = vsub.s32 %v1732, %v1734
      %v1736 = vrot.slane %v1577, %v1735
      %v1738 = vunpack.c.l.s4 1983009808
      %v1739 = vunpack.c.0.s8 %v1738
      %v1740 = vlaneseq
      %v1741 = vshrl.u32 %v1740, 7
      %v1742 = vsub.s32 %v1739, %v1741
      %v1743 = vrot.slane %v1729, %v1742
      %v1744 = vcombine.high %v1736, %v1736
      %v1745 = vcombine.high %v1743, %v1743
      %v1747 = vunpack.c.l.s4 1983009808
      %v1748 = vunpack.c.0.s8 %v1747
      %v1749 = vlaneseq
      %v1750 = vshrl.u32 %v1749, 7
      %v1751 = vsub.s32 %v1748, %v1750
      %v1752 = vrot.slane %v1578, %v1751
      %v1753 = vcombine.high %v1579, %v1579
      %v1755 = vunpack.c.l.s4 1983009808
      %v1756 = vunpack.c.0.s8 %v1755
      %v1757 = vlaneseq
      %v1758 = vshrl.u32 %v1757, 7
      %v1759 = vsub.s32 %v1756, %v1758
      %v1760 = vrot.slane %v1579, %v1759
      %v1762 = vunpack.c.l.s4 1983009808
      %v1763 = vunpack.c.0.s8 %v1762
      %v1764 = vlaneseq
      %v1765 = vshrl.u32 %v1764, 7
      %v1766 = vsub.s32 %v1763, %v1765
      %v1767 = vrot.slane %v1753, %v1766
      %v1768 = vcombine.high %v1760, %v1760
      %v1769 = vcombine.high %v1767, %v1767
      %v1770 = vcombine.high %v1580, %v1580
      %v1772 = vunpack.c.l.s4 1983009808
      %v1773 = vunpack.c.0.s8 %v1772
      %v1774 = vlaneseq
      %v1775 = vshrl.u32 %v1774, 7
      %v1776 = vsub.s32 %v1773, %v1775
      %v1777 = vrot.slane %v1580, %v1776
      %v1779 = vunpack.c.l.s4 1983009808
      %v1780 = vunpack.c.0.s8 %v1779
      %v1781 = vlaneseq
      %v1782 = vshrl.u32 %v1781, 7
      %v1783 = vsub.s32 %v1780, %v1782
      %v1784 = vrot.slane %v1770, %v1783
      %v1785 = vcombine.high %v1777, %v1777
      %v1786 = vcombine.high %v1784, %v1784
      %v1788 = vunpack.c.l.s4 1983009808
      %v1789 = vunpack.c.0.s8 %v1788
      %v1790 = vlaneseq
      %v1791 = vshrl.u32 %v1790, 7
      %v1792 = vsub.s32 %v1789, %v1791
      %v1793 = vrot.slane %v1581, %v1792
      %v1794 = vcombine.high %v1582, %v1582
      %v1796 = vunpack.c.l.s4 1983009808
      %v1797 = vunpack.c.0.s8 %v1796
      %v1798 = vlaneseq
      %v1799 = vshrl.u32 %v1798, 7
      %v1800 = vsub.s32 %v1797, %v1799
      %v1801 = vrot.slane %v1582, %v1800
      %v1803 = vunpack.c.l.s4 1983009808
      %v1804 = vunpack.c.0.s8 %v1803
      %v1805 = vlaneseq
      %v1806 = vshrl.u32 %v1805, 7
      %v1807 = vsub.s32 %v1804, %v1806
      %v1808 = vrot.slane %v1794, %v1807
      %v1809 = vcombine.high %v1801, %v1801
      %v1810 = vcombine.high %v1808, %v1808
      %v1811 = vcombine.high %v1583, %v1583
      %v1813 = vunpack.c.l.s4 1983009808
      %v1814 = vunpack.c.0.s8 %v1813
      %v1815 = vlaneseq
      %v1816 = vshrl.u32 %v1815, 7
      %v1817 = vsub.s32 %v1814, %v1816
      %v1818 = vrot.slane %v1583, %v1817
      %v1820 = vunpack.c.l.s4 1983009808
      %v1821 = vunpack.c.0.s8 %v1820
      %v1822 = vlaneseq
      %v1823 = vshrl.u32 %v1822, 7
      %v1824 = vsub.s32 %v1821, %v1823
      %v1825 = vrot.slane %v1811, %v1824
      %v1826 = vcombine.high %v1818, %v1818
      %v1827 = vcombine.high %v1825, %v1825
      %v1829 = vunpack.c.l.s4 1983009808
      %v1830 = vunpack.c.0.s8 %v1829
      %v1831 = vlaneseq
      %v1832 = vshrl.u32 %v1831, 7
      %v1833 = vsub.s32 %v1830, %v1832
      %v1834 = vrot.slane %v1584, %v1833
      %v1835 = vcombine.high %v1585, %v1585
      %v1837 = vunpack.c.l.s4 1983009808
      %v1838 = vunpack.c.0.s8 %v1837
      %v1839 = vlaneseq
      %v1840 = vshrl.u32 %v1839, 7
      %v1841 = vsub.s32 %v1838, %v1840
      %v1842 = vrot.slane %v1585, %v1841
      %v1844 = vunpack.c.l.s4 1983009808
      %v1845 = vunpack.c.0.s8 %v1844
      %v1846 = vlaneseq
      %v1847 = vshrl.u32 %v1846, 7
      %v1848 = vsub.s32 %v1845, %v1847
      %v1849 = vrot.slane %v1835, %v1848
      %v1850 = vcombine.high %v1842, %v1842
      %v1851 = vcombine.high %v1849, %v1849
      %v1852 = vcombine.high %v1586, %v1586
      %v1854 = vunpack.c.l.s4 1983009808
      %v1855 = vunpack.c.0.s8 %v1854
      %v1856 = vlaneseq
      %v1857 = vshrl.u32 %v1856, 7
      %v1858 = vsub.s32 %v1855, %v1857
      %v1859 = vrot.slane %v1586, %v1858
      %v1861 = vunpack.c.l.s4 1983009808
      %v1862 = vunpack.c.0.s8 %v1861
      %v1863 = vlaneseq
      %v1864 = vshrl.u32 %v1863, 7
      %v1865 = vsub.s32 %v1862, %v1864
      %v1866 = vrot.slane %v1852, %v1865
      %v1867 = vcombine.high %v1859, %v1859
      %v1868 = vcombine.high %v1866, %v1866
      %v1870 = vunpack.c.l.s4 1983009808
      %v1871 = vunpack.c.0.s8 %v1870
      %v1872 = vlaneseq
      %v1873 = vshrl.u32 %v1872, 7
      %v1874 = vsub.s32 %v1871, %v1873
      %v1875 = vrot.slane %v1587, %v1874
      %v1876 = vcombine.high %v1588, %v1588
      %v1878 = vunpack.c.l.s4 1983009808
      %v1879 = vunpack.c.0.s8 %v1878
      %v1880 = vlaneseq
      %v1881 = vshrl.u32 %v1880, 7
      %v1882 = vsub.s32 %v1879, %v1881
      %v1883 = vrot.slane %v1588, %v1882
      %v1885 = vunpack.c.l.s4 1983009808
      %v1886 = vunpack.c.0.s8 %v1885
      %v1887 = vlaneseq
      %v1888 = vshrl.u32 %v1887, 7
      %v1889 = vsub.s32 %v1886, %v1888
      %v1890 = vrot.slane %v1876, %v1889
      %v1891 = vcombine.high %v1883, %v1883
      %v1892 = vcombine.high %v1890, %v1890
      %v1893 = vcombine.high %v1589, %v1589
      %v1895 = vunpack.c.l.s4 1983009808
      %v1896 = vunpack.c.0.s8 %v1895
      %v1897 = vlaneseq
      %v1898 = vshrl.u32 %v1897, 7
      %v1899 = vsub.s32 %v1896, %v1898
      %v1900 = vrot.slane %v1589, %v1899
      %v1902 = vunpack.c.l.s4 1983009808
      %v1903 = vunpack.c.0.s8 %v1902
      %v1904 = vlaneseq
      %v1905 = vshrl.u32 %v1904, 7
      %v1906 = vsub.s32 %v1903, %v1905
      %v1907 = vrot.slane %v1893, %v1906
      %v1908 = vcombine.high %v1900, %v1900
      %v1909 = vcombine.high %v1907, %v1907
      %v1911 = vunpack.c.l.s4 1983009808
      %v1912 = vunpack.c.0.s8 %v1911
      %v1913 = vlaneseq
      %v1914 = vshrl.u32 %v1913, 7
      %v1915 = vsub.s32 %v1912, %v1914
      %v1916 = vrot.slane %v1590, %v1915
      %v1917 = vcombine.high %v1591, %v1591
      %v1919 = vunpack.c.l.s4 1983009808
      %v1920 = vunpack.c.0.s8 %v1919
      %v1921 = vlaneseq
      %v1922 = vshrl.u32 %v1921, 7
      %v1923 = vsub.s32 %v1920, %v1922
      %v1924 = vrot.slane %v1591, %v1923
      %v1926 = vunpack.c.l.s4 1983009808
      %v1927 = vunpack.c.0.s8 %v1926
      %v1928 = vlaneseq
      %v1929 = vshrl.u32 %v1928, 7
      %v1930 = vsub.s32 %v1927, %v1929
      %v1931 = vrot.slane %v1917, %v1930
      %v1932 = vcombine.high %v1924, %v1924
      %v1933 = vcombine.high %v1931, %v1931
      %v1934 = vcombine.high %v1592, %v1592
      %v1936 = vunpack.c.l.s4 1983009808
      %v1937 = vunpack.c.0.s8 %v1936
      %v1938 = vlaneseq
      %v1939 = vshrl.u32 %v1938, 7
      %v1940 = vsub.s32 %v1937, %v1939
      %v1941 = vrot.slane %v1592, %v1940
      %v1943 = vunpack.c.l.s4 1983009808
      %v1944 = vunpack.c.0.s8 %v1943
      %v1945 = vlaneseq
      %v1946 = vshrl.u32 %v1945, 7
      %v1947 = vsub.s32 %v1944, %v1946
      %v1948 = vrot.slane %v1934, %v1947
      %v1949 = vcombine.high %v1941, %v1941
      %v1950 = vcombine.high %v1948, %v1948
      %v1952 = vunpack.c.l.s4 1983009808
      %v1953 = vunpack.c.0.s8 %v1952
      %v1954 = vlaneseq
      %v1955 = vshrl.u32 %v1954, 7
      %v1956 = vsub.s32 %v1953, %v1955
      %v1957 = vrot.slane %v1593, %v1956
      %v1958 = vcombine.high %v1594, %v1594
      %v1960 = vunpack.c.l.s4 1983009808
      %v1961 = vunpack.c.0.s8 %v1960
      %v1962 = vlaneseq
      %v1963 = vshrl.u32 %v1962, 7
      %v1964 = vsub.s32 %v1961, %v1963
      %v1965 = vrot.slane %v1594, %v1964
      %v1967 = vunpack.c.l.s4 1983009808
      %v1968 = vunpack.c.0.s8 %v1967
      %v1969 = vlaneseq
      %v1970 = vshrl.u32 %v1969, 7
      %v1971 = vsub.s32 %v1968, %v1970
      %v1972 = vrot.slane %v1958, %v1971
      %v1973 = vcombine.high %v1965, %v1965
      %v1974 = vcombine.high %v1972, %v1972
      %v1975 = vcombine.high %v1595, %v1595
      %v1977 = vunpack.c.l.s4 1983009808
      %v1978 = vunpack.c.0.s8 %v1977
      %v1979 = vlaneseq
      %v1980 = vshrl.u32 %v1979, 7
      %v1981 = vsub.s32 %v1978, %v1980
      %v1982 = vrot.slane %v1595, %v1981
      %v1984 = vunpack.c.l.s4 1983009808
      %v1985 = vunpack.c.0.s8 %v1984
      %v1986 = vlaneseq
      %v1987 = vshrl.u32 %v1986, 7
      %v1988 = vsub.s32 %v1985, %v1987
      %v1989 = vrot.slane %v1975, %v1988
      %v1990 = vcombine.high %v1982, %v1982
      %v1991 = vcombine.high %v1989, %v1989
      %v1993 = vunpack.c.l.s4 1983009808
      %v1994 = vunpack.c.0.s8 %v1993
      %v1995 = vlaneseq
      %v1996 = vshrl.u32 %v1995, 7
      %v1997 = vsub.s32 %v1994, %v1996
      %v1998 = vrot.slane %v1596, %v1997
      %v1999 = vcombine.high %v1597, %v1597
      %v2001 = vunpack.c.l.s4 1983009808
      %v2002 = vunpack.c.0.s8 %v2001
      %v2003 = vlaneseq
      %v2004 = vshrl.u32 %v2003, 7
      %v2005 = vsub.s32 %v2002, %v2004
      %v2006 = vrot.slane %v1597, %v2005
      %v2008 = vunpack.c.l.s4 1983009808
      %v2009 = vunpack.c.0.s8 %v2008
      %v2010 = vlaneseq
      %v2011 = vshrl.u32 %v2010, 7
      %v2012 = vsub.s32 %v2009, %v2011
      %v2013 = vrot.slane %v1999, %v2012
      %v2014 = vcombine.high %v2006, %v2006
      %v2015 = vcombine.high %v2013, %v2013
      %v2016 = vcombine.high %v1598, %v1598
      %v2018 = vunpack.c.l.s4 1983009808
      %v2019 = vunpack.c.0.s8 %v2018
      %v2020 = vlaneseq
      %v2021 = vshrl.u32 %v2020, 7
      %v2022 = vsub.s32 %v2019, %v2021
      %v2023 = vrot.slane %v1598, %v2022
      %v2025 = vunpack.c.l.s4 1983009808
      %v2026 = vunpack.c.0.s8 %v2025
      %v2027 = vlaneseq
      %v2028 = vshrl.u32 %v2027, 7
      %v2029 = vsub.s32 %v2026, %v2028
      %v2030 = vrot.slane %v2016, %v2029
      %v2031 = vcombine.high %v2023, %v2023
      %v2032 = vcombine.high %v2030, %v2030
      %v2034 = vunpack.c.l.s4 1983009808
      %v2035 = vunpack.c.0.s8 %v2034
      %v2036 = vlaneseq
      %v2037 = vshrl.u32 %v2036, 7
      %v2038 = vsub.s32 %v2035, %v2037
      %v2039 = vrot.slane %v1599, %v2038
      %v2040 = vld [vmem:[%s1] sm:$0xff]
      %v2041 = vld [vmem:[%s1 + $0x8] sm:$0xff]
      %v2042 = vld [vmem:[%s1 + $0x10] sm:$0xff]
      %v2043 = vld [vmem:[%s1 + $0x18] sm:$0xff]
      %v2044 = vld [vmem:[%s1 + $0x20] sm:$0xf]
      %v2045 = vcombine.low %v1637, %v1645
      %v2046 = vcombine.low %v1644, %v1646
      %v2048 = vunpack.c.l.s4 1983009808
      %v2049 = vunpack.c.0.s8 %v2048
      %v2050 = vlaneseq
      %v2051 = vshrl.u32 %v2050, 7
      %v2052 = vsub.s32 %v2049, %v2051
      %v2053 = vrot.slane %v2045, %v2052
      %v2055 = vunpack.c.l.s4 1983009808
      %v2056 = vunpack.c.0.s8 %v2055
      %v2057 = vlaneseq
      %v2058 = vshrl.u32 %v2057, 7
      %v2059 = vsub.s32 %v2056, %v2058
      %v2060 = vrot.slane %v2046, %v2059
      %v2061 = vcombine.low %v2053, %v2060
      %v2062 = vcombine.low %v1654, %v1662
      %v2063 = vcombine.low %v1661, %v1663
      %v2065 = vunpack.c.l.s4 1983009808
      %v2066 = vunpack.c.0.s8 %v2065
      %v2067 = vlaneseq
      %v2068 = vshrl.u32 %v2067, 7
      %v2069 = vsub.s32 %v2066, %v2068
      %v2070 = vrot.slane %v2062, %v2069
      %v2072 = vunpack.c.l.s4 1983009808
      %v2073 = vunpack.c.0.s8 %v2072
      %v2074 = vlaneseq
      %v2075 = vshrl.u32 %v2074, 7
      %v2076 = vsub.s32 %v2073, %v2075
      %v2077 = vrot.slane %v2063, %v2076
      %v2078 = vcombine.low %v2070, %v2077
      %v2079 = vcombine.low %v1670, %v1678
      %v2080 = vcombine.low %v1686, %v1685
      %v2082 = vunpack.c.l.s4 1983009808
      %v2083 = vunpack.c.0.s8 %v2082
      %v2084 = vlaneseq
      %v2085 = vshrl.u32 %v2084, 7
      %v2086 = vsub.s32 %v2083, %v2085
      %v2087 = vrot.slane %v2079, %v2086
      %v2089 = vunpack.c.l.s4 1983009808
      %v2090 = vunpack.c.0.s8 %v2089
      %v2091 = vlaneseq
      %v2092 = vshrl.u32 %v2091, 7
      %v2093 = vsub.s32 %v2090, %v2092
      %v2094 = vrot.slane %v2080, %v2093
      %v2095 = vcombine.low %v2087, %v2094
      %v2096 = vcombine.low %v1687, %v1695
      %v2097 = vcombine.low %v1703, %v1702
      %v2099 = vunpack.c.l.s4 1983009808
      %v2100 = vunpack.c.0.s8 %v2099
      %v2101 = vlaneseq
      %v2102 = vshrl.u32 %v2101, 7
      %v2103 = vsub.s32 %v2100, %v2102
      %v2104 = vrot.slane %v2096, %v2103
      %v2106 = vunpack.c.l.s4 1983009808
      %v2107 = vunpack.c.0.s8 %v2106
      %v2108 = vlaneseq
      %v2109 = vshrl.u32 %v2108, 7
      %v2110 = vsub.s32 %v2107, %v2109
      %v2111 = vrot.slane %v2097, %v2110
      %v2112 = vcombine.low %v2104, %v2111
      %v2113 = vcombine.low %v1704, %v1711
      %v2114 = vcombine.low %v1719, %v1727
      %v2116 = vunpack.c.l.s4 1983009808
      %v2117 = vunpack.c.0.s8 %v2116
      %v2118 = vlaneseq
      %v2119 = vshrl.u32 %v2118, 7
      %v2120 = vsub.s32 %v2117, %v2119
      %v2121 = vrot.slane %v2113, %v2120
      %v2123 = vunpack.c.l.s4 1983009808
      %v2124 = vunpack.c.0.s8 %v2123
      %v2125 = vlaneseq
      %v2126 = vshrl.u32 %v2125, 7
      %v2127 = vsub.s32 %v2124, %v2126
      %v2128 = vrot.slane %v2114, %v2127
      %v2129 = vcombine.low %v2121, %v2128
      %v2130 = vcombine.low %v1726, %v1728
      %v2131 = vcombine.low %v1736, %v1744
      %v2133 = vunpack.c.l.s4 1983009808
      %v2134 = vunpack.c.0.s8 %v2133
      %v2135 = vlaneseq
      %v2136 = vshrl.u32 %v2135, 7
      %v2137 = vsub.s32 %v2134, %v2136
      %v2138 = vrot.slane %v2130, %v2137
      %v2140 = vunpack.c.l.s4 1983009808
      %v2141 = vunpack.c.0.s8 %v2140
      %v2142 = vlaneseq
      %v2143 = vshrl.u32 %v2142, 7
      %v2144 = vsub.s32 %v2141, %v2143
      %v2145 = vrot.slane %v2131, %v2144
      %v2146 = vcombine.low %v2138, %v2145
      %v2147 = vcombine.low %v1743, %v1745
      %v2148 = vcombine.low %v1752, %v1760
      %v2150 = vunpack.c.l.s4 1983009808
      %v2151 = vunpack.c.0.s8 %v2150
      %v2152 = vlaneseq
      %v2153 = vshrl.u32 %v2152, 7
      %v2154 = vsub.s32 %v2151, %v2153
      %v2155 = vrot.slane %v2147, %v2154
      %v2157 = vunpack.c.l.s4 1983009808
      %v2158 = vunpack.c.0.s8 %v2157
      %v2159 = vlaneseq
      %v2160 = vshrl.u32 %v2159, 7
      %v2161 = vsub.s32 %v2158, %v2160
      %v2162 = vrot.slane %v2148, %v2161
      %v2163 = vcombine.low %v2155, %v2162
      %v2164 = vcombine.low %v1768, %v1767
      %v2165 = vcombine.low %v1769, %v1777
      %v2167 = vunpack.c.l.s4 1983009808
      %v2168 = vunpack.c.0.s8 %v2167
      %v2169 = vlaneseq
      %v2170 = vshrl.u32 %v2169, 7
      %v2171 = vsub.s32 %v2168, %v2170
      %v2172 = vrot.slane %v2164, %v2171
      %v2174 = vunpack.c.l.s4 1983009808
      %v2175 = vunpack.c.0.s8 %v2174
      %v2176 = vlaneseq
      %v2177 = vshrl.u32 %v2176, 7
      %v2178 = vsub.s32 %v2175, %v2177
      %v2179 = vrot.slane %v2165, %v2178
      %v2180 = vcombine.low %v2172, %v2179
      %v2181 = vcombine.low %v1785, %v1784
      %v2182 = vcombine.low %v1786, %v1793
      %v2184 = vunpack.c.l.s4 1983009808
      %v2185 = vunpack.c.0.s8 %v2184
      %v2186 = vlaneseq
      %v2187 = vshrl.u32 %v2186, 7
      %v2188 = vsub.s32 %v2185, %v2187
      %v2189 = vrot.slane %v2181, %v2188
      %v2191 = vunpack.c.l.s4 1983009808
      %v2192 = vunpack.c.0.s8 %v2191
      %v2193 = vlaneseq
      %v2194 = vshrl.u32 %v2193, 7
      %v2195 = vsub.s32 %v2192, %v2194
      %v2196 = vrot.slane %v2182, %v2195
      %v2197 = vcombine.low %v2189, %v2196
      %v2198 = vcombine.low %v1801, %v1809
      %v2199 = vcombine.low %v1808, %v1810
      %v2201 = vunpack.c.l.s4 1983009808
      %v2202 = vunpack.c.0.s8 %v2201
      %v2203 = vlaneseq
      %v2204 = vshrl.u32 %v2203, 7
      %v2205 = vsub.s32 %v2202, %v2204
      %v2206 = vrot.slane %v2198, %v2205
      %v2208 = vunpack.c.l.s4 1983009808
      %v2209 = vunpack.c.0.s8 %v2208
      %v2210 = vlaneseq
      %v2211 = vshrl.u32 %v2210, 7
      %v2212 = vsub.s32 %v2209, %v2211
      %v2213 = vrot.slane %v2199, %v2212
      %v2214 = vcombine.low %v2206, %v2213
      %v2215 = vcombine.low %v1818, %v1826
      %v2216 = vcombine.low %v1825, %v1827
      %v2218 = vunpack.c.l.s4 1983009808
      %v2219 = vunpack.c.0.s8 %v2218
      %v2220 = vlaneseq
      %v2221 = vshrl.u32 %v2220, 7
      %v2222 = vsub.s32 %v2219, %v2221
      %v2223 = vrot.slane %v2215, %v2222
      %v2225 = vunpack.c.l.s4 1983009808
      %v2226 = vunpack.c.0.s8 %v2225
      %v2227 = vlaneseq
      %v2228 = vshrl.u32 %v2227, 7
      %v2229 = vsub.s32 %v2226, %v2228
      %v2230 = vrot.slane %v2216, %v2229
      %v2231 = vcombine.low %v2223, %v2230
      %v2232 = vcombine.low %v1834, %v1842
      %v2233 = vcombine.low %v1850, %v1849
      %v2235 = vunpack.c.l.s4 1983009808
      %v2236 = vunpack.c.0.s8 %v2235
      %v2237 = vlaneseq
      %v2238 = vshrl.u32 %v2237, 7
      %v2239 = vsub.s32 %v2236, %v2238
      %v2240 = vrot.slane %v2232, %v2239
      %v2242 = vunpack.c.l.s4 1983009808
      %v2243 = vunpack.c.0.s8 %v2242
      %v2244 = vlaneseq
      %v2245 = vshrl.u32 %v2244, 7
      %v2246 = vsub.s32 %v2243, %v2245
      %v2247 = vrot.slane %v2233, %v2246
      %v2248 = vcombine.low %v2240, %v2247
      %v2249 = vcombine.low %v1851, %v1859
      %v2250 = vcombine.low %v1867, %v1866
      %v2252 = vunpack.c.l.s4 1983009808
      %v2253 = vunpack.c.0.s8 %v2252
      %v2254 = vlaneseq
      %v2255 = vshrl.u32 %v2254, 7
      %v2256 = vsub.s32 %v2253, %v2255
      %v2257 = vrot.slane %v2249, %v2256
      %v2259 = vunpack.c.l.s4 1983009808
      %v2260 = vunpack.c.0.s8 %v2259
      %v2261 = vlaneseq
      %v2262 = vshrl.u32 %v2261, 7
      %v2263 = vsub.s32 %v2260, %v2262
      %v2264 = vrot.slane %v2250, %v2263
      %v2265 = vcombine.low %v2257, %v2264
      %v2266 = vcombine.low %v1868, %v1875
      %v2267 = vcombine.low %v1883, %v1891
      %v2269 = vunpack.c.l.s4 1983009808
      %v2270 = vunpack.c.0.s8 %v2269
      %v2271 = vlaneseq
      %v2272 = vshrl.u32 %v2271, 7
      %v2273 = vsub.s32 %v2270, %v2272
      %v2274 = vrot.slane %v2266, %v2273
      %v2276 = vunpack.c.l.s4 1983009808
      %v2277 = vunpack.c.0.s8 %v2276
      %v2278 = vlaneseq
      %v2279 = vshrl.u32 %v2278, 7
      %v2280 = vsub.s32 %v2277, %v2279
      %v2281 = vrot.slane %v2267, %v2280
      %v2282 = vcombine.low %v2274, %v2281
      %v2283 = vcombine.low %v1890, %v1892
      %v2284 = vcombine.low %v1900, %v1908
      %v2286 = vunpack.c.l.s4 1983009808
      %v2287 = vunpack.c.0.s8 %v2286
      %v2288 = vlaneseq
      %v2289 = vshrl.u32 %v2288, 7
      %v2290 = vsub.s32 %v2287, %v2289
      %v2291 = vrot.slane %v2283, %v2290
      %v2293 = vunpack.c.l.s4 1983009808
      %v2294 = vunpack.c.0.s8 %v2293
      %v2295 = vlaneseq
      %v2296 = vshrl.u32 %v2295, 7
      %v2297 = vsub.s32 %v2294, %v2296
      %v2298 = vrot.slane %v2284, %v2297
      %v2299 = vcombine.low %v2291, %v2298
      %v2300 = vcombine.low %v1907, %v1909
      %v2301 = vcombine.low %v1916, %v1924
      %v2303 = vunpack.c.l.s4 1983009808
      %v2304 = vunpack.c.0.s8 %v2303
      %v2305 = vlaneseq
      %v2306 = vshrl.u32 %v2305, 7
      %v2307 = vsub.s32 %v2304, %v2306
      %v2308 = vrot.slane %v2300, %v2307
      %v2310 = vunpack.c.l.s4 1983009808
      %v2311 = vunpack.c.0.s8 %v2310
      %v2312 = vlaneseq
      %v2313 = vshrl.u32 %v2312, 7
      %v2314 = vsub.s32 %v2311, %v2313
      %v2315 = vrot.slane %v2301, %v2314
      %v2316 = vcombine.low %v2308, %v2315
      %v2317 = vcombine.low %v1932, %v1931
      %v2318 = vcombine.low %v1933, %v1941
      %v2320 = vunpack.c.l.s4 1983009808
      %v2321 = vunpack.c.0.s8 %v2320
      %v2322 = vlaneseq
      %v2323 = vshrl.u32 %v2322, 7
      %v2324 = vsub.s32 %v2321, %v2323
      %v2325 = vrot.slane %v2317, %v2324
      %v2327 = vunpack.c.l.s4 1983009808
      %v2328 = vunpack.c.0.s8 %v2327
      %v2329 = vlaneseq
      %v2330 = vshrl.u32 %v2329, 7
      %v2331 = vsub.s32 %v2328, %v2330
      %v2332 = vrot.slane %v2318, %v2331
      %v2333 = vcombine.low %v2325, %v2332
      %v2334 = vcombine.low %v1949, %v1948
      %v2335 = vcombine.low %v1950, %v1957
      %v2337 = vunpack.c.l.s4 1983009808
      %v2338 = vunpack.c.0.s8 %v2337
      %v2339 = vlaneseq
      %v2340 = vshrl.u32 %v2339, 7
      %v2341 = vsub.s32 %v2338, %v2340
      %v2342 = vrot.slane %v2334, %v2341
      %v2344 = vunpack.c.l.s4 1983009808
      %v2345 = vunpack.c.0.s8 %v2344
      %v2346 = vlaneseq
      %v2347 = vshrl.u32 %v2346, 7
      %v2348 = vsub.s32 %v2345, %v2347
      %v2349 = vrot.slane %v2335, %v2348
      %v2350 = vcombine.low %v2342, %v2349
      %v2351 = vcombine.low %v1965, %v1973
      %v2352 = vcombine.low %v1972, %v1974
      %v2354 = vunpack.c.l.s4 1983009808
      %v2355 = vunpack.c.0.s8 %v2354
      %v2356 = vlaneseq
      %v2357 = vshrl.u32 %v2356, 7
      %v2358 = vsub.s32 %v2355, %v2357
      %v2359 = vrot.slane %v2351, %v2358
      %v2361 = vunpack.c.l.s4 1983009808
      %v2362 = vunpack.c.0.s8 %v2361
      %v2363 = vlaneseq
      %v2364 = vshrl.u32 %v2363, 7
      %v2365 = vsub.s32 %v2362, %v2364
      %v2366 = vrot.slane %v2352, %v2365
      %v2367 = vcombine.low %v2359, %v2366
      %v2368 = vcombine.low %v1982, %v1990
      %v2369 = vcombine.low %v1989, %v1991
      %v2371 = vunpack.c.l.s4 1983009808
      %v2372 = vunpack.c.0.s8 %v2371
      %v2373 = vlaneseq
      %v2374 = vshrl.u32 %v2373, 7
      %v2375 = vsub.s32 %v2372, %v2374
      %v2376 = vrot.slane %v2368, %v2375
      %v2378 = vunpack.c.l.s4 1983009808
      %v2379 = vunpack.c.0.s8 %v2378
      %v2380 = vlaneseq
      %v2381 = vshrl.u32 %v2380, 7
      %v2382 = vsub.s32 %v2379, %v2381
      %v2383 = vrot.slane %v2369, %v2382
      %v2384 = vcombine.low %v2376, %v2383
      %v2385 = vcombine.low %v1998, %v2006
      %v2386 = vcombine.low %v2014, %v2013
      %v2388 = vunpack.c.l.s4 1983009808
      %v2389 = vunpack.c.0.s8 %v2388
      %v2390 = vlaneseq
      %v2391 = vshrl.u32 %v2390, 7
      %v2392 = vsub.s32 %v2389, %v2391
      %v2393 = vrot.slane %v2385, %v2392
      %v2395 = vunpack.c.l.s4 1983009808
      %v2396 = vunpack.c.0.s8 %v2395
      %v2397 = vlaneseq
      %v2398 = vshrl.u32 %v2397, 7
      %v2399 = vsub.s32 %v2396, %v2398
      %v2400 = vrot.slane %v2386, %v2399
      %v2401 = vcombine.low %v2393, %v2400
      %v2402 = vcombine.low %v2015, %v2023
      %v2403 = vcombine.low %v2031, %v2030
      %v2405 = vunpack.c.l.s4 1983009808
      %v2406 = vunpack.c.0.s8 %v2405
      %v2407 = vlaneseq
      %v2408 = vshrl.u32 %v2407, 7
      %v2409 = vsub.s32 %v2406, %v2408
      %v2410 = vrot.slane %v2402, %v2409
      %v2412 = vunpack.c.l.s4 1983009808
      %v2413 = vunpack.c.0.s8 %v2412
      %v2414 = vlaneseq
      %v2415 = vshrl.u32 %v2414, 7
      %v2416 = vsub.s32 %v2413, %v2415
      %v2417 = vrot.slane %v2403, %v2416
      %v2418 = vcombine.low %v2410, %v2417
      %v2419 = vcombine.low %v2032, %v2039
      %v2421 = vunpack.c.l.s4 1983009808
      %v2422 = vunpack.c.0.s8 %v2421
      %v2423 = vlaneseq
      %v2424 = vshrl.u32 %v2423, 7
      %v2425 = vsub.s32 %v2422, %v2424
      %v2426 = vrot.slane %v2419, %v2425
      %vm2427 = vcmask 293888
      %v2428 = vsel %vm2427, %v2061, 0
      %v2430 = vsel %vm2427, %v2078, 0
      %v2432 = vsel %vm2427, %v2095, 0
      %v2434 = vsel %vm2427, %v2112, 0
      %v2436 = vsel %vm2427, %v2129, 0
      %v2438 = vsel %vm2427, %v2146, 0
      %v2440 = vsel %vm2427, %v2163, 0
      %v2442 = vsel %vm2427, %v2180, 0
      %v2444 = vsel %vm2427, %v2197, 0
      %v2446 = vsel %vm2427, %v2214, 0
      %v2448 = vsel %vm2427, %v2231, 0
      %v2450 = vsel %vm2427, %v2248, 0
      %v2452 = vsel %vm2427, %v2265, 0
      %v2454 = vsel %vm2427, %v2282, 0
      %v2456 = vsel %vm2427, %v2299, 0
      %v2458 = vsel %vm2427, %v2316, 0
      %v2460 = vsel %vm2427, %v2333, 0
      %v2462 = vsel %vm2427, %v2350, 0
      %v2464 = vsel %vm2427, %v2367, 0
      %v2466 = vsel %vm2427, %v2384, 0
      %v2468 = vsel %vm2427, %v2401, 0
      %v2470 = vsel %vm2427, %v2418, 0
      %v2472 = vsel %vm2427, %v2426, 0
      %vm2474 = vcmask 1043456
      %v2476 = vsel %vm2474, %v2044, 0
      %2478 = vmatprep.subr.mxu0 0.0
      %2479 = vmatpush1.msra.mxu0 %v2040
      %2480 = vmatprep.subr.mxu0 0.0
      %2481 = vmatpush1.msra.mxu0 %v2041
      %2482 = vmatprep.subr.mxu0 0.0
      %2483 = vmatpush1.msra.mxu0 %v2042
      %2484 = vmatprep.subr.mxu0 0.0
      %2485 = vmatpush1.msra.mxu0 %v2043
      %2486 = vmatprep.subr.mxu0 0.0
      %2487 = vmatpush1.msra.mxu0 %v2476
      %2488 = vmatprep.subr.mxu0 0.0
      %2489 = vmatpush1.msra.mxu0 0.0
      %2490 = vmatprep.subr.mxu0 0.0
      %2491 = vmatpush1.msra.mxu0 0.0
      %2492 = vmatprep.subr.mxu0 0.0
      %2493 = vmatpush1.msra.mxu0 0.0
      %2494 = vmatprep.subr.mxu0 0.0
      %2495 = vmatpush1.msra.mxu0 0.0
      %2496 = vmatprep.subr.mxu0 0.0
      %2497 = vmatpush1.msra.mxu0 0.0
      %2498 = vmatprep.subr.mxu0 0.0
      %2499 = vmatpush1.msra.mxu0 0.0
      %2500 = vmatprep.subr.mxu0 0.0
      %2501 = vmatpush1.msra.mxu0 0.0
      %2502 = vmatprep.subr.mxu0 0.0
      %2503 = vmatpush1.msra.mxu0 0.0
      %2504 = vmatprep.subr.mxu0 0.0
      %2505 = vmatpush1.msra.mxu0 0.0
      %2506 = vmatprep.subr.mxu0 0.0
      %2507 = vmatpush1.msra.mxu0 0.0
      %2508 = vmatprep.subr.mxu0 0.0
      %2509 = vmatpush1.msra.mxu0 0.0
      %2510 = vmatprep.subr.mxu0 0.0
      %2511 = vmatpush1.msra.mxu0 0.0
      %2512 = vmatprep.subr.mxu0 0.0
      %2513 = vmatpush1.msra.mxu0 0.0
      %2514 = vmatprep.subr.mxu0 0.0
      %2515 = vmatpush1.msra.mxu0 0.0
      %2516 = vmatprep.subr.mxu0 0.0
      %2517 = vmatpush1.msra.mxu0 0.0
      %2518 = vmatprep.subr.mxu0 0.0
      %2519 = vmatpush1.msra.mxu0 0.0
      %2520 = vmatprep.subr.mxu0 0.0
      %2521 = vmatpush1.msra.mxu0 0.0
      %2522 = vmatprep.subr.mxu0 0.0
      %2523 = vmatpush1.msra.mxu0 0.0
      %2524 = vmatprep.subr.mxu0 0.0
      %2525 = vmatpush1.msra.mxu0 0.0
      %2526 = vmatprep.subr.mxu0 0.0
      %2527 = vmatpush1.msra.mxu0 0.0
      %2528 = vmatprep.subr.mxu0 0.0
      %2529 = vmatpush1.msra.mxu0 0.0
      %2530 = vmatprep.subr.mxu0 0.0
      %2531 = vmatpush1.msra.mxu0 0.0
      %2532 = vmatprep.subr.mxu0 0.0
      %2533 = vmatpush1.msra.mxu0 0.0
      %2534 = vmatprep.subr.mxu0 0.0
      %2535 = vmatpush1.msra.mxu0 0.0
      %2536 = vmatprep.subr.mxu0 0.0
      %2537 = vmatpush1.msra.mxu0 0.0
      %2538 = vmatprep.subr.mxu0 0.0
      %2539 = vmatpush1.msra.mxu0 0.0
      %2540 = vmatprep.subr.mxu0 0.0
      %2541 = vmatpush1.msra.mxu0 0.0
      %2542 = vmatprep.mubr.f32.mxu0 0.0
      %2543 = vmatmul.mubr.f32.gmra.mrb[0].mxu0 %v2428
      %v2544 = vpop.f32.mrb[0].mxu0
      %v2545 = vadd.f32 0.0, %v2544
      %v2546 = vpop.f32.mrb[0].mxu0
      %2547 = vmatprep.mubr.f32.mxu0 0.0
      %2548 = vmatmul.mubr.f32.gmra.mrb[0].mxu0 %v2430
      %v2549 = vpop.f32.mrb[0].mxu0
      %v2550 = vadd.f32 0.0, %v2549
      %v2551 = vpop.f32.mrb[0].mxu0
      %2552 = vmatprep.mubr.f32.mxu0 0.0
      %2553 = vmatmul.mubr.f32.gmra.mrb[0].mxu0 %v2432
      %v2554 = vpop.f32.mrb[0].mxu0
      %v2555 = vadd.f32 0.0, %v2554
      %v2556 = vpop.f32.mrb[0].mxu0
      %2557 = vmatprep.mubr.f32.mxu0 0.0
      %2558 = vmatmul.mubr.f32.gmra.mrb[0].mxu0 %v2434
      %v2559 = vpop.f32.mrb[0].mxu0
      %v2560 = vadd.f32 0.0, %v2559
      %v2561 = vpop.f32.mrb[0].mxu0
      %2562 = vmatprep.mubr.f32.mxu0 0.0
      %2563 = vmatmul.mubr.f32.gmra.mrb[0].mxu0 %v2436
      %v2564 = vpop.f32.mrb[0].mxu0
      %v2565 = vadd.f32 0.0, %v2564
      %v2566 = vpop.f32.mrb[0].mxu0
      %2567 = vmatprep.mubr.f32.mxu0 0.0
      %2568 = vmatmul.mubr.f32.gmra.mrb[0].mxu0 %v2438
      %v2569 = vpop.f32.mrb[0].mxu0
      %v2570 = vadd.f32 0.0, %v2569
      %v2571 = vpop.f32.mrb[0].mxu0
      %2572 = vmatprep.mubr.f32.mxu0 0.0
      %2573 = vmatmul.mubr.f32.gmra.mrb[0].mxu0 %v2440
      %v2574 = vpop.f32.mrb[0].mxu0
      %v2575 = vadd.f32 0.0, %v2574
      %v2576 = vpop.f32.mrb[0].mxu0
      %2577 = vmatprep.mubr.f32.mxu0 0.0
      %2578 = vmatmul.mubr.f32.gmra.mrb[0].mxu0 %v2442
      %v2579 = vpop.f32.mrb[0].mxu0
      %v2580 = vadd.f32 0.0, %v2579
      %v2581 = vpop.f32.mrb[0].mxu0
      %2582 = vmatprep.mubr.f32.mxu0 0.0
      %2583 = vmatmul.mubr.f32.gmra.mrb[0].mxu0 %v2444
      %v2584 = vpop.f32.mrb[0].mxu0
      %v2585 = vadd.f32 0.0, %v2584
      %v2586 = vpop.f32.mrb[0].mxu0
      %2587 = vmatprep.mubr.f32.mxu0 0.0
      %2588 = vmatmul.mubr.f32.gmra.mrb[0].mxu0 %v2446
      %v2589 = vpop.f32.mrb[0].mxu0
      %v2590 = vadd.f32 0.0, %v2589
      %v2591 = vpop.f32.mrb[0].mxu0
      %2592 = vmatprep.mubr.f32.mxu0 0.0
      %2593 = vmatmul.mubr.f32.gmra.mrb[0].mxu0 %v2448
      %v2594 = vpop.f32.mrb[0].mxu0
      %v2595 = vadd.f32 0.0, %v2594
      %v2596 = vpop.f32.mrb[0].mxu0
      %2597 = vmatprep.mubr.f32.mxu0 0.0
      %2598 = vmatmul.mubr.f32.gmra.mrb[0].mxu0 %v2450
      %v2599 = vpop.f32.mrb[0].mxu0
      %v2600 = vadd.f32 0.0, %v2599
      %v2601 = vpop.f32.mrb[0].mxu0
      %2602 = vmatprep.mubr.f32.mxu0 0.0
      %2603 = vmatmul.mubr.f32.gmra.mrb[0].mxu0 %v2452
      %v2604 = vpop.f32.mrb[0].mxu0
      %v2605 = vadd.f32 0.0, %v2604
      %v2606 = vpop.f32.mrb[0].mxu0
      %2607 = vmatprep.mubr.f32.mxu0 0.0
      %2608 = vmatmul.mubr.f32.gmra.mrb[0].mxu0 %v2454
      %v2609 = vpop.f32.mrb[0].mxu0
      %v2610 = vadd.f32 0.0, %v2609
      %v2611 = vpop.f32.mrb[0].mxu0
      %2612 = vmatprep.mubr.f32.mxu0 0.0
      %2613 = vmatmul.mubr.f32.gmra.mrb[0].mxu0 %v2456
      %v2614 = vpop.f32.mrb[0].mxu0
      %v2615 = vadd.f32 0.0, %v2614
      %v2616 = vpop.f32.mrb[0].mxu0
      %2617 = vmatprep.mubr.f32.mxu0 0.0
      %2618 = vmatmul.mubr.f32.gmra.mrb[0].mxu0 %v2458
      %v2619 = vpop.f32.mrb[0].mxu0
      %v2620 = vadd.f32 0.0, %v2619
      %v2621 = vpop.f32.mrb[0].mxu0
      %2622 = vmatprep.mubr.f32.mxu0 0.0
      %2623 = vmatmul.mubr.f32.gmra.mrb[0].mxu0 %v2460
      %v2624 = vpop.f32.mrb[0].mxu0
      %v2625 = vadd.f32 0.0, %v2624
      %v2626 = vpop.f32.mrb[0].mxu0
      %2627 = vmatprep.mubr.f32.mxu0 0.0
      %2628 = vmatmul.mubr.f32.gmra.mrb[0].mxu0 %v2462
      %v2629 = vpop.f32.mrb[0].mxu0
      %v2630 = vadd.f32 0.0, %v2629
      %v2631 = vpop.f32.mrb[0].mxu0
      %2632 = vmatprep.mubr.f32.mxu0 0.0
      %2633 = vmatmul.mubr.f32.gmra.mrb[0].mxu0 %v2464
      %v2634 = vpop.f32.mrb[0].mxu0
      %v2635 = vadd.f32 0.0, %v2634
      %v2636 = vpop.f32.mrb[0].mxu0
      %2637 = vmatprep.mubr.f32.mxu0 0.0
      %2638 = vmatmul.mubr.f32.gmra.mrb[0].mxu0 %v2466
      %v2639 = vpop.f32.mrb[0].mxu0
      %v2640 = vadd.f32 0.0, %v2639
      %v2641 = vpop.f32.mrb[0].mxu0
      %2642 = vmatprep.mubr.f32.mxu0 0.0
      %2643 = vmatmul.mubr.f32.gmra.mrb[0].mxu0 %v2468
      %v2644 = vpop.f32.mrb[0].mxu0
      %v2645 = vadd.f32 0.0, %v2644
      %v2646 = vpop.f32.mrb[0].mxu0
      %2647 = vmatprep.mubr.f32.mxu0 0.0
      %2648 = vmatmul.mubr.f32.gmra.mrb[0].mxu0 %v2470
      %v2649 = vpop.f32.mrb[0].mxu0
      %v2650 = vadd.f32 0.0, %v2649
      %v2651 = vpop.f32.mrb[0].mxu0
      %2652 = vmatprep.mubr.f32.mxu0 0.0
      %2653 = vmatmul.mubr.f32.gmra.mrb[0].mxu0 %v2472
      %v2654 = vpop.f32.mrb[0].mxu0
      %v2655 = vadd.f32 0.0, %v2654
      %v2656 = vpop.f32.mrb[0].mxu0
      %2657 = vdwg.mxu0
      %v2658 = vld [vmem:[%s2] sm:$0x1]
      %v2660 = vlaneseq
      %v2661 = vshrl.u32 %v2660, 7
      %v2662 = vsub.s32 0, %v2661
      %v2663 = vrot.slane %v2658, %v2662
      %v2665 = vmul.f32 %v2545, %v2663
      %v2666 = vmul.f32 %v2550, %v2663
      %v2667 = vmul.f32 %v2555, %v2663
      %v2668 = vmul.f32 %v2560, %v2663
      %v2669 = vmul.f32 %v2565, %v2663
      %v2670 = vmul.f32 %v2570, %v2663
      %v2671 = vmul.f32 %v2575, %v2663
      %v2672 = vmul.f32 %v2580, %v2663
      %v2673 = vmul.f32 %v2585, %v2663
      %v2674 = vmul.f32 %v2590, %v2663
      %v2675 = vmul.f32 %v2595, %v2663
      %v2676 = vmul.f32 %v2600, %v2663
      %v2677 = vmul.f32 %v2605, %v2663
      %v2678 = vmul.f32 %v2610, %v2663
      %v2679 = vmul.f32 %v2615, %v2663
      %v2680 = vmul.f32 %v2620, %v2663
      %v2681 = vmul.f32 %v2625, %v2663
      %v2682 = vmul.f32 %v2630, %v2663
      %v2683 = vmul.f32 %v2635, %v2663
      %v2684 = vmul.f32 %v2640, %v2663
      %v2685 = vmul.f32 %v2645, %v2663
      %v2686 = vmul.f32 %v2650, %v2663
      %v2687 = vmul.f32 %v2655, %v2663
      %v2688 = vld [vmem:[%s3] sm:$0x1]
      %v2690 = vlaneseq
      %v2691 = vshrl.u32 %v2690, 7
      %v2692 = vsub.s32 0, %v2691
      %v2693 = vrot.slane %v2688, %v2692
      %v2695 = vadd.f32 %v2665, %v2693
      %v2696 = vadd.f32 %v2666, %v2693
      %v2697 = vadd.f32 %v2667, %v2693
      %v2698 = vadd.f32 %v2668, %v2693
      %v2699 = vadd.f32 %v2669, %v2693
      %v2700 = vadd.f32 %v2670, %v2693
      %v2701 = vadd.f32 %v2671, %v2693
      %v2702 = vadd.f32 %v2672, %v2693
      %v2703 = vadd.f32 %v2673, %v2693
      %v2704 = vadd.f32 %v2674, %v2693
      %v2705 = vadd.f32 %v2675, %v2693
      %v2706 = vadd.f32 %v2676, %v2693
      %v2707 = vadd.f32 %v2677, %v2693
      %v2708 = vadd.f32 %v2678, %v2693
      %v2709 = vadd.f32 %v2679, %v2693
      %v2710 = vadd.f32 %v2680, %v2693
      %v2711 = vadd.f32 %v2681, %v2693
      %v2712 = vadd.f32 %v2682, %v2693
      %v2713 = vadd.f32 %v2683, %v2693
      %v2714 = vadd.f32 %v2684, %v2693
      %v2715 = vadd.f32 %v2685, %v2693
      %v2716 = vadd.f32 %v2686, %v2693
      %v2717 = vadd.f32 %v2687, %v2693
      %v2718 = vmax.f32 %v2695, 0.0
      %v2719 = vmax.f32 %v2696, 0.0
      %v2720 = vmax.f32 %v2697, 0.0
      %v2721 = vmax.f32 %v2698, 0.0
      %v2722 = vmax.f32 %v2699, 0.0
      %v2723 = vmax.f32 %v2700, 0.0
      %v2724 = vmax.f32 %v2701, 0.0
      %v2725 = vmax.f32 %v2702, 0.0
      %v2726 = vmax.f32 %v2703, 0.0
      %v2727 = vmax.f32 %v2704, 0.0
      %v2728 = vmax.f32 %v2705, 0.0
      %v2729 = vmax.f32 %v2706, 0.0
      %v2730 = vmax.f32 %v2707, 0.0
      %v2731 = vmax.f32 %v2708, 0.0
      %v2732 = vmax.f32 %v2709, 0.0
      %v2733 = vmax.f32 %v2710, 0.0
      %v2734 = vmax.f32 %v2711, 0.0
      %v2735 = vmax.f32 %v2712, 0.0
      %v2736 = vmax.f32 %v2713, 0.0
      %v2737 = vmax.f32 %v2714, 0.0
      %v2738 = vmax.f32 %v2715, 0.0
      %v2739 = vmax.f32 %v2716, 0.0
      %v2740 = vmax.f32 %v2717, 0.0
      %v2764 = vcombine.high %v2718, %v2718
      %v2766 = vunpack.c.l.s4 1983009808
      %v2767 = vunpack.c.0.s8 %v2766
      %v2768 = vlaneseq
      %v2769 = vshrl.u32 %v2768, 7
      %v2770 = vsub.s32 %v2767, %v2769
      %v2771 = vrot.slane %v2718, %v2770
      %v2773 = vunpack.c.l.s4 1983009808
      %v2774 = vunpack.c.0.s8 %v2773
      %v2775 = vlaneseq
      %v2776 = vshrl.u32 %v2775, 7
      %v2777 = vsub.s32 %v2774, %v2776
      %v2778 = vrot.slane %v2764, %v2777
      %v2779 = vcombine.high %v2771, %v2771
      %v2780 = vcombine.high %v2778, %v2778
      %v2781 = vcombine.high %v2719, %v2719
      %v2783 = vunpack.c.l.s4 1983009808
      %v2784 = vunpack.c.0.s8 %v2783
      %v2785 = vlaneseq
      %v2786 = vshrl.u32 %v2785, 7
      %v2787 = vsub.s32 %v2784, %v2786
      %v2788 = vrot.slane %v2719, %v2787
      %v2790 = vunpack.c.l.s4 1983009808
      %v2791 = vunpack.c.0.s8 %v2790
      %v2792 = vlaneseq
      %v2793 = vshrl.u32 %v2792, 7
      %v2794 = vsub.s32 %v2791, %v2793
      %v2795 = vrot.slane %v2781, %v2794
      %v2796 = vcombine.high %v2788, %v2788
      %v2797 = vcombine.high %v2795, %v2795
      %v2798 = vcombine.high %v2720, %v2720
      %v2800 = vunpack.c.l.s4 1983009808
      %v2801 = vunpack.c.0.s8 %v2800
      %v2802 = vlaneseq
      %v2803 = vshrl.u32 %v2802, 7
      %v2804 = vsub.s32 %v2801, %v2803
      %v2805 = vrot.slane %v2720, %v2804
      %v2807 = vunpack.c.l.s4 1983009808
      %v2808 = vunpack.c.0.s8 %v2807
      %v2809 = vlaneseq
      %v2810 = vshrl.u32 %v2809, 7
      %v2811 = vsub.s32 %v2808, %v2810
      %v2812 = vrot.slane %v2798, %v2811
      %v2813 = vcombine.high %v2805, %v2805
      %v2814 = vcombine.high %v2812, %v2812
      %v2815 = vcombine.high %v2721, %v2721
      %v2817 = vunpack.c.l.s4 1983009808
      %v2818 = vunpack.c.0.s8 %v2817
      %v2819 = vlaneseq
      %v2820 = vshrl.u32 %v2819, 7
      %v2821 = vsub.s32 %v2818, %v2820
      %v2822 = vrot.slane %v2721, %v2821
      %v2824 = vunpack.c.l.s4 1983009808
      %v2825 = vunpack.c.0.s8 %v2824
      %v2826 = vlaneseq
      %v2827 = vshrl.u32 %v2826, 7
      %v2828 = vsub.s32 %v2825, %v2827
      %v2829 = vrot.slane %v2815, %v2828
      %v2830 = vcombine.high %v2822, %v2822
      %v2831 = vcombine.high %v2829, %v2829
      %v2832 = vcombine.high %v2722, %v2722
      %v2834 = vunpack.c.l.s4 1983009808
      %v2835 = vunpack.c.0.s8 %v2834
      %v2836 = vlaneseq
      %v2837 = vshrl.u32 %v2836, 7
      %v2838 = vsub.s32 %v2835, %v2837
      %v2839 = vrot.slane %v2722, %v2838
      %v2841 = vunpack.c.l.s4 1983009808
      %v2842 = vunpack.c.0.s8 %v2841
      %v2843 = vlaneseq
      %v2844 = vshrl.u32 %v2843, 7
      %v2845 = vsub.s32 %v2842, %v2844
      %v2846 = vrot.slane %v2832, %v2845
      %v2847 = vcombine.high %v2839, %v2839
      %v2848 = vcombine.high %v2846, %v2846
      %v2849 = vcombine.high %v2723, %v2723
      %v2851 = vunpack.c.l.s4 1983009808
      %v2852 = vunpack.c.0.s8 %v2851
      %v2853 = vlaneseq
      %v2854 = vshrl.u32 %v2853, 7
      %v2855 = vsub.s32 %v2852, %v2854
      %v2856 = vrot.slane %v2723, %v2855
      %v2858 = vunpack.c.l.s4 1983009808
      %v2859 = vunpack.c.0.s8 %v2858
      %v2860 = vlaneseq
      %v2861 = vshrl.u32 %v2860, 7
      %v2862 = vsub.s32 %v2859, %v2861
      %v2863 = vrot.slane %v2849, %v2862
      %v2864 = vcombine.high %v2856, %v2856
      %v2865 = vcombine.high %v2863, %v2863
      %v2866 = vcombine.high %v2724, %v2724
      %v2868 = vunpack.c.l.s4 1983009808
      %v2869 = vunpack.c.0.s8 %v2868
      %v2870 = vlaneseq
      %v2871 = vshrl.u32 %v2870, 7
      %v2872 = vsub.s32 %v2869, %v2871
      %v2873 = vrot.slane %v2724, %v2872
      %v2875 = vunpack.c.l.s4 1983009808
      %v2876 = vunpack.c.0.s8 %v2875
      %v2877 = vlaneseq
      %v2878 = vshrl.u32 %v2877, 7
      %v2879 = vsub.s32 %v2876, %v2878
      %v2880 = vrot.slane %v2866, %v2879
      %v2881 = vcombine.high %v2873, %v2873
      %v2882 = vcombine.high %v2880, %v2880
      %v2883 = vcombine.high %v2725, %v2725
      %v2885 = vunpack.c.l.s4 1983009808
      %v2886 = vunpack.c.0.s8 %v2885
      %v2887 = vlaneseq
      %v2888 = vshrl.u32 %v2887, 7
      %v2889 = vsub.s32 %v2886, %v2888
      %v2890 = vrot.slane %v2725, %v2889
      %v2892 = vunpack.c.l.s4 1983009808
      %v2893 = vunpack.c.0.s8 %v2892
      %v2894 = vlaneseq
      %v2895 = vshrl.u32 %v2894, 7
      %v2896 = vsub.s32 %v2893, %v2895
      %v2897 = vrot.slane %v2883, %v2896
      %v2898 = vcombine.high %v2890, %v2890
      %v2899 = vcombine.high %v2897, %v2897
      %v2900 = vcombine.high %v2726, %v2726
      %v2902 = vunpack.c.l.s4 1983009808
      %v2903 = vunpack.c.0.s8 %v2902
      %v2904 = vlaneseq
      %v2905 = vshrl.u32 %v2904, 7
      %v2906 = vsub.s32 %v2903, %v2905
      %v2907 = vrot.slane %v2726, %v2906
      %v2909 = vunpack.c.l.s4 1983009808
      %v2910 = vunpack.c.0.s8 %v2909
      %v2911 = vlaneseq
      %v2912 = vshrl.u32 %v2911, 7
      %v2913 = vsub.s32 %v2910, %v2912
      %v2914 = vrot.slane %v2900, %v2913
      %v2915 = vcombine.high %v2907, %v2907
      %v2916 = vcombine.high %v2914, %v2914
      %v2917 = vcombine.high %v2727, %v2727
      %v2919 = vunpack.c.l.s4 1983009808
      %v2920 = vunpack.c.0.s8 %v2919
      %v2921 = vlaneseq
      %v2922 = vshrl.u32 %v2921, 7
      %v2923 = vsub.s32 %v2920, %v2922
      %v2924 = vrot.slane %v2727, %v2923
      %v2926 = vunpack.c.l.s4 1983009808
      %v2927 = vunpack.c.0.s8 %v2926
      %v2928 = vlaneseq
      %v2929 = vshrl.u32 %v2928, 7
      %v2930 = vsub.s32 %v2927, %v2929
      %v2931 = vrot.slane %v2917, %v2930
      %v2932 = vcombine.high %v2924, %v2924
      %v2933 = vcombine.high %v2931, %v2931
      %v2934 = vcombine.high %v2728, %v2728
      %v2936 = vunpack.c.l.s4 1983009808
      %v2937 = vunpack.c.0.s8 %v2936
      %v2938 = vlaneseq
      %v2939 = vshrl.u32 %v2938, 7
      %v2940 = vsub.s32 %v2937, %v2939
      %v2941 = vrot.slane %v2728, %v2940
      %v2943 = vunpack.c.l.s4 1983009808
      %v2944 = vunpack.c.0.s8 %v2943
      %v2945 = vlaneseq
      %v2946 = vshrl.u32 %v2945, 7
      %v2947 = vsub.s32 %v2944, %v2946
      %v2948 = vrot.slane %v2934, %v2947
      %v2949 = vcombine.high %v2941, %v2941
      %v2950 = vcombine.high %v2948, %v2948
      %v2951 = vcombine.high %v2729, %v2729
      %v2953 = vunpack.c.l.s4 1983009808
      %v2954 = vunpack.c.0.s8 %v2953
      %v2955 = vlaneseq
      %v2956 = vshrl.u32 %v2955, 7
      %v2957 = vsub.s32 %v2954, %v2956
      %v2958 = vrot.slane %v2729, %v2957
      %v2960 = vunpack.c.l.s4 1983009808
      %v2961 = vunpack.c.0.s8 %v2960
      %v2962 = vlaneseq
      %v2963 = vshrl.u32 %v2962, 7
      %v2964 = vsub.s32 %v2961, %v2963
      %v2965 = vrot.slane %v2951, %v2964
      %v2966 = vcombine.high %v2958, %v2958
      %v2967 = vcombine.high %v2965, %v2965
      %v2968 = vcombine.high %v2730, %v2730
      %v2970 = vunpack.c.l.s4 1983009808
      %v2971 = vunpack.c.0.s8 %v2970
      %v2972 = vlaneseq
      %v2973 = vshrl.u32 %v2972, 7
      %v2974 = vsub.s32 %v2971, %v2973
      %v2975 = vrot.slane %v2730, %v2974
      %v2977 = vunpack.c.l.s4 1983009808
      %v2978 = vunpack.c.0.s8 %v2977
      %v2979 = vlaneseq
      %v2980 = vshrl.u32 %v2979, 7
      %v2981 = vsub.s32 %v2978, %v2980
      %v2982 = vrot.slane %v2968, %v2981
      %v2983 = vcombine.high %v2975, %v2975
      %v2984 = vcombine.high %v2982, %v2982
      %v2985 = vcombine.high %v2731, %v2731
      %v2987 = vunpack.c.l.s4 1983009808
      %v2988 = vunpack.c.0.s8 %v2987
      %v2989 = vlaneseq
      %v2990 = vshrl.u32 %v2989, 7
      %v2991 = vsub.s32 %v2988, %v2990
      %v2992 = vrot.slane %v2731, %v2991
      %v2994 = vunpack.c.l.s4 1983009808
      %v2995 = vunpack.c.0.s8 %v2994
      %v2996 = vlaneseq
      %v2997 = vshrl.u32 %v2996, 7
      %v2998 = vsub.s32 %v2995, %v2997
      %v2999 = vrot.slane %v2985, %v2998
      %v3000 = vcombine.high %v2992, %v2992
      %v3001 = vcombine.high %v2999, %v2999
      %v3002 = vcombine.high %v2732, %v2732
      %v3004 = vunpack.c.l.s4 1983009808
      %v3005 = vunpack.c.0.s8 %v3004
      %v3006 = vlaneseq
      %v3007 = vshrl.u32 %v3006, 7
      %v3008 = vsub.s32 %v3005, %v3007
      %v3009 = vrot.slane %v2732, %v3008
      %v3011 = vunpack.c.l.s4 1983009808
      %v3012 = vunpack.c.0.s8 %v3011
      %v3013 = vlaneseq
      %v3014 = vshrl.u32 %v3013, 7
      %v3015 = vsub.s32 %v3012, %v3014
      %v3016 = vrot.slane %v3002, %v3015
      %v3017 = vcombine.high %v3009, %v3009
      %v3018 = vcombine.high %v3016, %v3016
      %v3019 = vcombine.high %v2733, %v2733
      %v3021 = vunpack.c.l.s4 1983009808
      %v3022 = vunpack.c.0.s8 %v3021
      %v3023 = vlaneseq
      %v3024 = vshrl.u32 %v3023, 7
      %v3025 = vsub.s32 %v3022, %v3024
      %v3026 = vrot.slane %v2733, %v3025
      %v3028 = vunpack.c.l.s4 1983009808
      %v3029 = vunpack.c.0.s8 %v3028
      %v3030 = vlaneseq
      %v3031 = vshrl.u32 %v3030, 7
      %v3032 = vsub.s32 %v3029, %v3031
      %v3033 = vrot.slane %v3019, %v3032
      %v3034 = vcombine.high %v3026, %v3026
      %v3035 = vcombine.high %v3033, %v3033
      %v3036 = vcombine.high %v2734, %v2734
      %v3038 = vunpack.c.l.s4 1983009808
      %v3039 = vunpack.c.0.s8 %v3038
      %v3040 = vlaneseq
      %v3041 = vshrl.u32 %v3040, 7
      %v3042 = vsub.s32 %v3039, %v3041
      %v3043 = vrot.slane %v2734, %v3042
      %v3045 = vunpack.c.l.s4 1983009808
      %v3046 = vunpack.c.0.s8 %v3045
      %v3047 = vlaneseq
      %v3048 = vshrl.u32 %v3047, 7
      %v3049 = vsub.s32 %v3046, %v3048
      %v3050 = vrot.slane %v3036, %v3049
      %v3051 = vcombine.high %v3043, %v3043
      %v3052 = vcombine.high %v3050, %v3050
      %v3053 = vcombine.high %v2735, %v2735
      %v3055 = vunpack.c.l.s4 1983009808
      %v3056 = vunpack.c.0.s8 %v3055
      %v3057 = vlaneseq
      %v3058 = vshrl.u32 %v3057, 7
      %v3059 = vsub.s32 %v3056, %v3058
      %v3060 = vrot.slane %v2735, %v3059
      %v3062 = vunpack.c.l.s4 1983009808
      %v3063 = vunpack.c.0.s8 %v3062
      %v3064 = vlaneseq
      %v3065 = vshrl.u32 %v3064, 7
      %v3066 = vsub.s32 %v3063, %v3065
      %v3067 = vrot.slane %v3053, %v3066
      %v3068 = vcombine.high %v3060, %v3060
      %v3069 = vcombine.high %v3067, %v3067
      %v3070 = vcombine.high %v2736, %v2736
      %v3072 = vunpack.c.l.s4 1983009808
      %v3073 = vunpack.c.0.s8 %v3072
      %v3074 = vlaneseq
      %v3075 = vshrl.u32 %v3074, 7
      %v3076 = vsub.s32 %v3073, %v3075
      %v3077 = vrot.slane %v2736, %v3076
      %v3079 = vunpack.c.l.s4 1983009808
      %v3080 = vunpack.c.0.s8 %v3079
      %v3081 = vlaneseq
      %v3082 = vshrl.u32 %v3081, 7
      %v3083 = vsub.s32 %v3080, %v3082
      %v3084 = vrot.slane %v3070, %v3083
      %v3085 = vcombine.high %v3077, %v3077
      %v3086 = vcombine.high %v3084, %v3084
      %v3087 = vcombine.high %v2737, %v2737
      %v3089 = vunpack.c.l.s4 1983009808
      %v3090 = vunpack.c.0.s8 %v3089
      %v3091 = vlaneseq
      %v3092 = vshrl.u32 %v3091, 7
      %v3093 = vsub.s32 %v3090, %v3092
      %v3094 = vrot.slane %v2737, %v3093
      %v3096 = vunpack.c.l.s4 1983009808
      %v3097 = vunpack.c.0.s8 %v3096
      %v3098 = vlaneseq
      %v3099 = vshrl.u32 %v3098, 7
      %v3100 = vsub.s32 %v3097, %v3099
      %v3101 = vrot.slane %v3087, %v3100
      %v3102 = vcombine.high %v3094, %v3094
      %v3103 = vcombine.high %v3101, %v3101
      %v3104 = vcombine.high %v2738, %v2738
      %v3106 = vunpack.c.l.s4 1983009808
      %v3107 = vunpack.c.0.s8 %v3106
      %v3108 = vlaneseq
      %v3109 = vshrl.u32 %v3108, 7
      %v3110 = vsub.s32 %v3107, %v3109
      %v3111 = vrot.slane %v2738, %v3110
      %v3113 = vunpack.c.l.s4 1983009808
      %v3114 = vunpack.c.0.s8 %v3113
      %v3115 = vlaneseq
      %v3116 = vshrl.u32 %v3115, 7
      %v3117 = vsub.s32 %v3114, %v3116
      %v3118 = vrot.slane %v3104, %v3117
      %v3119 = vcombine.high %v3111, %v3111
      %v3120 = vcombine.high %v3118, %v3118
      %v3121 = vcombine.high %v2739, %v2739
      %v3123 = vunpack.c.l.s4 1983009808
      %v3124 = vunpack.c.0.s8 %v3123
      %v3125 = vlaneseq
      %v3126 = vshrl.u32 %v3125, 7
      %v3127 = vsub.s32 %v3124, %v3126
      %v3128 = vrot.slane %v2739, %v3127
      %v3130 = vunpack.c.l.s4 1983009808
      %v3131 = vunpack.c.0.s8 %v3130
      %v3132 = vlaneseq
      %v3133 = vshrl.u32 %v3132, 7
      %v3134 = vsub.s32 %v3131, %v3133
      %v3135 = vrot.slane %v3121, %v3134
      %v3136 = vcombine.high %v3128, %v3128
      %v3137 = vcombine.high %v3135, %v3135
      %v3139 = vunpack.c.l.s4 1983009808
      %v3140 = vunpack.c.0.s8 %v3139
      %v3141 = vlaneseq
      %v3142 = vshrl.u32 %v3141, 7
      %v3143 = vsub.s32 %v3140, %v3142
      %v3144 = vrot.slane %v2740, %v3143
      %v3145 = vcombine.high %v3144, %v3144
      %v3146 = vlaneseq
      %v3147 = vshrl.u32 %v3146, 7
      %v3148 = vadd.s32 %v3147, 8
      %v3149 = vadd.s32 %v3147, 16
      %s3150 = ssub.s32 %s435, 1
      %v3151 = vstv %s3150
      %v3152 = vadd.s32 %v3151, 1
      %v3153 = vadd.s32 %v3151, 2
      %v3154 = vadd.s32 %v3151, 3
      %v3155 = vadd.s32 %v3151, 4
      %v3156 = vadd.s32 %v3151, 5
      %v3157 = vadd.s32 %v3151, 6
      %v3158 = vadd.s32 %v3151, 7
      %v3159 = vadd.s32 %v3151, 8
      %v3160 = vadd.s32 %v3151, 9
      %v3161 = vsub.s32 %v3147, 1
      %v3162 = vsub.s32 %v3148, 1
      %v3163 = vsub.s32 %v3149, 1
      %vm3164 = vcmp.ge.s32.totalorder %v3151, 0
      %vm3165 = vcmp.ge.s32.totalorder %v3152, 0
      %vm3166 = vcmp.ge.s32.totalorder %v3153, 0
      %vm3167 = vcmp.ge.s32.totalorder %v3154, 0
      %vm3168 = vcmp.ge.s32.totalorder %v3155, 0
      %vm3169 = vcmp.ge.s32.totalorder %v3156, 0
      %vm3170 = vcmp.ge.s32.totalorder %v3157, 0
      %vm3171 = vcmp.ge.s32.totalorder %v3158, 0
      %vm3172 = vcmp.ge.s32.totalorder %v3159, 0
      %vm3173 = vcmp.ge.s32.totalorder %v3160, 0
      %vm3174 = vcmp.lt.s32.totalorder %v3151, 16
      %vm3175 = vcmp.lt.s32.totalorder %v3152, 16
      %vm3176 = vcmp.lt.s32.totalorder %v3153, 16
      %vm3177 = vcmp.lt.s32.totalorder %v3154, 16
      %vm3178 = vcmp.lt.s32.totalorder %v3155, 16
      %vm3179 = vcmp.lt.s32.totalorder %v3156, 16
      %vm3180 = vcmp.lt.s32.totalorder %v3157, 16
      %vm3181 = vcmp.lt.s32.totalorder %v3158, 16
      %vm3182 = vcmp.lt.s32.totalorder %v3159, 16
      %vm3183 = vcmp.lt.s32.totalorder %v3160, 16
      %vm3184 = vmand %vm3164, %vm3174
      %vm3185 = vmand %vm3165, %vm3175
      %vm3186 = vmand %vm3166, %vm3176
      %vm3187 = vmand %vm3167, %vm3177
      %vm3188 = vmand %vm3168, %vm3178
      %vm3189 = vmand %vm3169, %vm3179
      %vm3190 = vmand %vm3170, %vm3180
      %vm3191 = vmand %vm3171, %vm3181
      %vm3192 = vmand %vm3172, %vm3182
      %vm3193 = vmand %vm3173, %vm3183
      %vm3194 = vcmp.ge.s32.totalorder %v3161, 0
      %vm3195 = vcmp.ge.s32.totalorder %v3162, 0
      %vm3196 = vcmp.ge.s32.totalorder %v3163, 0
      %vm3197 = vmand %vm3184, %vm3194
      %vm3198 = vmand %vm3184, %vm3195
      %vm3199 = vmand %vm3184, %vm3196
      %vm3200 = vmand %vm3185, %vm3194
      %vm3201 = vmand %vm3185, %vm3195
      %vm3202 = vmand %vm3185, %vm3196
      %vm3203 = vmand %vm3186, %vm3194
      %vm3204 = vmand %vm3186, %vm3195
      %vm3205 = vmand %vm3186, %vm3196
      %vm3206 = vmand %vm3187, %vm3194
      %vm3207 = vmand %vm3187, %vm3195
      %vm3208 = vmand %vm3187, %vm3196
      %vm3209 = vmand %vm3188, %vm3194
      %vm3210 = vmand %vm3188, %vm3195
      %vm3211 = vmand %vm3188, %vm3196
      %vm3212 = vmand %vm3189, %vm3194
      %vm3213 = vmand %vm3189, %vm3195
      %vm3214 = vmand %vm3189, %vm3196
      %vm3215 = vmand %vm3190, %vm3194
      %vm3216 = vmand %vm3190, %vm3195
      %vm3217 = vmand %vm3190, %vm3196
      %vm3218 = vmand %vm3191, %vm3194
      %vm3219 = vmand %vm3191, %vm3195
      %vm3220 = vmand %vm3191, %vm3196
      %vm3221 = vmand %vm3192, %vm3194
      %vm3222 = vmand %vm3192, %vm3195
      %vm3223 = vmand %vm3192, %vm3196
      %vm3224 = vmand %vm3193, %vm3194
      %vm3225 = vmand %vm3193, %vm3195
      %vm3226 = vmand %vm3193, %vm3196
      %vm3227 = vcmp.lt.s32.totalorder %v3161, 16
      %vm3228 = vcmp.lt.s32.totalorder %v3162, 16
      %vm3229 = vcmp.lt.s32.totalorder %v3163, 16
      %vm3230 = vmand %vm3197, %vm3227
      %vm3231 = vmand %vm3198, %vm3228
      %vm3232 = vmand %vm3199, %vm3229
      %vm3233 = vmand %vm3200, %vm3227
      %vm3234 = vmand %vm3201, %vm3228
      %vm3235 = vmand %vm3202, %vm3229
      %vm3236 = vmand %vm3203, %vm3227
      %vm3237 = vmand %vm3204, %vm3228
      %vm3238 = vmand %vm3205, %vm3229
      %vm3239 = vmand %vm3206, %vm3227
      %vm3240 = vmand %vm3207, %vm3228
      %vm3241 = vmand %vm3208, %vm3229
      %vm3242 = vmand %vm3209, %vm3227
      %vm3243 = vmand %vm3210, %vm3228
      %vm3244 = vmand %vm3211, %vm3229
      %vm3245 = vmand %vm3212, %vm3227
      %vm3246 = vmand %vm3213, %vm3228
      %vm3247 = vmand %vm3214, %vm3229
      %vm3248 = vmand %vm3215, %vm3227
      %vm3249 = vmand %vm3216, %vm3228
      %vm3250 = vmand %vm3217, %vm3229
      %vm3251 = vmand %vm3218, %vm3227
      %vm3252 = vmand %vm3219, %vm3228
      %vm3253 = vmand %vm3220, %vm3229
      %vm3254 = vmand %vm3221, %vm3227
      %vm3255 = vmand %vm3222, %vm3228
      %vm3256 = vmand %vm3223, %vm3229
      %vm3257 = vmand %vm3224, %vm3227
      %vm3258 = vmand %vm3225, %vm3228
      %vm3259 = vmand %vm3226, %vm3229
      %v3260 = vcombine.low %v2771, %v2779
      %v3261 = vcombine.low %v2778, %v2780
      %v3263 = vunpack.c.l.s4 1983009808
      %v3264 = vunpack.c.0.s8 %v3263
      %v3265 = vlaneseq
      %v3266 = vshrl.u32 %v3265, 7
      %v3267 = vsub.s32 %v3264, %v3266
      %v3268 = vrot.slane %v3260, %v3267
      %v3270 = vunpack.c.l.s4 1983009808
      %v3271 = vunpack.c.0.s8 %v3270
      %v3272 = vlaneseq
      %v3273 = vshrl.u32 %v3272, 7
      %v3274 = vsub.s32 %v3271, %v3273
      %v3275 = vrot.slane %v3261, %v3274
      %v3276 = vcombine.low %v3268, %v3275
      %v3277 = vcombine.low %v2788, %v2796
      %v3278 = vcombine.low %v2795, %v2797
      %v3280 = vunpack.c.l.s4 1983009808
      %v3281 = vunpack.c.0.s8 %v3280
      %v3282 = vlaneseq
      %v3283 = vshrl.u32 %v3282, 7
      %v3284 = vsub.s32 %v3281, %v3283
      %v3285 = vrot.slane %v3277, %v3284
      %v3287 = vunpack.c.l.s4 1983009808
      %v3288 = vunpack.c.0.s8 %v3287
      %v3289 = vlaneseq
      %v3290 = vshrl.u32 %v3289, 7
      %v3291 = vsub.s32 %v3288, %v3290
      %v3292 = vrot.slane %v3278, %v3291
      %v3293 = vcombine.low %v3285, %v3292
      %v3295 = vunpack.c.l.s4 1983009808
      %v3296 = vunpack.c.0.s8 %v3295
      %v3297 = vlaneseq
      %v3298 = vshrl.u32 %v3297, 7
      %v3299 = vsub.s32 %v3296, %v3298
      %v3300 = vrot.slane %v2805, %v3299
      %v3301 = vcombine.low %v2813, %v2812
      %v3302 = vcombine.low %v2814, %v2822
      %v3304 = vunpack.c.l.s4 1983009808
      %v3305 = vunpack.c.0.s8 %v3304
      %v3306 = vlaneseq
      %v3307 = vshrl.u32 %v3306, 7
      %v3308 = vsub.s32 %v3305, %v3307
      %v3309 = vrot.slane %v3301, %v3308
      %v3311 = vunpack.c.l.s4 1983009808
      %v3312 = vunpack.c.0.s8 %v3311
      %v3313 = vlaneseq
      %v3314 = vshrl.u32 %v3313, 7
      %v3315 = vsub.s32 %v3312, %v3314
      %v3316 = vrot.slane %v3302, %v3315
      %v3317 = vcombine.low %v3309, %v3316
      %v3318 = vcombine.low %v2830, %v2829
      %v3319 = vcombine.low %v2831, %v2839
      %v3321 = vunpack.c.l.s4 1983009808
      %v3322 = vunpack.c.0.s8 %v3321
      %v3323 = vlaneseq
      %v3324 = vshrl.u32 %v3323, 7
      %v3325 = vsub.s32 %v3322, %v3324
      %v3326 = vrot.slane %v3318, %v3325
      %v3328 = vunpack.c.l.s4 1983009808
      %v3329 = vunpack.c.0.s8 %v3328
      %v3330 = vlaneseq
      %v3331 = vshrl.u32 %v3330, 7
      %v3332 = vsub.s32 %v3329, %v3331
      %v3333 = vrot.slane %v3319, %v3332
      %v3334 = vcombine.low %v3326, %v3333
      %v3336 = vunpack.c.l.s4 1983009808
      %v3337 = vunpack.c.0.s8 %v3336
      %v3338 = vlaneseq
      %v3339 = vshrl.u32 %v3338, 7
      %v3340 = vsub.s32 %v3337, %v3339
      %v3341 = vrot.slane %v2847, %v3340
      %v3342 = vcombine.low %v2846, %v2848
      %v3343 = vcombine.low %v2856, %v2864
      %v3345 = vunpack.c.l.s4 1983009808
      %v3346 = vunpack.c.0.s8 %v3345
      %v3347 = vlaneseq
      %v3348 = vshrl.u32 %v3347, 7
      %v3349 = vsub.s32 %v3346, %v3348
      %v3350 = vrot.slane %v3342, %v3349
      %v3352 = vunpack.c.l.s4 1983009808
      %v3353 = vunpack.c.0.s8 %v3352
      %v3354 = vlaneseq
      %v3355 = vshrl.u32 %v3354, 7
      %v3356 = vsub.s32 %v3353, %v3355
      %v3357 = vrot.slane %v3343, %v3356
      %v3358 = vcombine.low %v3350, %v3357
      %v3359 = vcombine.low %v2863, %v2865
      %v3360 = vcombine.low %v2873, %v2881
      %v3362 = vunpack.c.l.s4 1983009808
      %v3363 = vunpack.c.0.s8 %v3362
      %v3364 = vlaneseq
      %v3365 = vshrl.u32 %v3364, 7
      %v3366 = vsub.s32 %v3363, %v3365
      %v3367 = vrot.slane %v3359, %v3366
      %v3369 = vunpack.c.l.s4 1983009808
      %v3370 = vunpack.c.0.s8 %v3369
      %v3371 = vlaneseq
      %v3372 = vshrl.u32 %v3371, 7
      %v3373 = vsub.s32 %v3370, %v3372
      %v3374 = vrot.slane %v3360, %v3373
      %v3375 = vcombine.low %v3367, %v3374
      %v3377 = vunpack.c.l.s4 1983009808
      %v3378 = vunpack.c.0.s8 %v3377
      %v3379 = vlaneseq
      %v3380 = vshrl.u32 %v3379, 7
      %v3381 = vsub.s32 %v3378, %v3380
      %v3382 = vrot.slane %v2880, %v3381
      %v3383 = vcombine.low %v2882, %v2890
      %v3384 = vcombine.low %v2898, %v2897
      %v3386 = vunpack.c.l.s4 1983009808
      %v3387 = vunpack.c.0.s8 %v3386
      %v3388 = vlaneseq
      %v3389 = vshrl.u32 %v3388, 7
      %v3390 = vsub.s32 %v3387, %v3389
      %v3391 = vrot.slane %v3383, %v3390
      %v3393 = vunpack.c.l.s4 1983009808
      %v3394 = vunpack.c.0.s8 %v3393
      %v3395 = vlaneseq
      %v3396 = vshrl.u32 %v3395, 7
      %v3397 = vsub.s32 %v3394, %v3396
      %v3398 = vrot.slane %v3384, %v3397
      %v3399 = vcombine.low %v3391, %v3398
      %v3400 = vcombine.low %v2899, %v2907
      %v3401 = vcombine.low %v2915, %v2914
      %v3403 = vunpack.c.l.s4 1983009808
      %v3404 = vunpack.c.0.s8 %v3403
      %v3405 = vlaneseq
      %v3406 = vshrl.u32 %v3405, 7
      %v3407 = vsub.s32 %v3404, %v3406
      %v3408 = vrot.slane %v3400, %v3407
      %v3410 = vunpack.c.l.s4 1983009808
      %v3411 = vunpack.c.0.s8 %v3410
      %v3412 = vlaneseq
      %v3413 = vshrl.u32 %v3412, 7
      %v3414 = vsub.s32 %v3411, %v3413
      %v3415 = vrot.slane %v3401, %v3414
      %v3416 = vcombine.low %v3408, %v3415
      %v3418 = vunpack.c.l.s4 1983009808
      %v3419 = vunpack.c.0.s8 %v3418
      %v3420 = vlaneseq
      %v3421 = vshrl.u32 %v3420, 7
      %v3422 = vsub.s32 %v3419, %v3421
      %v3423 = vrot.slane %v2916, %v3422
      %v3424 = vcombine.low %v2924, %v2932
      %v3425 = vcombine.low %v2931, %v2933
      %v3427 = vunpack.c.l.s4 1983009808
      %v3428 = vunpack.c.0.s8 %v3427
      %v3429 = vlaneseq
      %v3430 = vshrl.u32 %v3429, 7
      %v3431 = vsub.s32 %v3428, %v3430
      %v3432 = vrot.slane %v3424, %v3431
      %v3434 = vunpack.c.l.s4 1983009808
      %v3435 = vunpack.c.0.s8 %v3434
      %v3436 = vlaneseq
      %v3437 = vshrl.u32 %v3436, 7
      %v3438 = vsub.s32 %v3435, %v3437
      %v3439 = vrot.slane %v3425, %v3438
      %v3440 = vcombine.low %v3432, %v3439
      %v3441 = vcombine.low %v2941, %v2949
      %v3442 = vcombine.low %v2948, %v2950
      %v3444 = vunpack.c.l.s4 1983009808
      %v3445 = vunpack.c.0.s8 %v3444
      %v3446 = vlaneseq
      %v3447 = vshrl.u32 %v3446, 7
      %v3448 = vsub.s32 %v3445, %v3447
      %v3449 = vrot.slane %v3441, %v3448
      %v3451 = vunpack.c.l.s4 1983009808
      %v3452 = vunpack.c.0.s8 %v3451
      %v3453 = vlaneseq
      %v3454 = vshrl.u32 %v3453, 7
      %v3455 = vsub.s32 %v3452, %v3454
      %v3456 = vrot.slane %v3442, %v3455
      %v3457 = vcombine.low %v3449, %v3456
      %v3459 = vunpack.c.l.s4 1983009808
      %v3460 = vunpack.c.0.s8 %v3459
      %v3461 = vlaneseq
      %v3462 = vshrl.u32 %v3461, 7
      %v3463 = vsub.s32 %v3460, %v3462
      %v3464 = vrot.slane %v2958, %v3463
      %v3465 = vcombine.low %v2966, %v2965
      %v3466 = vcombine.low %v2967, %v2975
      %v3468 = vunpack.c.l.s4 1983009808
      %v3469 = vunpack.c.0.s8 %v3468
      %v3470 = vlaneseq
      %v3471 = vshrl.u32 %v3470, 7
      %v3472 = vsub.s32 %v3469, %v3471
      %v3473 = vrot.slane %v3465, %v3472
      %v3475 = vunpack.c.l.s4 1983009808
      %v3476 = vunpack.c.0.s8 %v3475
      %v3477 = vlaneseq
      %v3478 = vshrl.u32 %v3477, 7
      %v3479 = vsub.s32 %v3476, %v3478
      %v3480 = vrot.slane %v3466, %v3479
      %v3481 = vcombine.low %v3473, %v3480
      %v3482 = vcombine.low %v2983, %v2982
      %v3483 = vcombine.low %v2984, %v2992
      %v3485 = vunpack.c.l.s4 1983009808
      %v3486 = vunpack.c.0.s8 %v3485
      %v3487 = vlaneseq
      %v3488 = vshrl.u32 %v3487, 7
      %v3489 = vsub.s32 %v3486, %v3488
      %v3490 = vrot.slane %v3482, %v3489
      %v3492 = vunpack.c.l.s4 1983009808
      %v3493 = vunpack.c.0.s8 %v3492
      %v3494 = vlaneseq
      %v3495 = vshrl.u32 %v3494, 7
      %v3496 = vsub.s32 %v3493, %v3495
      %v3497 = vrot.slane %v3483, %v3496
      %v3498 = vcombine.low %v3490, %v3497
      %v3500 = vunpack.c.l.s4 1983009808
      %v3501 = vunpack.c.0.s8 %v3500
      %v3502 = vlaneseq
      %v3503 = vshrl.u32 %v3502, 7
      %v3504 = vsub.s32 %v3501, %v3503
      %v3505 = vrot.slane %v3000, %v3504
      %v3506 = vcombine.low %v2999, %v3001
      %v3507 = vcombine.low %v3009, %v3017
      %v3509 = vunpack.c.l.s4 1983009808
      %v3510 = vunpack.c.0.s8 %v3509
      %v3511 = vlaneseq
      %v3512 = vshrl.u32 %v3511, 7
      %v3513 = vsub.s32 %v3510, %v3512
      %v3514 = vrot.slane %v3506, %v3513
      %v3516 = vunpack.c.l.s4 1983009808
      %v3517 = vunpack.c.0.s8 %v3516
      %v3518 = vlaneseq
      %v3519 = vshrl.u32 %v3518, 7
      %v3520 = vsub.s32 %v3517, %v3519
      %v3521 = vrot.slane %v3507, %v3520
      %v3522 = vcombine.low %v3514, %v3521
      %v3523 = vcombine.low %v3016, %v3018
      %v3524 = vcombine.low %v3026, %v3034
      %v3526 = vunpack.c.l.s4 1983009808
      %v3527 = vunpack.c.0.s8 %v3526
      %v3528 = vlaneseq
      %v3529 = vshrl.u32 %v3528, 7
      %v3530 = vsub.s32 %v3527, %v3529
      %v3531 = vrot.slane %v3523, %v3530
      %v3533 = vunpack.c.l.s4 1983009808
      %v3534 = vunpack.c.0.s8 %v3533
      %v3535 = vlaneseq
      %v3536 = vshrl.u32 %v3535, 7
      %v3537 = vsub.s32 %v3534, %v3536
      %v3538 = vrot.slane %v3524, %v3537
      %v3539 = vcombine.low %v3531, %v3538
      %v3541 = vunpack.c.l.s4 1983009808
      %v3542 = vunpack.c.0.s8 %v3541
      %v3543 = vlaneseq
      %v3544 = vshrl.u32 %v3543, 7
      %v3545 = vsub.s32 %v3542, %v3544
      %v3546 = vrot.slane %v3033, %v3545
      %v3547 = vcombine.low %v3035, %v3043
      %v3548 = vcombine.low %v3051, %v3050
      %v3550 = vunpack.c.l.s4 1983009808
      %v3551 = vunpack.c.0.s8 %v3550
      %v3552 = vlaneseq
      %v3553 = vshrl.u32 %v3552, 7
      %v3554 = vsub.s32 %v3551, %v3553
      %v3555 = vrot.slane %v3547, %v3554
      %v3557 = vunpack.c.l.s4 1983009808
      %v3558 = vunpack.c.0.s8 %v3557
      %v3559 = vlaneseq
      %v3560 = vshrl.u32 %v3559, 7
      %v3561 = vsub.s32 %v3558, %v3560
      %v3562 = vrot.slane %v3548, %v3561
      %v3563 = vcombine.low %v3555, %v3562
      %v3564 = vcombine.low %v3052, %v3060
      %v3565 = vcombine.low %v3068, %v3067
      %v3567 = vunpack.c.l.s4 1983009808
      %v3568 = vunpack.c.0.s8 %v3567
      %v3569 = vlaneseq
      %v3570 = vshrl.u32 %v3569, 7
      %v3571 = vsub.s32 %v3568, %v3570
      %v3572 = vrot.slane %v3564, %v3571
      %v3574 = vunpack.c.l.s4 1983009808
      %v3575 = vunpack.c.0.s8 %v3574
      %v3576 = vlaneseq
      %v3577 = vshrl.u32 %v3576, 7
      %v3578 = vsub.s32 %v3575, %v3577
      %v3579 = vrot.slane %v3565, %v3578
      %v3580 = vcombine.low %v3572, %v3579
      %v3582 = vunpack.c.l.s4 1983009808
      %v3583 = vunpack.c.0.s8 %v3582
      %v3584 = vlaneseq
      %v3585 = vshrl.u32 %v3584, 7
      %v3586 = vsub.s32 %v3583, %v3585
      %v3587 = vrot.slane %v3069, %v3586
      %v3588 = vcombine.low %v3077, %v3085
      %v3589 = vcombine.low %v3084, %v3086
      %v3591 = vunpack.c.l.s4 1983009808
      %v3592 = vunpack.c.0.s8 %v3591
      %v3593 = vlaneseq
      %v3594 = vshrl.u32 %v3593, 7
      %v3595 = vsub.s32 %v3592, %v3594
      %v3596 = vrot.slane %v3588, %v3595
      %v3598 = vunpack.c.l.s4 1983009808
      %v3599 = vunpack.c.0.s8 %v3598
      %v3600 = vlaneseq
      %v3601 = vshrl.u32 %v3600, 7
      %v3602 = vsub.s32 %v3599, %v3601
      %v3603 = vrot.slane %v3589, %v3602
      %v3604 = vcombine.low %v3596, %v3603
      %v3605 = vcombine.low %v3094, %v3102
      %v3606 = vcombine.low %v3101, %v3103
      %v3608 = vunpack.c.l.s4 1983009808
      %v3609 = vunpack.c.0.s8 %v3608
      %v3610 = vlaneseq
      %v3611 = vshrl.u32 %v3610, 7
      %v3612 = vsub.s32 %v3609, %v3611
      %v3613 = vrot.slane %v3605, %v3612
      %v3615 = vunpack.c.l.s4 1983009808
      %v3616 = vunpack.c.0.s8 %v3615
      %v3617 = vlaneseq
      %v3618 = vshrl.u32 %v3617, 7
      %v3619 = vsub.s32 %v3616, %v3618
      %v3620 = vrot.slane %v3606, %v3619
      %v3621 = vcombine.low %v3613, %v3620
      %v3623 = vunpack.c.l.s4 1983009808
      %v3624 = vunpack.c.0.s8 %v3623
      %v3625 = vlaneseq
      %v3626 = vshrl.u32 %v3625, 7
      %v3627 = vsub.s32 %v3624, %v3626
      %v3628 = vrot.slane %v3111, %v3627
      %v3629 = vcombine.low %v3119, %v3118
      %v3630 = vcombine.low %v3120, %v3128
      %v3632 = vunpack.c.l.s4 1983009808
      %v3633 = vunpack.c.0.s8 %v3632
      %v3634 = vlaneseq
      %v3635 = vshrl.u32 %v3634, 7
      %v3636 = vsub.s32 %v3633, %v3635
      %v3637 = vrot.slane %v3629, %v3636
      %v3639 = vunpack.c.l.s4 1983009808
      %v3640 = vunpack.c.0.s8 %v3639
      %v3641 = vlaneseq
      %v3642 = vshrl.u32 %v3641, 7
      %v3643 = vsub.s32 %v3640, %v3642
      %v3644 = vrot.slane %v3630, %v3643
      %v3645 = vcombine.low %v3637, %v3644
      %v3646 = vcombine.low %v3136, %v3135
      %v3647 = vcombine.low %v3137, %v3144
      %v3649 = vunpack.c.l.s4 1983009808
      %v3650 = vunpack.c.0.s8 %v3649
      %v3651 = vlaneseq
      %v3652 = vshrl.u32 %v3651, 7
      %v3653 = vsub.s32 %v3650, %v3652
      %v3654 = vrot.slane %v3646, %v3653
      %v3656 = vunpack.c.l.s4 1983009808
      %v3657 = vunpack.c.0.s8 %v3656
      %v3658 = vlaneseq
      %v3659 = vshrl.u32 %v3658, 7
      %v3660 = vsub.s32 %v3657, %v3659
      %v3661 = vrot.slane %v3647, %v3660
      %v3662 = vcombine.low %v3654, %v3661
      %v3664 = vunpack.c.l.s4 1983009808
      %v3665 = vunpack.c.0.s8 %v3664
      %v3666 = vlaneseq
      %v3667 = vshrl.u32 %v3666, 7
      %v3668 = vsub.s32 %v3665, %v3667
      %v3669 = vrot.slane %v3145, %v3668
      %v3700 = vsel %vm3230, %v3276, 0.0
      %v3701 = vsel %vm3231, %v3293, 0.0
      %v3702 = vsel %vm3232, %v3300, 0.0
      %v3703 = vsel %vm3233, %v3317, 0.0
      %v3704 = vsel %vm3234, %v3334, 0.0
      %v3705 = vsel %vm3235, %v3341, 0.0
      %v3706 = vsel %vm3236, %v3358, 0.0
      %v3707 = vsel %vm3237, %v3375, 0.0
      %v3708 = vsel %vm3238, %v3382, 0.0
      %v3709 = vsel %vm3239, %v3399, 0.0
      %v3710 = vsel %vm3240, %v3416, 0.0
      %v3711 = vsel %vm3241, %v3423, 0.0
      %v3712 = vsel %vm3242, %v3440, 0.0
      %v3713 = vsel %vm3243, %v3457, 0.0
      %v3714 = vsel %vm3244, %v3464, 0.0
      %v3715 = vsel %vm3245, %v3481, 0.0
      %v3716 = vsel %vm3246, %v3498, 0.0
      %v3717 = vsel %vm3247, %v3505, 0.0
      %v3718 = vsel %vm3248, %v3522, 0.0
      %v3719 = vsel %vm3249, %v3539, 0.0
      %v3720 = vsel %vm3250, %v3546, 0.0
      %v3721 = vsel %vm3251, %v3563, 0.0
      %v3722 = vsel %vm3252, %v3580, 0.0
      %v3723 = vsel %vm3253, %v3587, 0.0
      %v3724 = vsel %vm3254, %v3604, 0.0
      %v3725 = vsel %vm3255, %v3621, 0.0
      %v3726 = vsel %vm3256, %v3628, 0.0
      %v3727 = vsel %vm3257, %v3645, 0.0
      %v3728 = vsel %vm3258, %v3662, 0.0
      %v3729 = vsel %vm3259, %v3669, 0.0
      %v3754 = vrot.slane %v3700, 1
      %v3755 = vrot.slane %v3701, 1
      %v3756 = vsel %vm504, %v3754, %v3755
      %v3757 = vrot.slane %v3702, 1
      %v3758 = vsel %vm504, %v3755, %v3757
      %v3759 = vrot.slane %v3703, 1
      %v3760 = vrot.slane %v3704, 1
      %v3761 = vsel %vm504, %v3759, %v3760
      %v3762 = vrot.slane %v3705, 1
      %v3763 = vsel %vm504, %v3760, %v3762
      %v3764 = vrot.slane %v3706, 1
      %v3765 = vrot.slane %v3707, 1
      %v3766 = vsel %vm504, %v3764, %v3765
      %v3767 = vrot.slane %v3708, 1
      %v3768 = vsel %vm504, %v3765, %v3767
      %v3769 = vrot.slane %v3709, 1
      %v3770 = vrot.slane %v3710, 1
      %v3771 = vsel %vm504, %v3769, %v3770
      %v3772 = vrot.slane %v3711, 1
      %v3773 = vsel %vm504, %v3770, %v3772
      %v3774 = vrot.slane %v3712, 1
      %v3775 = vrot.slane %v3713, 1
      %v3776 = vsel %vm504, %v3774, %v3775
      %v3777 = vrot.slane %v3714, 1
      %v3778 = vsel %vm504, %v3775, %v3777
      %v3779 = vrot.slane %v3715, 1
      %v3780 = vrot.slane %v3716, 1
      %v3781 = vsel %vm504, %v3779, %v3780
      %v3782 = vrot.slane %v3717, 1
      %v3783 = vsel %vm504, %v3780, %v3782
      %v3784 = vrot.slane %v3718, 1
      %v3785 = vrot.slane %v3719, 1
      %v3786 = vsel %vm504, %v3784, %v3785
      %v3787 = vrot.slane %v3720, 1
      %v3788 = vsel %vm504, %v3785, %v3787
      %v3789 = vrot.slane %v3721, 1
      %v3790 = vrot.slane %v3722, 1
      %v3791 = vsel %vm504, %v3789, %v3790
      %v3792 = vrot.slane %v3723, 1
      %v3793 = vsel %vm504, %v3790, %v3792
      %3794 = vrot.lane.b32.xlu0 %v3756, 4
      %v3795 = vpop.permute.xlu0 %3794
      %3796 = vrot.lane.b32.xlu0 %v3758, 4
      %v3797 = vpop.permute.xlu0 %3796
      %3798 = vrot.lane.b32.xlu0 %v3761, 4
      %v3799 = vpop.permute.xlu0 %3798
      %3800 = vrot.lane.b32.xlu0 %v3763, 4
      %v3801 = vpop.permute.xlu0 %3800
      %3802 = vrot.lane.b32.xlu0 %v3766, 4
      %v3803 = vpop.permute.xlu0 %3802
      %3804 = vrot.lane.b32.xlu0 %v3768, 4
      %v3805 = vpop.permute.xlu0 %3804
      %3806 = vrot.lane.b32.xlu0 %v3771, 4
      %v3807 = vpop.permute.xlu0 %3806
      %3808 = vrot.lane.b32.xlu0 %v3773, 4
      %v3809 = vpop.permute.xlu0 %3808
      %3810 = vrot.lane.b32.xlu0 %v3776, 4
      %v3811 = vpop.permute.xlu0 %3810
      %3812 = vrot.lane.b32.xlu0 %v3778, 4
      %v3813 = vpop.permute.xlu0 %3812
      %3814 = vrot.lane.b32.xlu0 %v3781, 4
      %v3815 = vpop.permute.xlu0 %3814
      %3816 = vrot.lane.b32.xlu0 %v3783, 4
      %v3817 = vpop.permute.xlu0 %3816
      %3818 = vrot.lane.b32.xlu0 %v3786, 4
      %v3819 = vpop.permute.xlu0 %3818
      %3820 = vrot.lane.b32.xlu0 %v3788, 4
      %v3821 = vpop.permute.xlu0 %3820
      %3822 = vrot.lane.b32.xlu0 %v3791, 4
      %v3823 = vpop.permute.xlu0 %3822
      %3824 = vrot.lane.b32.xlu0 %v3793, 4
      %v3825 = vpop.permute.xlu0 %3824
      %v3842 = vrot.slane %v3700, 2
      %v3843 = vrot.slane %v3701, 2
      %v3844 = vsel %vm645, %v3842, %v3843
      %v3845 = vrot.slane %v3702, 2
      %v3846 = vsel %vm645, %v3843, %v3845
      %v3847 = vrot.slane %v3703, 2
      %v3848 = vrot.slane %v3704, 2
      %v3849 = vsel %vm645, %v3847, %v3848
      %v3850 = vrot.slane %v3705, 2
      %v3851 = vsel %vm645, %v3848, %v3850
      %v3852 = vrot.slane %v3706, 2
      %v3853 = vrot.slane %v3707, 2
      %v3854 = vsel %vm645, %v3852, %v3853
      %v3855 = vrot.slane %v3708, 2
      %v3856 = vsel %vm645, %v3853, %v3855
      %v3857 = vrot.slane %v3709, 2
      %v3858 = vrot.slane %v3710, 2
      %v3859 = vsel %vm645, %v3857, %v3858
      %v3860 = vrot.slane %v3711, 2
      %v3861 = vsel %vm645, %v3858, %v3860
      %v3862 = vrot.slane %v3712, 2
      %v3863 = vrot.slane %v3713, 2
      %v3864 = vsel %vm645, %v3862, %v3863
      %v3865 = vrot.slane %v3714, 2
      %v3866 = vsel %vm645, %v3863, %v3865
      %v3867 = vrot.slane %v3715, 2
      %v3868 = vrot.slane %v3716, 2
      %v3869 = vsel %vm645, %v3867, %v3868
      %v3870 = vrot.slane %v3717, 2
      %v3871 = vsel %vm645, %v3868, %v3870
      %v3872 = vrot.slane %v3718, 2
      %v3873 = vrot.slane %v3719, 2
      %v3874 = vsel %vm645, %v3872, %v3873
      %v3875 = vrot.slane %v3720, 2
      %v3876 = vsel %vm645, %v3873, %v3875
      %v3877 = vrot.slane %v3721, 2
      %v3878 = vrot.slane %v3722, 2
      %v3879 = vsel %vm645, %v3877, %v3878
      %v3880 = vrot.slane %v3723, 2
      %v3881 = vsel %vm645, %v3878, %v3880
      %3882 = vrot.lane.b32.xlu0 %v3844, 8
      %v3883 = vpop.permute.xlu0 %3882
      %3884 = vrot.lane.b32.xlu0 %v3846, 8
      %v3885 = vpop.permute.xlu0 %3884
      %3886 = vrot.lane.b32.xlu0 %v3849, 8
      %v3887 = vpop.permute.xlu0 %3886
      %3888 = vrot.lane.b32.xlu0 %v3851, 8
      %v3889 = vpop.permute.xlu0 %3888
      %3890 = vrot.lane.b32.xlu0 %v3854, 8
      %v3891 = vpop.permute.xlu0 %3890
      %3892 = vrot.lane.b32.xlu0 %v3856, 8
      %v3893 = vpop.permute.xlu0 %3892
      %3894 = vrot.lane.b32.xlu0 %v3859, 8
      %v3895 = vpop.permute.xlu0 %3894
      %3896 = vrot.lane.b32.xlu0 %v3861, 8
      %v3897 = vpop.permute.xlu0 %3896
      %3898 = vrot.lane.b32.xlu0 %v3864, 8
      %v3899 = vpop.permute.xlu0 %3898
      %3900 = vrot.lane.b32.xlu0 %v3866, 8
      %v3901 = vpop.permute.xlu0 %3900
      %3902 = vrot.lane.b32.xlu0 %v3869, 8
      %v3903 = vpop.permute.xlu0 %3902
      %3904 = vrot.lane.b32.xlu0 %v3871, 8
      %v3905 = vpop.permute.xlu0 %3904
      %3906 = vrot.lane.b32.xlu0 %v3874, 8
      %v3907 = vpop.permute.xlu0 %3906
      %3908 = vrot.lane.b32.xlu0 %v3876, 8
      %v3909 = vpop.permute.xlu0 %3908
      %3910 = vrot.lane.b32.xlu0 %v3879, 8
      %v3911 = vpop.permute.xlu0 %3910
      %3912 = vrot.lane.b32.xlu0 %v3881, 8
      %v3913 = vpop.permute.xlu0 %3912
      %3932 = vrot.lane.b32.xlu0 %v3703, 12
      %v3933 = vpop.permute.xlu0 %3932
      %3934 = vrot.lane.b32.xlu0 %v3704, 12
      %v3935 = vpop.permute.xlu0 %3934
      %3936 = vrot.lane.b32.xlu0 %v3706, 12
      %v3937 = vpop.permute.xlu0 %3936
      %3938 = vrot.lane.b32.xlu0 %v3707, 12
      %v3939 = vpop.permute.xlu0 %3938
      %3940 = vrot.lane.b32.xlu0 %v3709, 12
      %v3941 = vpop.permute.xlu0 %3940
      %3942 = vrot.lane.b32.xlu0 %v3710, 12
      %v3943 = vpop.permute.xlu0 %3942
      %3944 = vrot.lane.b32.xlu0 %v3712, 12
      %v3945 = vpop.permute.xlu0 %3944
      %3946 = vrot.lane.b32.xlu0 %v3713, 12
      %v3947 = vpop.permute.xlu0 %3946
      %3948 = vrot.lane.b32.xlu0 %v3715, 12
      %v3949 = vpop.permute.xlu0 %3948
      %3950 = vrot.lane.b32.xlu0 %v3716, 12
      %v3951 = vpop.permute.xlu0 %3950
      %3952 = vrot.lane.b32.xlu0 %v3718, 12
      %v3953 = vpop.permute.xlu0 %3952
      %3954 = vrot.lane.b32.xlu0 %v3719, 12
      %v3955 = vpop.permute.xlu0 %3954
      %3956 = vrot.lane.b32.xlu0 %v3721, 12
      %v3957 = vpop.permute.xlu0 %3956
      %3958 = vrot.lane.b32.xlu0 %v3722, 12
      %v3959 = vpop.permute.xlu0 %3958
      %3960 = vrot.lane.b32.xlu0 %v3724, 12
      %v3961 = vpop.permute.xlu0 %3960
      %3962 = vrot.lane.b32.xlu0 %v3725, 12
      %v3963 = vpop.permute.xlu0 %3962
      %v3981 = vrot.slane %v3724, 1
      %v3982 = vrot.slane %v3725, 1
      %v3983 = vsel %vm504, %v3981, %v3982
      %v3984 = vrot.slane %v3726, 1
      %v3985 = vsel %vm504, %v3982, %v3984
      %3986 = vrot.lane.b32.xlu0 %v3761, 16
      %v3987 = vpop.permute.xlu0 %3986
      %3988 = vrot.lane.b32.xlu0 %v3763, 16
      %v3989 = vpop.permute.xlu0 %3988
      %3990 = vrot.lane.b32.xlu0 %v3766, 16
      %v3991 = vpop.permute.xlu0 %3990
      %3992 = vrot.lane.b32.xlu0 %v3768, 16
      %v3993 = vpop.permute.xlu0 %3992
      %3994 = vrot.lane.b32.xlu0 %v3771, 16
      %v3995 = vpop.permute.xlu0 %3994
      %3996 = vrot.lane.b32.xlu0 %v3773, 16
      %v3997 = vpop.permute.xlu0 %3996
      %3998 = vrot.lane.b32.xlu0 %v3776, 16
      %v3999 = vpop.permute.xlu0 %3998
      %4000 = vrot.lane.b32.xlu0 %v3778, 16
      %v4001 = vpop.permute.xlu0 %4000
      %4002 = vrot.lane.b32.xlu0 %v3781, 16
      %v4003 = vpop.permute.xlu0 %4002
      %4004 = vrot.lane.b32.xlu0 %v3783, 16
      %v4005 = vpop.permute.xlu0 %4004
      %4006 = vrot.lane.b32.xlu0 %v3786, 16
      %v4007 = vpop.permute.xlu0 %4006
      %4008 = vrot.lane.b32.xlu0 %v3788, 16
      %v4009 = vpop.permute.xlu0 %4008
      %4010 = vrot.lane.b32.xlu0 %v3791, 16
      %v4011 = vpop.permute.xlu0 %4010
      %4012 = vrot.lane.b32.xlu0 %v3793, 16
      %v4013 = vpop.permute.xlu0 %4012
      %4014 = vrot.lane.b32.xlu0 %v3983, 16
      %v4015 = vpop.permute.xlu0 %4014
      %4016 = vrot.lane.b32.xlu0 %v3985, 16
      %v4017 = vpop.permute.xlu0 %4016
      %v4034 = vrot.slane %v3724, 2
      %v4035 = vrot.slane %v3725, 2
      %v4036 = vsel %vm645, %v4034, %v4035
      %v4037 = vrot.slane %v3726, 2
      %v4038 = vsel %vm645, %v4035, %v4037
      %4039 = vrot.lane.b32.xlu0 %v3849, 20
      %v4040 = vpop.permute.xlu0 %4039
      %4041 = vrot.lane.b32.xlu0 %v3851, 20
      %v4042 = vpop.permute.xlu0 %4041
      %4043 = vrot.lane.b32.xlu0 %v3854, 20
      %v4044 = vpop.permute.xlu0 %4043
      %4045 = vrot.lane.b32.xlu0 %v3856, 20
      %v4046 = vpop.permute.xlu0 %4045
      %4047 = vrot.lane.b32.xlu0 %v3859, 20
      %v4048 = vpop.permute.xlu0 %4047
      %4049 = vrot.lane.b32.xlu0 %v3861, 20
      %v4050 = vpop.permute.xlu0 %4049
      %4051 = vrot.lane.b32.xlu0 %v3864, 20
      %v4052 = vpop.permute.xlu0 %4051
      %4053 = vrot.lane.b32.xlu0 %v3866, 20
      %v4054 = vpop.permute.xlu0 %4053
      %4055 = vrot.lane.b32.xlu0 %v3869, 20
      %v4056 = vpop.permute.xlu0 %4055
      %4057 = vrot.lane.b32.xlu0 %v3871, 20
      %v4058 = vpop.permute.xlu0 %4057
      %4059 = vrot.lane.b32.xlu0 %v3874, 20
      %v4060 = vpop.permute.xlu0 %4059
      %4061 = vrot.lane.b32.xlu0 %v3876, 20
      %v4062 = vpop.permute.xlu0 %4061
      %4063 = vrot.lane.b32.xlu0 %v3879, 20
      %v4064 = vpop.permute.xlu0 %4063
      %4065 = vrot.lane.b32.xlu0 %v3881, 20
      %v4066 = vpop.permute.xlu0 %4065
      %4067 = vrot.lane.b32.xlu0 %v4036, 20
      %v4068 = vpop.permute.xlu0 %4067
      %4069 = vrot.lane.b32.xlu0 %v4038, 20
      %v4070 = vpop.permute.xlu0 %4069
      %4089 = vrot.lane.b32.xlu0 %v3706, 24
      %v4090 = vpop.permute.xlu0 %4089
      %4091 = vrot.lane.b32.xlu0 %v3707, 24
      %v4092 = vpop.permute.xlu0 %4091
      %4093 = vrot.lane.b32.xlu0 %v3709, 24
      %v4094 = vpop.permute.xlu0 %4093
      %4095 = vrot.lane.b32.xlu0 %v3710, 24
      %v4096 = vpop.permute.xlu0 %4095
      %4097 = vrot.lane.b32.xlu0 %v3712, 24
      %v4098 = vpop.permute.xlu0 %4097
      %4099 = vrot.lane.b32.xlu0 %v3713, 24
      %v4100 = vpop.permute.xlu0 %4099
      %4101 = vrot.lane.b32.xlu0 %v3715, 24
      %v4102 = vpop.permute.xlu0 %4101
      %4103 = vrot.lane.b32.xlu0 %v3716, 24
      %v4104 = vpop.permute.xlu0 %4103
      %4105 = vrot.lane.b32.xlu0 %v3718, 24
      %v4106 = vpop.permute.xlu0 %4105
      %4107 = vrot.lane.b32.xlu0 %v3719, 24
      %v4108 = vpop.permute.xlu0 %4107
      %4109 = vrot.lane.b32.xlu0 %v3721, 24
      %v4110 = vpop.permute.xlu0 %4109
      %4111 = vrot.lane.b32.xlu0 %v3722, 24
      %v4112 = vpop.permute.xlu0 %4111
      %4113 = vrot.lane.b32.xlu0 %v3724, 24
      %v4114 = vpop.permute.xlu0 %4113
      %4115 = vrot.lane.b32.xlu0 %v3725, 24
      %v4116 = vpop.permute.xlu0 %4115
      %4117 = vrot.lane.b32.xlu0 %v3727, 24
      %v4118 = vpop.permute.xlu0 %4117
      %4119 = vrot.lane.b32.xlu0 %v3728, 24
      %v4120 = vpop.permute.xlu0 %4119
      %v4138 = vrot.slane %v3727, 1
      %v4139 = vrot.slane %v3728, 1
      %v4140 = vsel %vm504, %v4138, %v4139
      %v4141 = vrot.slane %v3729, 1
      %v4142 = vsel %vm504, %v4139, %v4141
      %4143 = vrot.lane.b32.xlu0 %v3766, 28
      %v4144 = vpop.permute.xlu0 %4143
      %4145 = vrot.lane.b32.xlu0 %v3768, 28
      %v4146 = vpop.permute.xlu0 %4145
      %4147 = vrot.lane.b32.xlu0 %v3771, 28
      %v4148 = vpop.permute.xlu0 %4147
      %4149 = vrot.lane.b32.xlu0 %v3773, 28
      %v4150 = vpop.permute.xlu0 %4149
      %4151 = vrot.lane.b32.xlu0 %v3776, 28
      %v4152 = vpop.permute.xlu0 %4151
      %4153 = vrot.lane.b32.xlu0 %v3778, 28
      %v4154 = vpop.permute.xlu0 %4153
      %4155 = vrot.lane.b32.xlu0 %v3781, 28
      %v4156 = vpop.permute.xlu0 %4155
      %4157 = vrot.lane.b32.xlu0 %v3783, 28
      %v4158 = vpop.permute.xlu0 %4157
      %4159 = vrot.lane.b32.xlu0 %v3786, 28
      %v4160 = vpop.permute.xlu0 %4159
      %4161 = vrot.lane.b32.xlu0 %v3788, 28
      %v4162 = vpop.permute.xlu0 %4161
      %4163 = vrot.lane.b32.xlu0 %v3791, 28
      %v4164 = vpop.permute.xlu0 %4163
      %4165 = vrot.lane.b32.xlu0 %v3793, 28
      %v4166 = vpop.permute.xlu0 %4165
      %4167 = vrot.lane.b32.xlu0 %v3983, 28
      %v4168 = vpop.permute.xlu0 %4167
      %4169 = vrot.lane.b32.xlu0 %v3985, 28
      %v4170 = vpop.permute.xlu0 %4169
      %4171 = vrot.lane.b32.xlu0 %v4140, 28
      %v4172 = vpop.permute.xlu0 %4171
      %4173 = vrot.lane.b32.xlu0 %v4142, 28
      %v4174 = vpop.permute.xlu0 %4173
      %v4191 = vrot.slane %v3727, 2
      %v4192 = vrot.slane %v3728, 2
      %v4193 = vsel %vm645, %v4191, %v4192
      %v4194 = vrot.slane %v3729, 2
      %v4195 = vsel %vm645, %v4192, %v4194
      %4196 = vrot.lane.b32.xlu0 %v3854, 32
      %v4197 = vpop.permute.xlu0 %4196
      %4198 = vrot.lane.b32.xlu0 %v3856, 32
      %v4199 = vpop.permute.xlu0 %4198
      %4200 = vrot.lane.b32.xlu0 %v3859, 32
      %v4201 = vpop.permute.xlu0 %4200
      %4202 = vrot.lane.b32.xlu0 %v3861, 32
      %v4203 = vpop.permute.xlu0 %4202
      %4204 = vrot.lane.b32.xlu0 %v3864, 32
      %v4205 = vpop.permute.xlu0 %4204
      %4206 = vrot.lane.b32.xlu0 %v3866, 32
      %v4207 = vpop.permute.xlu0 %4206
      %4208 = vrot.lane.b32.xlu0 %v3869, 32
      %v4209 = vpop.permute.xlu0 %4208
      %4210 = vrot.lane.b32.xlu0 %v3871, 32
      %v4211 = vpop.permute.xlu0 %4210
      %4212 = vrot.lane.b32.xlu0 %v3874, 32
      %v4213 = vpop.permute.xlu0 %4212
      %4214 = vrot.lane.b32.xlu0 %v3876, 32
      %v4215 = vpop.permute.xlu0 %4214
      %4216 = vrot.lane.b32.xlu0 %v3879, 32
      %v4217 = vpop.permute.xlu0 %4216
      %4218 = vrot.lane.b32.xlu0 %v3881, 32
      %v4219 = vpop.permute.xlu0 %4218
      %4220 = vrot.lane.b32.xlu0 %v4036, 32
      %v4221 = vpop.permute.xlu0 %4220
      %4222 = vrot.lane.b32.xlu0 %v4038, 32
      %v4223 = vpop.permute.xlu0 %4222
      %4224 = vrot.lane.b32.xlu0 %v4193, 32
      %v4225 = vpop.permute.xlu0 %4224
      %4226 = vrot.lane.b32.xlu0 %v4195, 32
      %v4227 = vpop.permute.xlu0 %4226
      %v4244 = vsel %vm1352, %v3700, %v3795
      %v4245 = vsel %vm1352, %v3701, %v3797
      %v4246 = vsel %vm1352, %v3703, %v3799
      %v4247 = vsel %vm1352, %v3704, %v3801
      %v4248 = vsel %vm1352, %v3706, %v3803
      %v4249 = vsel %vm1352, %v3707, %v3805
      %v4250 = vsel %vm1352, %v3709, %v3807
      %v4251 = vsel %vm1352, %v3710, %v3809
      %v4252 = vsel %vm1352, %v3712, %v3811
      %v4253 = vsel %vm1352, %v3713, %v3813
      %v4254 = vsel %vm1352, %v3715, %v3815
      %v4255 = vsel %vm1352, %v3716, %v3817
      %v4256 = vsel %vm1352, %v3718, %v3819
      %v4257 = vsel %vm1352, %v3719, %v3821
      %v4258 = vsel %vm1352, %v3721, %v3823
      %v4259 = vsel %vm1352, %v3722, %v3825
      %v4260 = vsel %vm1383, %v4244, %v3883
      %v4261 = vsel %vm1383, %v4245, %v3885
      %v4262 = vsel %vm1383, %v4246, %v3887
      %v4263 = vsel %vm1383, %v4247, %v3889
      %v4264 = vsel %vm1383, %v4248, %v3891
      %v4265 = vsel %vm1383, %v4249, %v3893
      %v4266 = vsel %vm1383, %v4250, %v3895
      %v4267 = vsel %vm1383, %v4251, %v3897
      %v4268 = vsel %vm1383, %v4252, %v3899
      %v4269 = vsel %vm1383, %v4253, %v3901
      %v4270 = vsel %vm1383, %v4254, %v3903
      %v4271 = vsel %vm1383, %v4255, %v3905
      %v4272 = vsel %vm1383, %v4256, %v3907
      %v4273 = vsel %vm1383, %v4257, %v3909
      %v4274 = vsel %vm1383, %v4258, %v3911
      %v4275 = vsel %vm1383, %v4259, %v3913
      %v4276 = vsel %vm1414, %v4260, %v3933
      %v4277 = vsel %vm1414, %v4261, %v3935
      %v4278 = vsel %vm1414, %v4262, %v3937
      %v4279 = vsel %vm1414, %v4263, %v3939
      %v4280 = vsel %vm1414, %v4264, %v3941
      %v4281 = vsel %vm1414, %v4265, %v3943
      %v4282 = vsel %vm1414, %v4266, %v3945
      %v4283 = vsel %vm1414, %v4267, %v3947
      %v4284 = vsel %vm1414, %v4268, %v3949
      %v4285 = vsel %vm1414, %v4269, %v3951
      %v4286 = vsel %vm1414, %v4270, %v3953
      %v4287 = vsel %vm1414, %v4271, %v3955
      %v4288 = vsel %vm1414, %v4272, %v3957
      %v4289 = vsel %vm1414, %v4273, %v3959
      %v4290 = vsel %vm1414, %v4274, %v3961
      %v4291 = vsel %vm1414, %v4275, %v3963
      %v4292 = vsel %vm1445, %v4276, %v3987
      %v4293 = vsel %vm1445, %v4277, %v3989
      %v4294 = vsel %vm1445, %v4278, %v3991
      %v4295 = vsel %vm1445, %v4279, %v3993
      %v4296 = vsel %vm1445, %v4280, %v3995
      %v4297 = vsel %vm1445, %v4281, %v3997
      %v4298 = vsel %vm1445, %v4282, %v3999
      %v4299 = vsel %vm1445, %v4283, %v4001
      %v4300 = vsel %vm1445, %v4284, %v4003
      %v4301 = vsel %vm1445, %v4285, %v4005
      %v4302 = vsel %vm1445, %v4286, %v4007
      %v4303 = vsel %vm1445, %v4287, %v4009
      %v4304 = vsel %vm1445, %v4288, %v4011
      %v4305 = vsel %vm1445, %v4289, %v4013
      %v4306 = vsel %vm1445, %v4290, %v4015
      %v4307 = vsel %vm1445, %v4291, %v4017
      %v4308 = vsel %vm1476, %v4292, %v4040
      %v4309 = vsel %vm1476, %v4293, %v4042
      %v4310 = vsel %vm1476, %v4294, %v4044
      %v4311 = vsel %vm1476, %v4295, %v4046
      %v4312 = vsel %vm1476, %v4296, %v4048
      %v4313 = vsel %vm1476, %v4297, %v4050
      %v4314 = vsel %vm1476, %v4298, %v4052
      %v4315 = vsel %vm1476, %v4299, %v4054
      %v4316 = vsel %vm1476, %v4300, %v4056
      %v4317 = vsel %vm1476, %v4301, %v4058
      %v4318 = vsel %vm1476, %v4302, %v4060
      %v4319 = vsel %vm1476, %v4303, %v4062
      %v4320 = vsel %vm1476, %v4304, %v4064
      %v4321 = vsel %vm1476, %v4305, %v4066
      %v4322 = vsel %vm1476, %v4306, %v4068
      %v4323 = vsel %vm1476, %v4307, %v4070
      %v4324 = vsel %vm1507, %v4308, %v4090
      %v4325 = vsel %vm1507, %v4309, %v4092
      %v4326 = vsel %vm1507, %v4310, %v4094
      %v4327 = vsel %vm1507, %v4311, %v4096
      %v4328 = vsel %vm1507, %v4312, %v4098
      %v4329 = vsel %vm1507, %v4313, %v4100
      %v4330 = vsel %vm1507, %v4314, %v4102
      %v4331 = vsel %vm1507, %v4315, %v4104
      %v4332 = vsel %vm1507, %v4316, %v4106
      %v4333 = vsel %vm1507, %v4317, %v4108
      %v4334 = vsel %vm1507, %v4318, %v4110
      %v4335 = vsel %vm1507, %v4319, %v4112
      %v4336 = vsel %vm1507, %v4320, %v4114
      %v4337 = vsel %vm1507, %v4321, %v4116
      %v4338 = vsel %vm1507, %v4322, %v4118
      %v4339 = vsel %vm1507, %v4323, %v4120
      %v4340 = vsel %vm1538, %v4324, %v4144
      %v4341 = vsel %vm1538, %v4325, %v4146
      %v4342 = vsel %vm1538, %v4326, %v4148
      %v4343 = vsel %vm1538, %v4327, %v4150
      %v4344 = vsel %vm1538, %v4328, %v4152
      %v4345 = vsel %vm1538, %v4329, %v4154
      %v4346 = vsel %vm1538, %v4330, %v4156
      %v4347 = vsel %vm1538, %v4331, %v4158
      %v4348 = vsel %vm1538, %v4332, %v4160
      %v4349 = vsel %vm1538, %v4333, %v4162
      %v4350 = vsel %vm1538, %v4334, %v4164
      %v4351 = vsel %vm1538, %v4335, %v4166
      %v4352 = vsel %vm1538, %v4336, %v4168
      %v4353 = vsel %vm1538, %v4337, %v4170
      %v4354 = vsel %vm1538, %v4338, %v4172
      %v4355 = vsel %vm1538, %v4339, %v4174
      %v4356 = vsel %vm1569, %v4340, %v4197
      %v4357 = vsel %vm1569, %v4341, %v4199
      %v4358 = vsel %vm1569, %v4342, %v4201
      %v4359 = vsel %vm1569, %v4343, %v4203
      %v4360 = vsel %vm1569, %v4344, %v4205
      %v4361 = vsel %vm1569, %v4345, %v4207
      %v4362 = vsel %vm1569, %v4346, %v4209
      %v4363 = vsel %vm1569, %v4347, %v4211
      %v4364 = vsel %vm1569, %v4348, %v4213
      %v4365 = vsel %vm1569, %v4349, %v4215
      %v4366 = vsel %vm1569, %v4350, %v4217
      %v4367 = vsel %vm1569, %v4351, %v4219
      %v4368 = vsel %vm1569, %v4352, %v4221
      %v4369 = vsel %vm1569, %v4353, %v4223
      %v4370 = vsel %vm1569, %v4354, %v4225
      %v4371 = vsel %vm1569, %v4355, %v4227
      %v4372 = vld [vmem:[%s4] sm:$0xff]
      %v4373 = vld [vmem:[%s4 + $0x8] sm:$0xff]
      %v4374 = vld [vmem:[%s4 + $0x10] sm:$0xff]
      %v4375 = vld [vmem:[%s4 + $0x18] sm:$0xff]
      %v4376 = vld [vmem:[%s4 + $0x20] sm:$0xf]
      %v4378 = vsel %vm2427, %v4356, 0
      %v4381 = vsel %vm2427, %v4357, 0
      %v4384 = vsel %vm2427, %v4358, 0
      %v4387 = vsel %vm2427, %v4359, 0
      %v4390 = vsel %vm2427, %v4360, 0
      %v4393 = vsel %vm2427, %v4361, 0
      %v4396 = vsel %vm2427, %v4362, 0
      %v4399 = vsel %vm2427, %v4363, 0
      %v4402 = vsel %vm2427, %v4364, 0
      %v4405 = vsel %vm2427, %v4365, 0
      %v4408 = vsel %vm2427, %v4366, 0
      %v4411 = vsel %vm2427, %v4367, 0
      %v4414 = vsel %vm2427, %v4368, 0
      %v4417 = vsel %vm2427, %v4369, 0
      %v4420 = vsel %vm2427, %v4370, 0
      %v4423 = vsel %vm2427, %v4371, 0
      %v4426 = vsel %vm2474, %v4376, 0
      %4428 = vmatprep.subr.mxu0 0.0
      %4429 = vmatpush1.msra.mxu0 %v4372
      %4430 = vmatprep.subr.mxu0 0.0
      %4431 = vmatpush1.msra.mxu0 %v4373
      %4432 = vmatprep.subr.mxu0 0.0
      %4433 = vmatpush1.msra.mxu0 %v4374
      %4434 = vmatprep.subr.mxu0 0.0
      %4435 = vmatpush1.msra.mxu0 %v4375
      %4436 = vmatprep.subr.mxu0 0.0
      %4437 = vmatpush1.msra.mxu0 %v4426
      %4438 = vmatprep.subr.mxu0 0.0
      %4439 = vmatpush1.msra.mxu0 0.0
      %4440 = vmatprep.subr.mxu0 0.0
      %4441 = vmatpush1.msra.mxu0 0.0
      %4442 = vmatprep.subr.mxu0 0.0
      %4443 = vmatpush1.msra.mxu0 0.0
      %4444 = vmatprep.subr.mxu0 0.0
      %4445 = vmatpush1.msra.mxu0 0.0
      %4446 = vmatprep.subr.mxu0 0.0
      %4447 = vmatpush1.msra.mxu0 0.0
      %4448 = vmatprep.subr.mxu0 0.0
      %4449 = vmatpush1.msra.mxu0 0.0
      %4450 = vmatprep.subr.mxu0 0.0
      %4451 = vmatpush1.msra.mxu0 0.0
      %4452 = vmatprep.subr.mxu0 0.0
      %4453 = vmatpush1.msra.mxu0 0.0
      %4454 = vmatprep.subr.mxu0 0.0
      %4455 = vmatpush1.msra.mxu0 0.0
      %4456 = vmatprep.subr.mxu0 0.0
      %4457 = vmatpush1.msra.mxu0 0.0
      %4458 = vmatprep.subr.mxu0 0.0
      %4459 = vmatpush1.msra.mxu0 0.0
      %4460 = vmatprep.subr.mxu0 0.0
      %4461 = vmatpush1.msra.mxu0 0.0
      %4462 = vmatprep.subr.mxu0 0.0
      %4463 = vmatpush1.msra.mxu0 0.0
      %4464 = vmatprep.subr.mxu0 0.0
      %4465 = vmatpush1.msra.mxu0 0.0
      %4466 = vmatprep.subr.mxu0 0.0
      %4467 = vmatpush1.msra.mxu0 0.0
      %4468 = vmatprep.subr.mxu0 0.0
      %4469 = vmatpush1.msra.mxu0 0.0
      %4470 = vmatprep.subr.mxu0 0.0
      %4471 = vmatpush1.msra.mxu0 0.0
      %4472 = vmatprep.subr.mxu0 0.0
      %4473 = vmatpush1.msra.mxu0 0.0
      %4474 = vmatprep.subr.mxu0 0.0
      %4475 = vmatpush1.msra.mxu0 0.0
      %4476 = vmatprep.subr.mxu0 0.0
      %4477 = vmatpush1.msra.mxu0 0.0
      %4478 = vmatprep.subr.mxu0 0.0
      %4479 = vmatpush1.msra.mxu0 0.0
      %4480 = vmatprep.subr.mxu0 0.0
      %4481 = vmatpush1.msra.mxu0 0.0
      %4482 = vmatprep.subr.mxu0 0.0
      %4483 = vmatpush1.msra.mxu0 0.0
      %4484 = vmatprep.subr.mxu0 0.0
      %4485 = vmatpush1.msra.mxu0 0.0
      %4486 = vmatprep.subr.mxu0 0.0
      %4487 = vmatpush1.msra.mxu0 0.0
      %4488 = vmatprep.subr.mxu0 0.0
      %4489 = vmatpush1.msra.mxu0 0.0
      %4490 = vmatprep.subr.mxu0 0.0
      %4491 = vmatpush1.msra.mxu0 0.0
      %4492 = vmatprep.mubr.f32.mxu0 0.0
      %4493 = vmatmul.mubr.f32.gmra.mrb[0].mxu0 %v4378
      %v4494 = vpop.f32.mrb[0].mxu0
      %v4495 = vadd.f32 0.0, %v4494
      %v4496 = vpop.f32.mrb[0].mxu0
      %4497 = vmatprep.mubr.f32.mxu0 0.0
      %4498 = vmatmul.mubr.f32.gmra.mrb[0].mxu0 %v4381
      %v4499 = vpop.f32.mrb[0].mxu0
      %v4500 = vadd.f32 0.0, %v4499
      %v4501 = vpop.f32.mrb[0].mxu0
      %4502 = vmatprep.mubr.f32.mxu0 0.0
      %4503 = vmatmul.mubr.f32.gmra.mrb[0].mxu0 %v4384
      %v4504 = vpop.f32.mrb[0].mxu0
      %v4505 = vadd.f32 0.0, %v4504
      %v4506 = vpop.f32.mrb[0].mxu0
      %4507 = vmatprep.mubr.f32.mxu0 0.0
      %4508 = vmatmul.mubr.f32.gmra.mrb[0].mxu0 %v4387
      %v4509 = vpop.f32.mrb[0].mxu0
      %v4510 = vadd.f32 0.0, %v4509
      %v4511 = vpop.f32.mrb[0].mxu0
      %4512 = vmatprep.mubr.f32.mxu0 0.0
      %4513 = vmatmul.mubr.f32.gmra.mrb[0].mxu0 %v4390
      %v4514 = vpop.f32.mrb[0].mxu0
      %v4515 = vadd.f32 0.0, %v4514
      %v4516 = vpop.f32.mrb[0].mxu0
      %4517 = vmatprep.mubr.f32.mxu0 0.0
      %4518 = vmatmul.mubr.f32.gmra.mrb[0].mxu0 %v4393
      %v4519 = vpop.f32.mrb[0].mxu0
      %v4520 = vadd.f32 0.0, %v4519
      %v4521 = vpop.f32.mrb[0].mxu0
      %4522 = vmatprep.mubr.f32.mxu0 0.0
      %4523 = vmatmul.mubr.f32.gmra.mrb[0].mxu0 %v4396
      %v4524 = vpop.f32.mrb[0].mxu0
      %v4525 = vadd.f32 0.0, %v4524
      %v4526 = vpop.f32.mrb[0].mxu0
      %4527 = vmatprep.mubr.f32.mxu0 0.0
      %4528 = vmatmul.mubr.f32.gmra.mrb[0].mxu0 %v4399
      %v4529 = vpop.f32.mrb[0].mxu0
      %v4530 = vadd.f32 0.0, %v4529
      %v4531 = vpop.f32.mrb[0].mxu0
      %4532 = vmatprep.mubr.f32.mxu0 0.0
      %4533 = vmatmul.mubr.f32.gmra.mrb[0].mxu0 %v4402
      %v4534 = vpop.f32.mrb[0].mxu0
      %v4535 = vadd.f32 0.0, %v4534
      %v4536 = vpop.f32.mrb[0].mxu0
      %4537 = vmatprep.mubr.f32.mxu0 0.0
      %4538 = vmatmul.mubr.f32.gmra.mrb[0].mxu0 %v4405
      %v4539 = vpop.f32.mrb[0].mxu0
      %v4540 = vadd.f32 0.0, %v4539
      %v4541 = vpop.f32.mrb[0].mxu0
      %4542 = vmatprep.mubr.f32.mxu0 0.0
      %4543 = vmatmul.mubr.f32.gmra.mrb[0].mxu0 %v4408
      %v4544 = vpop.f32.mrb[0].mxu0
      %v4545 = vadd.f32 0.0, %v4544
      %v4546 = vpop.f32.mrb[0].mxu0
      %4547 = vmatprep.mubr.f32.mxu0 0.0
      %4548 = vmatmul.mubr.f32.gmra.mrb[0].mxu0 %v4411
      %v4549 = vpop.f32.mrb[0].mxu0
      %v4550 = vadd.f32 0.0, %v4549
      %v4551 = vpop.f32.mrb[0].mxu0
      %4552 = vmatprep.mubr.f32.mxu0 0.0
      %4553 = vmatmul.mubr.f32.gmra.mrb[0].mxu0 %v4414
      %v4554 = vpop.f32.mrb[0].mxu0
      %v4555 = vadd.f32 0.0, %v4554
      %v4556 = vpop.f32.mrb[0].mxu0
      %4557 = vmatprep.mubr.f32.mxu0 0.0
      %4558 = vmatmul.mubr.f32.gmra.mrb[0].mxu0 %v4417
      %v4559 = vpop.f32.mrb[0].mxu0
      %v4560 = vadd.f32 0.0, %v4559
      %v4561 = vpop.f32.mrb[0].mxu0
      %4562 = vmatprep.mubr.f32.mxu0 0.0
      %4563 = vmatmul.mubr.f32.gmra.mrb[0].mxu0 %v4420
      %v4564 = vpop.f32.mrb[0].mxu0
      %v4565 = vadd.f32 0.0, %v4564
      %v4566 = vpop.f32.mrb[0].mxu0
      %4567 = vmatprep.mubr.f32.mxu0 0.0
      %4568 = vmatmul.mubr.f32.gmra.mrb[0].mxu0 %v4423
      %v4569 = vpop.f32.mrb[0].mxu0
      %v4570 = vadd.f32 0.0, %v4569
      %v4571 = vpop.f32.mrb[0].mxu0
      %4572 = vdwg.mxu0
      %v4573 = vld [vmem:[%s5] sm:$0x1]
      %v4575 = vlaneseq
      %v4576 = vshrl.u32 %v4575, 7
      %v4577 = vsub.s32 0, %v4576
      %v4578 = vrot.slane %v4573, %v4577
      %v4580 = vmul.f32 %v4495, %v4578
      %v4581 = vmul.f32 %v4500, %v4578
      %v4582 = vmul.f32 %v4505, %v4578
      %v4583 = vmul.f32 %v4510, %v4578
      %v4584 = vmul.f32 %v4515, %v4578
      %v4585 = vmul.f32 %v4520, %v4578
      %v4586 = vmul.f32 %v4525, %v4578
      %v4587 = vmul.f32 %v4530, %v4578
      %v4588 = vmul.f32 %v4535, %v4578
      %v4589 = vmul.f32 %v4540, %v4578
      %v4590 = vmul.f32 %v4545, %v4578
      %v4591 = vmul.f32 %v4550, %v4578
      %v4592 = vmul.f32 %v4555, %v4578
      %v4593 = vmul.f32 %v4560, %v4578
      %v4594 = vmul.f32 %v4565, %v4578
      %v4595 = vmul.f32 %v4570, %v4578
      %v4596 = vld [vmem:[%s6] sm:$0x1]
      %v4598 = vlaneseq
      %v4599 = vshrl.u32 %v4598, 7
      %v4600 = vsub.s32 0, %v4599
      %v4601 = vrot.slane %v4596, %v4600
      %v4603 = vadd.f32 %v4580, %v4601
      %v4604 = vadd.f32 %v4581, %v4601
      %v4605 = vadd.f32 %v4582, %v4601
      %v4606 = vadd.f32 %v4583, %v4601
      %v4607 = vadd.f32 %v4584, %v4601
      %v4608 = vadd.f32 %v4585, %v4601
      %v4609 = vadd.f32 %v4586, %v4601
      %v4610 = vadd.f32 %v4587, %v4601
      %v4611 = vadd.f32 %v4588, %v4601
      %v4612 = vadd.f32 %v4589, %v4601
      %v4613 = vadd.f32 %v4590, %v4601
      %v4614 = vadd.f32 %v4591, %v4601
      %v4615 = vadd.f32 %v4592, %v4601
      %v4616 = vadd.f32 %v4593, %v4601
      %v4617 = vadd.f32 %v4594, %v4601
      %v4618 = vadd.f32 %v4595, %v4601
      %v4635 = vadd.f32 %v4603, %v658
      %v4636 = vadd.f32 %v4604, %v660
      %v4637 = vadd.f32 %v4605, %v663
      %v4638 = vadd.f32 %v4606, %v665
      %v4639 = vadd.f32 %v4607, %v668
      %v4640 = vadd.f32 %v4608, %v670
      %v4641 = vadd.f32 %v4609, %v673
      %v4642 = vadd.f32 %v4610, %v675
      %v4643 = vadd.f32 %v4611, %v678
      %v4644 = vadd.f32 %v4612, %v680
      %v4645 = vadd.f32 %v4613, %v683
      %v4646 = vadd.f32 %v4614, %v685
      %v4647 = vadd.f32 %v4615, %v688
      %v4648 = vadd.f32 %v4616, %v690
      %v4649 = vadd.f32 %v4617, %v693
      %v4650 = vadd.f32 %v4618, %v695
      %v4651 = vmax.f32 %v4635, 0.0
      %v4652 = vmax.f32 %v4636, 0.0
      %v4653 = vmax.f32 %v4637, 0.0
      %v4654 = vmax.f32 %v4638, 0.0
      %v4655 = vmax.f32 %v4639, 0.0
      %v4656 = vmax.f32 %v4640, 0.0
      %v4657 = vmax.f32 %v4641, 0.0
      %v4658 = vmax.f32 %v4642, 0.0
      %v4659 = vmax.f32 %v4643, 0.0
      %v4660 = vmax.f32 %v4644, 0.0
      %v4661 = vmax.f32 %v4645, 0.0
      %v4662 = vmax.f32 %v4646, 0.0
      %v4663 = vmax.f32 %v4647, 0.0
      %v4664 = vmax.f32 %v4648, 0.0
      %v4665 = vmax.f32 %v4649, 0.0
      %v4666 = vmax.f32 %v4650, 0.0
      %4667 = vst.msk [vmem:[%s302] sm:$0xff] %vm1352, %v4651
      %4668 = vst.msk [vmem:[%s302 + $0x8] sm:$0xff] %vm1352, %v4652
      %4669 = vst.msk [vmem:[%s302 + $0x10] sm:$0xff] %vm1352, %v4653
      %4670 = vst.msk [vmem:[%s302 + $0x18] sm:$0xff] %vm1352, %v4654
      %4671 = vst.msk [vmem:[%s302 + $0x20] sm:$0xff] %vm1352, %v4655
      %4672 = vst.msk [vmem:[%s302 + $0x28] sm:$0xff] %vm1352, %v4656
      %4673 = vst.msk [vmem:[%s302 + $0x30] sm:$0xff] %vm1352, %v4657
      %4674 = vst.msk [vmem:[%s302 + $0x38] sm:$0xff] %vm1352, %v4658
      %4675 = vst.msk [vmem:[%s302 + $0x40] sm:$0xff] %vm1352, %v4659
      %4676 = vst.msk [vmem:[%s302 + $0x48] sm:$0xff] %vm1352, %v4660
      %4677 = vst.msk [vmem:[%s302 + $0x50] sm:$0xff] %vm1352, %v4661
      %4678 = vst.msk [vmem:[%s302 + $0x58] sm:$0xff] %vm1352, %v4662
      %4679 = vst.msk [vmem:[%s302 + $0x60] sm:$0xff] %vm1352, %v4663
      %4680 = vst.msk [vmem:[%s302 + $0x68] sm:$0xff] %vm1352, %v4664
      %4681 = vst.msk [vmem:[%s302 + $0x70] sm:$0xff] %vm1352, %v4665
      %4682 = vst.msk [vmem:[%s302 + $0x78] sm:$0xff] %vm1352, %v4666
      %s4683 = smul.u32 8, %s23
      %p4684 = scmp.lt.s32.totalorder %s22, 1
      %s4685 = scalar_select %p4684, %s22, 1
      %p4686 = scmp.lt.s32.totalorder %s4683, 15
      %s4687 = scalar_select %p4686, %s4683, 15
      %s4688 = smul.addr %s4687, 2
      %s4689 = smul.addr %s4685, 32
      %s4690 = sadd.s32 %s4688, %s4689
      %s4691 = smul.addr %s4690, 8
      %s4692 = scalar_lea.vmem %s7, %s4691
      // Predicated region
      $region53: #{tpu_custom_call.1} parent=47 // pred_check
        %p4693 = pneg %p202
      $region54: #{tpu_custom_call.1} parent=47 // pred_check_branch
        %4695 = sbr.rel (%p4693) target = $region56
      $region55: #{tpu_custom_call.1} parent=47 // pred_region
        %s4696 = smul.u32 8, %s23
      $region56: #{tpu_custom_call.1} parent=47 // pred_fallthru
        _
    $region48: #{tpu_custom_call.1} parent=5 // pred_fallthru
      _
    %p4697 = scmp.le.s32.totalorder 2, %s13
    // Predicated region
    $region57: #{tpu_custom_call.1} parent=5 // pred_check
      %p4698 = pneg %p4697
    $region58: #{tpu_custom_call.1} parent=5 // pred_check_branch
      %4700 = sbr.rel (%p4698) target = $region60
    $region59: #{tpu_custom_call.1} parent=5 // pred_region
      %s4701 = ssub.s32 %s13, 2
      // Predicated region
      $region61: #{tpu_custom_call.1} parent=59 // pred_check
        %p4702 = pneg %p208
      $region62: #{tpu_custom_call.1} parent=59 // pred_check_branch
        %4704 = sbr.rel (%p4702) target = $region64
      $region63: #{tpu_custom_call.1} parent=59 // pred_region
        %s4705 = smul.u32 8, %s25
        %p4706 = scmp.lt.s32.totalorder %s24, 1
        %s4707 = scalar_select %p4706, %s24, 1
        %p4708 = scmp.lt.s32.totalorder %s4705, 15
        %s4709 = scalar_select %p4708, %s4705, 15
        %s4710 = smul.addr %s4709, 2
        %s4711 = smul.addr %s4707, 32
        %s4712 = sadd.s32 %s4710, %s4711
        %s4713 = smul.addr %s4712, 8
        %s4714 = scalar_lea.vmem %s7, %s4713
      $region64: #{tpu_custom_call.1} parent=59 // pred_fallthru
        _
    $region60: #{tpu_custom_call.1} parent=5 // pred_fallthru
      _
  $region6: #{tpu_custom_call.1} parent=0 // loop_footer
    %s17 = sadd.s32 1, %s13
  $region7: #{tpu_custom_call.1} parent=0 // loop_footer_branch
    %12 = sbr.rel target = $region3
  $region8: #{tpu_custom_call.1} parent=0 // loop_exit
    _

</llo_original>
